<compile_context>
chip_gen: v7x
topology: tpu7x:2x2x1
jax: 0.10.0
libtpu: 0.0.40
codegen_flags: <defaults>
</compile_context>

<pallas_src>
import functools

import jax
import jax.numpy as jnp
from jax.experimental import pallas as pl
from jax.experimental.pallas import tpu as pltpu


# ----------------------------------------------------------------------------
# Fused ResnetBlock kernel: one chunk of nb images per grid step, everything at
# H/2 x W/2 resolution, channels on sublanes / flat (image,row,col) on lanes.
# ----------------------------------------------------------------------------
def _resnet_block_kernel(x_ref, m_ref, dw_ref, db_ref, iw_ref, ib_ref,
                         bsw_ref, bsb_ref, b2w_ref, b2b_ref,
                         o_ref, pad_ref, *, Cin, Cout, W2, P, K):
    halo = W2 + 1   # covers every tap offset |dh*W2 + dw| <= W2 + 1

    # Halo regions are read (then masked to zero) but never written below, so they must
    # hold zeros, not NaN garbage.  Zero only the halos; the interior is fully
    # overwritten before every read.
    z = jnp.zeros((pad_ref.shape[0], halo), jnp.bfloat16)
    pad_ref[:, 0:halo] = z
    pad_ref[:, halo + P:halo + P + halo] = z

    def conv3x3(x, w_ref, b_ref, c_in, c_out):
        """3x3 stride-1 conv: 9 accumulated per-tap (c_out,c_in)@(c_in,P) bf16 matmuls."""
        pad_ref[0:c_in, halo:halo + P] = x.astype(jnp.bfloat16)
        acc = jnp.zeros((c_out, P), jnp.float32)
        for kh in range(K):
            for kw in range(K):
                t = kh * K + kw
                off = halo + (kh - 1) * W2 + (kw - 1)
                tap = pad_ref[0:c_in, off:off + P]
                if not (kh == 1 and kw == 1):            # center tap never masked
                    tap = tap * m_ref[t:t + 1, :]
                acc = acc + jnp.dot(w_ref[:, t * c_in:(t + 1) * c_in], tap,
                                    preferred_element_type=jnp.float32)
        return acc + b_ref[...]

    # ---- down_opt: 3x3 stride-2 conv computed directly at H/2 x W/2 ---------------
    # x_ref holds the space-to-depth input: phase plane (a, b) (a = row parity,
    # b = col parity) lives in rows [(2a+b)*Cin, (2a+b+1)*Cin).  Tap (kh, kw) of the
    # stride-2 conv reads plane a = (kh != 1), b = (kw != 1) shifted by (dh, dw) with
    # dh = -1 if kh == 0 else 0 (likewise dw), so it reuses the same flat-halo windows
    # and the same downsampled-resolution 3x3 masks as the stride-1 convs.
    pad_ref[0:4 * Cin, halo:halo + P] = x_ref[...]
    acc = jnp.zeros((Cin, P), jnp.float32)
    for kh in range(K):
        for kw in range(K):
            t = kh * K + kw
            ph = (0 if kh == 1 else 1) * 2 + (0 if kw == 1 else 1)
            dh = -1 if kh == 0 else 0
            dw = -1 if kw == 0 else 0
            off = halo + dh * W2 + dw
            tap = pad_ref[ph * Cin:(ph + 1) * Cin, off:off + P]
            if dh != 0 or dw != 0:
                tm = (dh + 1) * K + (dw + 1)
                tap = tap * m_ref[tm:tm + 1, :]
            acc = acc + jnp.dot(dw_ref[:, t * Cin:(t + 1) * Cin], tap,
                                preferred_element_type=jnp.float32)
    xd = acc + db_ref[...]                                   # (Cin, P) f32

    # ---- in_conv, fused block1+skep, block2, residual add -------------------------
    x1 = conv3x3(xd, iw_ref, ib_ref, Cin, Cout)              # in_conv
    bs = conv3x3(x1, bsw_ref, bsb_ref, Cout, 2 * Cout)       # [block1 ; skep] fused
    h = jnp.maximum(bs[0:Cout], 0.0)                         # ReLU (block1 half only)
    sk = bs[Cout:2 * Cout]                                   # skep(x1)
    h = conv3x3(h, b2w_ref, b2b_ref, Cout, Cout)             # block2
    o_ref[...] = h + sk                                      # residual add (f32)


# ----------------------------------------------------------------------------
# Host-side helpers and the wrapper.
# ----------------------------------------------------------------------------
def _weight_matrix(w):
    """(O, I, KH, KW) PyTorch conv weight -> (O, KH*KW*I) tap-major im2col matrix, bf16."""
    O, I, KH, KW = w.shape
    return jnp.transpose(w, (0, 2, 3, 1)).reshape(O, KH * KW * I).astype(jnp.bfloat16)


def _bias_col(b):
    return b.reshape(-1, 1).astype(jnp.float32)


def _tap_masks(Hh, Ww, K, nb):
    """(K*K, nb*Hh*Ww) 0/1 masks (bf16): mask[t, p]==1 iff tap t at position p stays
    inside its own image (handles flat-layout row wrap-around and cross-image bleed)."""
    pad = K // 2
    r = jnp.arange(Hh)[:, None]
    c = jnp.arange(Ww)[None, :]
    rows = []
    for kh in range(K):
        for kw in range(K):
            dh, dw = kh - pad, kw - pad
            m = (r + dh >= 0) & (r + dh < Hh) & (c + dw >= 0) & (c + dw < Ww)
            rows.append(m.reshape(Hh * Ww))
    m = jnp.stack(rows, axis=0).astype(jnp.bfloat16)
    return jnp.tile(m, (1, nb))


def _pick_batch_fold(N, P2, target_lanes=128):
    """Smallest divisor nb of N with nb*P2 >= target_lanes (lane-dense output tiles)."""
    for nb in range(1, N + 1):
        if N % nb == 0 and nb * P2 >= target_lanes:
            return nb
    return N


def resnet_block_forward(params, x_nchw):
    """ResnetBlock(in_c, out_c, down=True, ksize=3, sk=False, use_conv=True) forward."""
    N, Cin, H, W = x_nchw.shape
    Cout, _, K, _ = params["in_w"].shape
    assert K == 3, "this fused kernel implements the ksize=3 configuration"
    assert Cin == Cout, "sk=False requires in_c == out_c (skep consumes the in_conv output)"
    assert H % 2 == 0 and W % 2 == 0
    H2, W2 = H // 2, W // 2
    P2 = H2 * W2
    nb = _pick_batch_fold(N, P2)
    G = N // nb
    P = nb * P2
    halo = W2 + 1

    # Space-to-depth into 4 phase planes (the down conv then runs at H/2 x W/2), and
    # fold nb images into the lane axis so activation/output tiles are lane-dense.
    x = x_nchw.astype(jnp.float32).reshape(N, Cin, H2, 2, W2, 2)
    x = x.transpose(0, 3, 5, 1, 2, 4).reshape(N, 4 * Cin, P2)
    x = x.reshape(G, nb, 4 * Cin, P2).transpose(0, 2, 1, 3).reshape(G, 4 * Cin, P)
    x = x.astype(jnp.bfloat16)

    args = [
        x,
        _tap_masks(H2, W2, K, nb),
        _weight_matrix(params["down_w"]), _bias_col(params["down_b"]),
        _weight_matrix(params["in_w"]), _bias_col(params["in_b"]),
        jnp.concatenate([_weight_matrix(params["b1_w"]),
                         _weight_matrix(params["skep_w"])], axis=0),   # block1+skep fused
        jnp.concatenate([_bias_col(params["b1_b"]),
                         _bias_col(params["skep_b"])], axis=0),
        _weight_matrix(params["b2_w"]), _bias_col(params["b2_b"]),
    ]

    in_specs = [pl.BlockSpec((None, 4 * Cin, P), lambda g: (g, 0, 0))]
    in_specs += [pl.BlockSpec(a.shape, lambda g: (0, 0)) for a in args[1:]]

    out = pl.pallas_call(
        functools.partial(_resnet_block_kernel, Cin=Cin, Cout=Cout, W2=W2, P=P, K=K),
        out_shape=jax.ShapeDtypeStruct((G, Cout, P), jnp.float32),
        grid=(G,),
        in_specs=in_specs,
        out_specs=pl.BlockSpec((None, Cout, P), lambda g: (g, 0, 0)),
        scratch_shapes=[
            pltpu.VMEM((max(4 * Cin, Cout), P + 2 * halo), jnp.bfloat16),
        ],
        compiler_params=pltpu.CompilerParams(
            dimension_semantics=("parallel",),
            vmem_limit_bytes=48 * 1024 * 1024),
    )(*args)

    out = out.reshape(G, Cout, nb, P2).transpose(0, 2, 1, 3)
    return out.reshape(N, Cout, H2, W2)


# ----------------------------------------------------------------------------
# Parameters (PyTorch layout: OIHW weights, (O,) biases) and pure-JAX reference.
# ----------------------------------------------------------------------------
def init_resnet_block_params(key, in_c, out_c, ksize=3):
    ks = jax.random.split(key, 8)

    def w(k, o, i, kh, kw, scale=0.1):
        return scale * jax.random.normal(k, (o, i, kh, kw), jnp.float32)

    def b(k, o, scale=0.05):
        return scale * jax.random.normal(k, (o,), jnp.float32)

    return {
        # Downsample(in_c, use_conv=True): 3x3 stride-2 conv, in_c -> in_c
        "down_w": w(ks[0], in_c, in_c, 3, 3), "down_b": b(ks[1], in_c),
        # in_conv: in_c -> out_c
        "in_w": w(ks[2], out_c, in_c, ksize, ksize), "in_b": b(ks[3], out_c),
        # block1: out_c -> out_c
        "b1_w": w(ks[4], out_c, out_c, 3, 3), "b1_b": b(ks[5], out_c),
        # block2: zero_module -> zeros
        "b2_w": jnp.zeros((out_c, out_c, ksize, ksize), jnp.float32),
        "b2_b": jnp.zeros((out_c,), jnp.float32),
        # skep: declared Conv2d(in_c, out_c); applied to the in_conv output
        "skep_w": w(ks[6], out_c, in_c, ksize, ksize), "skep_b": b(ks[7], out_c),
    }


def _conv_ref(x, w, b, stride=1):
    pad = w.shape[-1] // 2
    y = jax.lax.conv_general_dilated(
        x, w, window_strides=(stride, stride),
        padding=((pad, pad), (pad, pad)),
        dimension_numbers=("NCHW", "OIHW", "NCHW"),
        precision=jax.lax.Precision.HIGHEST)
    return y + b[None, :, None, None]


def resnet_block_ref(params, x):
    x = _conv_ref(x, params["down_w"], params["down_b"], stride=2)   # down_opt
    x = _conv_ref(x, params["in_w"], params["in_b"])                 # in_conv
    h = jnp.maximum(_conv_ref(x, params["b1_w"], params["b1_b"]), 0.0)
    h = _conv_ref(h, params["b2_w"], params["b2_b"])
    return h + _conv_ref(x, params["skep_w"], params["skep_b"])


if __name__ == "__main__":
    key = jax.random.PRNGKey(0)
    k_x, k_p, k_nz = jax.random.split(key, 3)

    N, C, H, W = 2, 4, 16, 16          # in_c == out_c (required by sk=False, see header)
    x = jax.random.normal(k_x, (N, C, H, W), jnp.float32)   # NCHW, like PyTorch
    params = init_resnet_block_params(k_p, C, C, ksize=3)

    fwd = jax.jit(resnet_block_forward)

    # bf16 matmul operands with f32 accumulation vs an f32 HIGHEST-precision reference
    # -> loosened tolerances (expected error ~3e-3, structural bugs would be >=0.1).
    out = jax.block_until_ready(fwd(params, x))
    ref = jax.block_until_ready(resnet_block_ref(params, x))
    assert out.shape == (N, C, H // 2, W // 2), out.shape
    assert jnp.allclose(out, ref, atol=4e-2, rtol=4e-2), float(jnp.max(jnp.abs(out - ref)))

    # block2 is zero-initialized (zero_module), so the check above does not exercise
    # that conv path; re-check with nonzero block2 weights (forward semantics are
    # independent of parameter values).
    params_nz = dict(params)
    params_nz["b2_w"] = 0.1 * jax.random.normal(k_nz, params["b2_w"].shape, jnp.float32)
    params_nz["b2_b"] = jnp.full((C,), 0.05, jnp.float32)
    out2 = jax.block_until_ready(fwd(params_nz, x))
    ref2 = jax.block_until_ready(resnet_block_ref(params_nz, x))
    assert jnp.allclose(out2, ref2, atol=4e-2, rtol=4e-2), float(jnp.max(jnp.abs(out2 - ref2)))

    print("KERNEL_OK")
</pallas_src>

<mosaic_0001>
module attributes {stable_mosaic.version = 11 : i64} {
  func.func @_resnet_block_kernel(%arg0: i32, %arg1: memref<1x16x128xbf16, #tpu.memory_space<vmem>>, %arg2: memref<9x128xbf16, #tpu.memory_space<vmem>>, %arg3: memref<4x36xbf16, #tpu.memory_space<vmem>>, %arg4: memref<4x1xf32, #tpu.memory_space<vmem>>, %arg5: memref<4x36xbf16, #tpu.memory_space<vmem>>, %arg6: memref<4x1xf32, #tpu.memory_space<vmem>>, %arg7: memref<8x36xbf16, #tpu.memory_space<vmem>>, %arg8: memref<8x1xf32, #tpu.memory_space<vmem>>, %arg9: memref<4x36xbf16, #tpu.memory_space<vmem>>, %arg10: memref<4x1xf32, #tpu.memory_space<vmem>>, %arg11: memref<1x4x128xf32, #tpu.memory_space<vmem>>, %arg12: memref<16x146xbf16, #tpu.memory_space<vmem>>) attributes {dimension_semantics = [#tpu.dimension_semantics<parallel>], iteration_bounds = array<i64: 1>, scalar_prefetch = 0 : i64, scratch_operands = 1 : i64, tpu.core_type = #tpu.core_type<tc>, window_params = [{transform_indices = @transform_0, window_bounds = array<i64: 1, 16, 128>}, {pipeline_mode = #tpu.pipeline_mode<synchronous>, transform_indices = @transform_1, window_bounds = array<i64: 9, 128>}, {pipeline_mode = #tpu.pipeline_mode<synchronous>, transform_indices = @transform_2, window_bounds = array<i64: 4, 36>}, {pipeline_mode = #tpu.pipeline_mode<synchronous>, transform_indices = @transform_3, window_bounds = array<i64: 4, 1>}, {pipeline_mode = #tpu.pipeline_mode<synchronous>, transform_indices = @transform_4, window_bounds = array<i64: 4, 36>}, {pipeline_mode = #tpu.pipeline_mode<synchronous>, transform_indices = @transform_5, window_bounds = array<i64: 4, 1>}, {pipeline_mode = #tpu.pipeline_mode<synchronous>, transform_indices = @transform_6, window_bounds = array<i64: 8, 36>}, {pipeline_mode = #tpu.pipeline_mode<synchronous>, transform_indices = @transform_7, window_bounds = array<i64: 8, 1>}, {pipeline_mode = #tpu.pipeline_mode<synchronous>, transform_indices = @transform_8, window_bounds = array<i64: 4, 36>}, {pipeline_mode = #tpu.pipeline_mode<synchronous>, transform_indices = @transform_9, window_bounds = array<i64: 4, 1>}, {transform_indices = @transform_10, window_bounds = array<i64: 1, 4, 128>}]} {
    %cst = arith.constant 0.000000e+00 : bf16
    %0 = vector.broadcast %cst : bf16 to vector<16x9xbf16>
    %c0 = arith.constant 0 : index
    %c0_0 = arith.constant 0 : index
    %1 = vector.load %arg12[%c0, %c0_0] : memref<16x146xbf16, #tpu.memory_space<vmem>>, vector<16x9xbf16>
    tpu.vector_store %arg12[%c0, %c0_0], %0 {strides = array<i32>} : memref<16x146xbf16, #tpu.memory_space<vmem>>, vector<16x9xbf16>,
    %c0_1 = arith.constant 0 : index
    %c137 = arith.constant 137 : index
    %2 = vector.load %arg12[%c0_1, %c137] : memref<16x146xbf16, #tpu.memory_space<vmem>>, vector<16x9xbf16>
    tpu.vector_store %arg12[%c0_1, %c137], %0 {strides = array<i32>} : memref<16x146xbf16, #tpu.memory_space<vmem>>, vector<16x9xbf16>,
    %c0_2 = arith.constant 0 : index
    %c0_3 = arith.constant 0 : index
    %c0_4 = arith.constant 0 : index
    %3 = vector.load %arg1[%c0_2, %c0_3, %c0_4] : memref<1x16x128xbf16, #tpu.memory_space<vmem>>, vector<1x16x128xbf16>
    %4 = vector.shape_cast %3 : vector<1x16x128xbf16> to vector<16x128xbf16>
    %c0_5 = arith.constant 0 : index
    %c9 = arith.constant 9 : index
    %5 = vector.load %arg12[%c0_5, %c9] : memref<16x146xbf16, #tpu.memory_space<vmem>>, vector<16x128xbf16>
    tpu.vector_store %arg12[%c0_5, %c9], %4 {strides = array<i32>} : memref<16x146xbf16, #tpu.memory_space<vmem>>, vector<16x128xbf16>,
    %cst_6 = arith.constant 0.000000e+00 : f32
    %6 = vector.broadcast %cst_6 : f32 to vector<4x128xf32>
    %c12 = arith.constant 12 : index
    %c0_7 = arith.constant 0 : index
    %7 = vector.load %arg12[%c12, %c0_7] : memref<16x146xbf16, #tpu.memory_space<vmem>>, vector<4x128xbf16>
    %c0_8 = arith.constant 0 : index
    %c0_9 = arith.constant 0 : index
    %8 = vector.load %arg2[%c0_8, %c0_9] : memref<9x128xbf16, #tpu.memory_space<vmem>>, vector<1x128xbf16>
    %9 = vector.broadcast %8 : vector<1x128xbf16> to vector<4x128xbf16>
    %10 = arith.mulf %7, %9 : vector<4x128xbf16>
    %c0_10 = arith.constant 0 : index
    %c0_11 = arith.constant 0 : index
    %11 = vector.load %arg3[%c0_10, %c0_11] : memref<4x36xbf16, #tpu.memory_space<vmem>>, vector<4x4xbf16>
    %cst_12 = arith.constant dense<0.000000e+00> : vector<4x128xf32>
    %12 = tpu.matmul %11, %10, %cst_12 {dimension_numbers = #tpu.dot_dimension_numbers<[1], [0], [0], [1], [0, 0, 1, 1], [], []>} : vector<4x4xbf16>, vector<4x128xbf16>, vector<4x128xf32> -> vector<4x128xf32>
    %13 = arith.addf %6, %12 : vector<4x128xf32>
    %c8 = arith.constant 8 : index
    %c1 = arith.constant 1 : index
    %14 = vector.load %arg12[%c8, %c1] : memref<16x146xbf16, #tpu.memory_space<vmem>>, vector<4x128xbf16>
    %c1_13 = arith.constant 1 : index
    %c0_14 = arith.constant 0 : index
    %15 = vector.load %arg2[%c1_13, %c0_14] : memref<9x128xbf16, #tpu.memory_space<vmem>>, vector<1x128xbf16>
    %16 = vector.broadcast %15 : vector<1x128xbf16> to vector<4x128xbf16>
    %17 = arith.mulf %14, %16 : vector<4x128xbf16>
    %c0_15 = arith.constant 0 : index
    %c4 = arith.constant 4 : index
    %18 = vector.load %arg3[%c0_15, %c4] : memref<4x36xbf16, #tpu.memory_space<vmem>>, vector<4x4xbf16>
    %cst_16 = arith.constant dense<0.000000e+00> : vector<4x128xf32>
    %19 = tpu.matmul %18, %17, %cst_16 {dimension_numbers = #tpu.dot_dimension_numbers<[1], [0], [0], [1], [0, 0, 1, 1], [], []>} : vector<4x4xbf16>, vector<4x128xbf16>, vector<4x128xf32> -> vector<4x128xf32>
    %20 = arith.addf %13, %19 : vector<4x128xf32>
    %c12_17 = arith.constant 12 : index
    %c1_18 = arith.constant 1 : index
    %21 = vector.load %arg12[%c12_17, %c1_18] : memref<16x146xbf16, #tpu.memory_space<vmem>>, vector<4x128xbf16>
    %c1_19 = arith.constant 1 : index
    %c0_20 = arith.constant 0 : index
    %22 = vector.load %arg2[%c1_19, %c0_20] : memref<9x128xbf16, #tpu.memory_space<vmem>>, vector<1x128xbf16>
    %23 = vector.broadcast %22 : vector<1x128xbf16> to vector<4x128xbf16>
    %24 = arith.mulf %21, %23 : vector<4x128xbf16>
    %c0_21 = arith.constant 0 : index
    %c8_22 = arith.constant 8 : index
    %25 = vector.load %arg3[%c0_21, %c8_22] : memref<4x36xbf16, #tpu.memory_space<vmem>>, vector<4x4xbf16>
    %cst_23 = arith.constant dense<0.000000e+00> : vector<4x128xf32>
    %26 = tpu.matmul %25, %24, %cst_23 {dimension_numbers = #tpu.dot_dimension_numbers<[1], [0], [0], [1], [0, 0, 1, 1], [], []>} : vector<4x4xbf16>, vector<4x128xbf16>, vector<4x128xf32> -> vector<4x128xf32>
    %27 = arith.addf %20, %26 : vector<4x128xf32>
    %c4_24 = arith.constant 4 : index
    %c8_25 = arith.constant 8 : index
    %28 = vector.load %arg12[%c4_24, %c8_25] : memref<16x146xbf16, #tpu.memory_space<vmem>>, vector<4x128xbf16>
    %c3 = arith.constant 3 : index
    %c0_26 = arith.constant 0 : index
    %29 = vector.load %arg2[%c3, %c0_26] : memref<9x128xbf16, #tpu.memory_space<vmem>>, vector<1x128xbf16>
    %30 = vector.broadcast %29 : vector<1x128xbf16> to vector<4x128xbf16>
    %31 = arith.mulf %28, %30 : vector<4x128xbf16>
    %c0_27 = arith.constant 0 : index
    %c12_28 = arith.constant 12 : index
    %32 = vector.load %arg3[%c0_27, %c12_28] : memref<4x36xbf16, #tpu.memory_space<vmem>>, vector<4x4xbf16>
    %cst_29 = arith.constant dense<0.000000e+00> : vector<4x128xf32>
    %33 = tpu.matmul %32, %31, %cst_29 {dimension_numbers = #tpu.dot_dimension_numbers<[1], [0], [0], [1], [0, 0, 1, 1], [], []>} : vector<4x4xbf16>, vector<4x128xbf16>, vector<4x128xf32> -> vector<4x128xf32>
    %34 = arith.addf %27, %33 : vector<4x128xf32>
    %c0_30 = arith.constant 0 : index
    %c9_31 = arith.constant 9 : index
    %35 = vector.load %arg12[%c0_30, %c9_31] : memref<16x146xbf16, #tpu.memory_space<vmem>>, vector<4x128xbf16>
    %c0_32 = arith.constant 0 : index
    %c16 = arith.constant 16 : index
    %36 = vector.load %arg3[%c0_32, %c16] : memref<4x36xbf16, #tpu.memory_space<vmem>>, vector<4x4xbf16>
    %cst_33 = arith.constant dense<0.000000e+00> : vector<4x128xf32>
    %37 = tpu.matmul %36, %35, %cst_33 {dimension_numbers = #tpu.dot_dimension_numbers<[1], [0], [0], [1], [0, 0, 1, 1], [], []>} : vector<4x4xbf16>, vector<4x128xbf16>, vector<4x128xf32> -> vector<4x128xf32>
    %38 = arith.addf %34, %37 : vector<4x128xf32>
    %c4_34 = arith.constant 4 : index
    %c9_35 = arith.constant 9 : index
    %39 = vector.load %arg12[%c4_34, %c9_35] : memref<16x146xbf16, #tpu.memory_space<vmem>>, vector<4x128xbf16>
    %c0_36 = arith.constant 0 : index
    %c20 = arith.constant 20 : index
    %40 = vector.load %arg3[%c0_36, %c20] : memref<4x36xbf16, #tpu.memory_space<vmem>>, vector<4x4xbf16>
    %cst_37 = arith.constant dense<0.000000e+00> : vector<4x128xf32>
    %41 = tpu.matmul %40, %39, %cst_37 {dimension_numbers = #tpu.dot_dimension_numbers<[1], [0], [0], [1], [0, 0, 1, 1], [], []>} : vector<4x4xbf16>, vector<4x128xbf16>, vector<4x128xf32> -> vector<4x128xf32>
    %42 = arith.addf %38, %41 : vector<4x128xf32>
    %c12_38 = arith.constant 12 : index
    %c8_39 = arith.constant 8 : index
    %43 = vector.load %arg12[%c12_38, %c8_39] : memref<16x146xbf16, #tpu.memory_space<vmem>>, vector<4x128xbf16>
    %c3_40 = arith.constant 3 : index
    %c0_41 = arith.constant 0 : index
    %44 = vector.load %arg2[%c3_40, %c0_41] : memref<9x128xbf16, #tpu.memory_space<vmem>>, vector<1x128xbf16>
    %45 = vector.broadcast %44 : vector<1x128xbf16> to vector<4x128xbf16>
    %46 = arith.mulf %43, %45 : vector<4x128xbf16>
    %c0_42 = arith.constant 0 : index
    %c24 = arith.constant 24 : index
    %47 = vector.load %arg3[%c0_42, %c24] : memref<4x36xbf16, #tpu.memory_space<vmem>>, vector<4x4xbf16>
    %cst_43 = arith.constant dense<0.000000e+00> : vector<4x128xf32>
    %48 = tpu.matmul %47, %46, %cst_43 {dimension_numbers = #tpu.dot_dimension_numbers<[1], [0], [0], [1], [0, 0, 1, 1], [], []>} : vector<4x4xbf16>, vector<4x128xbf16>, vector<4x128xf32> -> vector<4x128xf32>
    %49 = arith.addf %42, %48 : vector<4x128xf32>
    %c8_44 = arith.constant 8 : index
    %c9_45 = arith.constant 9 : index
    %50 = vector.load %arg12[%c8_44, %c9_45] : memref<16x146xbf16, #tpu.memory_space<vmem>>, vector<4x128xbf16>
    %c0_46 = arith.constant 0 : index
    %c28 = arith.constant 28 : index
    %51 = vector.load %arg3[%c0_46, %c28] : memref<4x36xbf16, #tpu.memory_space<vmem>>, vector<4x4xbf16>
    %cst_47 = arith.constant dense<0.000000e+00> : vector<4x128xf32>
    %52 = tpu.matmul %51, %50, %cst_47 {dimension_numbers = #tpu.dot_dimension_numbers<[1], [0], [0], [1], [0, 0, 1, 1], [], []>} : vector<4x4xbf16>, vector<4x128xbf16>, vector<4x128xf32> -> vector<4x128xf32>
    %53 = arith.addf %49, %52 : vector<4x128xf32>
    %c12_48 = arith.constant 12 : index
    %c9_49 = arith.constant 9 : index
    %54 = vector.load %arg12[%c12_48, %c9_49] : memref<16x146xbf16, #tpu.memory_space<vmem>>, vector<4x128xbf16>
    %c0_50 = arith.constant 0 : index
    %c32 = arith.constant 32 : index
    %55 = vector.load %arg3[%c0_50, %c32] : memref<4x36xbf16, #tpu.memory_space<vmem>>, vector<4x4xbf16>
    %cst_51 = arith.constant dense<0.000000e+00> : vector<4x128xf32>
    %56 = tpu.matmul %55, %54, %cst_51 {dimension_numbers = #tpu.dot_dimension_numbers<[1], [0], [0], [1], [0, 0, 1, 1], [], []>} : vector<4x4xbf16>, vector<4x128xbf16>, vector<4x128xf32> -> vector<4x128xf32>
    %57 = arith.addf %53, %56 : vector<4x128xf32>
    %c0_52 = arith.constant 0 : index
    %c0_53 = arith.constant 0 : index
    %58 = vector.load %arg4[%c0_52, %c0_53] : memref<4x1xf32, #tpu.memory_space<vmem>>, vector<4x1xf32>
    %59 = vector.broadcast %58 : vector<4x1xf32> to vector<4x128xf32>
    %60 = arith.addf %57, %59 : vector<4x128xf32>
    %61 = arith.truncf %60 : vector<4x128xf32> to vector<4x128xbf16>
    %c0_54 = arith.constant 0 : index
    %c9_55 = arith.constant 9 : index
    %62 = vector.load %arg12[%c0_54, %c9_55] : memref<16x146xbf16, #tpu.memory_space<vmem>>, vector<4x128xbf16>
    tpu.vector_store %arg12[%c0_54, %c9_55], %61 {strides = array<i32>} : memref<16x146xbf16, #tpu.memory_space<vmem>>, vector<4x128xbf16>,
    %cst_56 = arith.constant 0.000000e+00 : f32
    %63 = vector.broadcast %cst_56 : f32 to vector<4x128xf32>
    %c0_57 = arith.constant 0 : index
    %c0_58 = arith.constant 0 : index
    %64 = vector.load %arg12[%c0_57, %c0_58] : memref<16x146xbf16, #tpu.memory_space<vmem>>, vector<4x128xbf16>
    %c0_59 = arith.constant 0 : index
    %c0_60 = arith.constant 0 : index
    %65 = vector.load %arg2[%c0_59, %c0_60] : memref<9x128xbf16, #tpu.memory_space<vmem>>, vector<1x128xbf16>
    %66 = vector.broadcast %65 : vector<1x128xbf16> to vector<4x128xbf16>
    %67 = arith.mulf %64, %66 : vector<4x128xbf16>
    %c0_61 = arith.constant 0 : index
    %c0_62 = arith.constant 0 : index
    %68 = vector.load %arg5[%c0_61, %c0_62] : memref<4x36xbf16, #tpu.memory_space<vmem>>, vector<4x4xbf16>
    %cst_63 = arith.constant dense<0.000000e+00> : vector<4x128xf32>
    %69 = tpu.matmul %68, %67, %cst_63 {dimension_numbers = #tpu.dot_dimension_numbers<[1], [0], [0], [1], [0, 0, 1, 1], [], []>} : vector<4x4xbf16>, vector<4x128xbf16>, vector<4x128xf32> -> vector<4x128xf32>
    %70 = arith.addf %63, %69 : vector<4x128xf32>
    %c0_64 = arith.constant 0 : index
    %c1_65 = arith.constant 1 : index
    %71 = vector.load %arg12[%c0_64, %c1_65] : memref<16x146xbf16, #tpu.memory_space<vmem>>, vector<4x128xbf16>
    %c1_66 = arith.constant 1 : index
    %c0_67 = arith.constant 0 : index
    %72 = vector.load %arg2[%c1_66, %c0_67] : memref<9x128xbf16, #tpu.memory_space<vmem>>, vector<1x128xbf16>
    %73 = vector.broadcast %72 : vector<1x128xbf16> to vector<4x128xbf16>
    %74 = arith.mulf %71, %73 : vector<4x128xbf16>
    %c0_68 = arith.constant 0 : index
    %c4_69 = arith.constant 4 : index
    %75 = vector.load %arg5[%c0_68, %c4_69] : memref<4x36xbf16, #tpu.memory_space<vmem>>, vector<4x4xbf16>
    %cst_70 = arith.constant dense<0.000000e+00> : vector<4x128xf32>
    %76 = tpu.matmul %75, %74, %cst_70 {dimension_numbers = #tpu.dot_dimension_numbers<[1], [0], [0], [1], [0, 0, 1, 1], [], []>} : vector<4x4xbf16>, vector<4x128xbf16>, vector<4x128xf32> -> vector<4x128xf32>
    %77 = arith.addf %70, %76 : vector<4x128xf32>
    %c0_71 = arith.constant 0 : index
    %c2 = arith.constant 2 : index
    %78 = vector.load %arg12[%c0_71, %c2] : memref<16x146xbf16, #tpu.memory_space<vmem>>, vector<4x128xbf16>
    %c2_72 = arith.constant 2 : index
    %c0_73 = arith.constant 0 : index
    %79 = vector.load %arg2[%c2_72, %c0_73] : memref<9x128xbf16, #tpu.memory_space<vmem>>, vector<1x128xbf16>
    %80 = vector.broadcast %79 : vector<1x128xbf16> to vector<4x128xbf16>
    %81 = arith.mulf %78, %80 : vector<4x128xbf16>
    %c0_74 = arith.constant 0 : index
    %c8_75 = arith.constant 8 : index
    %82 = vector.load %arg5[%c0_74, %c8_75] : memref<4x36xbf16, #tpu.memory_space<vmem>>, vector<4x4xbf16>
    %cst_76 = arith.constant dense<0.000000e+00> : vector<4x128xf32>
    %83 = tpu.matmul %82, %81, %cst_76 {dimension_numbers = #tpu.dot_dimension_numbers<[1], [0], [0], [1], [0, 0, 1, 1], [], []>} : vector<4x4xbf16>, vector<4x128xbf16>, vector<4x128xf32> -> vector<4x128xf32>
    %84 = arith.addf %77, %83 : vector<4x128xf32>
    %c0_77 = arith.constant 0 : index
    %c8_78 = arith.constant 8 : index
    %85 = vector.load %arg12[%c0_77, %c8_78] : memref<16x146xbf16, #tpu.memory_space<vmem>>, vector<4x128xbf16>
    %c3_79 = arith.constant 3 : index
    %c0_80 = arith.constant 0 : index
    %86 = vector.load %arg2[%c3_79, %c0_80] : memref<9x128xbf16, #tpu.memory_space<vmem>>, vector<1x128xbf16>
    %87 = vector.broadcast %86 : vector<1x128xbf16> to vector<4x128xbf16>
    %88 = arith.mulf %85, %87 : vector<4x128xbf16>
    %c0_81 = arith.constant 0 : index
    %c12_82 = arith.constant 12 : index
    %89 = vector.load %arg5[%c0_81, %c12_82] : memref<4x36xbf16, #tpu.memory_space<vmem>>, vector<4x4xbf16>
    %cst_83 = arith.constant dense<0.000000e+00> : vector<4x128xf32>
    %90 = tpu.matmul %89, %88, %cst_83 {dimension_numbers = #tpu.dot_dimension_numbers<[1], [0], [0], [1], [0, 0, 1, 1], [], []>} : vector<4x4xbf16>, vector<4x128xbf16>, vector<4x128xf32> -> vector<4x128xf32>
    %91 = arith.addf %84, %90 : vector<4x128xf32>
    %c0_84 = arith.constant 0 : index
    %c9_85 = arith.constant 9 : index
    %92 = vector.load %arg12[%c0_84, %c9_85] : memref<16x146xbf16, #tpu.memory_space<vmem>>, vector<4x128xbf16>
    %c0_86 = arith.constant 0 : index
    %c16_87 = arith.constant 16 : index
    %93 = vector.load %arg5[%c0_86, %c16_87] : memref<4x36xbf16, #tpu.memory_space<vmem>>, vector<4x4xbf16>
    %cst_88 = arith.constant dense<0.000000e+00> : vector<4x128xf32>
    %94 = tpu.matmul %93, %92, %cst_88 {dimension_numbers = #tpu.dot_dimension_numbers<[1], [0], [0], [1], [0, 0, 1, 1], [], []>} : vector<4x4xbf16>, vector<4x128xbf16>, vector<4x128xf32> -> vector<4x128xf32>
    %95 = arith.addf %91, %94 : vector<4x128xf32>
    %c0_89 = arith.constant 0 : index
    %c10 = arith.constant 10 : index
    %96 = vector.load %arg12[%c0_89, %c10] : memref<16x146xbf16, #tpu.memory_space<vmem>>, vector<4x128xbf16>
    %c5 = arith.constant 5 : index
    %c0_90 = arith.constant 0 : index
    %97 = vector.load %arg2[%c5, %c0_90] : memref<9x128xbf16, #tpu.memory_space<vmem>>, vector<1x128xbf16>
    %98 = vector.broadcast %97 : vector<1x128xbf16> to vector<4x128xbf16>
    %99 = arith.mulf %96, %98 : vector<4x128xbf16>
    %c0_91 = arith.constant 0 : index
    %c20_92 = arith.constant 20 : index
    %100 = vector.load %arg5[%c0_91, %c20_92] : memref<4x36xbf16, #tpu.memory_space<vmem>>, vector<4x4xbf16>
    %cst_93 = arith.constant dense<0.000000e+00> : vector<4x128xf32>
    %101 = tpu.matmul %100, %99, %cst_93 {dimension_numbers = #tpu.dot_dimension_numbers<[1], [0], [0], [1], [0, 0, 1, 1], [], []>} : vector<4x4xbf16>, vector<4x128xbf16>, vector<4x128xf32> -> vector<4x128xf32>
    %102 = arith.addf %95, %101 : vector<4x128xf32>
    %c0_94 = arith.constant 0 : index
    %c16_95 = arith.constant 16 : index
    %103 = vector.load %arg12[%c0_94, %c16_95] : memref<16x146xbf16, #tpu.memory_space<vmem>>, vector<4x128xbf16>
    %c6 = arith.constant 6 : index
    %c0_96 = arith.constant 0 : index
    %104 = vector.load %arg2[%c6, %c0_96] : memref<9x128xbf16, #tpu.memory_space<vmem>>, vector<1x128xbf16>
    %105 = vector.broadcast %104 : vector<1x128xbf16> to vector<4x128xbf16>
    %106 = arith.mulf %103, %105 : vector<4x128xbf16>
    %c0_97 = arith.constant 0 : index
    %c24_98 = arith.constant 24 : index
    %107 = vector.load %arg5[%c0_97, %c24_98] : memref<4x36xbf16, #tpu.memory_space<vmem>>, vector<4x4xbf16>
    %cst_99 = arith.constant dense<0.000000e+00> : vector<4x128xf32>
    %108 = tpu.matmul %107, %106, %cst_99 {dimension_numbers = #tpu.dot_dimension_numbers<[1], [0], [0], [1], [0, 0, 1, 1], [], []>} : vector<4x4xbf16>, vector<4x128xbf16>, vector<4x128xf32> -> vector<4x128xf32>
    %109 = arith.addf %102, %108 : vector<4x128xf32>
    %c0_100 = arith.constant 0 : index
    %c17 = arith.constant 17 : index
    %110 = vector.load %arg12[%c0_100, %c17] : memref<16x146xbf16, #tpu.memory_space<vmem>>, vector<4x128xbf16>
    %c7 = arith.constant 7 : index
    %c0_101 = arith.constant 0 : index
    %111 = vector.load %arg2[%c7, %c0_101] : memref<9x128xbf16, #tpu.memory_space<vmem>>, vector<1x128xbf16>
    %112 = vector.broadcast %111 : vector<1x128xbf16> to vector<4x128xbf16>
    %113 = arith.mulf %110, %112 : vector<4x128xbf16>
    %c0_102 = arith.constant 0 : index
    %c28_103 = arith.constant 28 : index
    %114 = vector.load %arg5[%c0_102, %c28_103] : memref<4x36xbf16, #tpu.memory_space<vmem>>, vector<4x4xbf16>
    %cst_104 = arith.constant dense<0.000000e+00> : vector<4x128xf32>
    %115 = tpu.matmul %114, %113, %cst_104 {dimension_numbers = #tpu.dot_dimension_numbers<[1], [0], [0], [1], [0, 0, 1, 1], [], []>} : vector<4x4xbf16>, vector<4x128xbf16>, vector<4x128xf32> -> vector<4x128xf32>
    %116 = arith.addf %109, %115 : vector<4x128xf32>
    %c0_105 = arith.constant 0 : index
    %c18 = arith.constant 18 : index
    %117 = vector.load %arg12[%c0_105, %c18] : memref<16x146xbf16, #tpu.memory_space<vmem>>, vector<4x128xbf16>
    %c8_106 = arith.constant 8 : index
    %c0_107 = arith.constant 0 : index
    %118 = vector.load %arg2[%c8_106, %c0_107] : memref<9x128xbf16, #tpu.memory_space<vmem>>, vector<1x128xbf16>
    %119 = vector.broadcast %118 : vector<1x128xbf16> to vector<4x128xbf16>
    %120 = arith.mulf %117, %119 : vector<4x128xbf16>
    %c0_108 = arith.constant 0 : index
    %c32_109 = arith.constant 32 : index
    %121 = vector.load %arg5[%c0_108, %c32_109] : memref<4x36xbf16, #tpu.memory_space<vmem>>, vector<4x4xbf16>
    %cst_110 = arith.constant dense<0.000000e+00> : vector<4x128xf32>
    %122 = tpu.matmul %121, %120, %cst_110 {dimension_numbers = #tpu.dot_dimension_numbers<[1], [0], [0], [1], [0, 0, 1, 1], [], []>} : vector<4x4xbf16>, vector<4x128xbf16>, vector<4x128xf32> -> vector<4x128xf32>
    %123 = arith.addf %116, %122 : vector<4x128xf32>
    %c0_111 = arith.constant 0 : index
    %c0_112 = arith.constant 0 : index
    %124 = vector.load %arg6[%c0_111, %c0_112] : memref<4x1xf32, #tpu.memory_space<vmem>>, vector<4x1xf32>
    %125 = vector.broadcast %124 : vector<4x1xf32> to vector<4x128xf32>
    %126 = arith.addf %123, %125 : vector<4x128xf32>
    %127 = arith.truncf %126 : vector<4x128xf32> to vector<4x128xbf16>
    %c0_113 = arith.constant 0 : index
    %c9_114 = arith.constant 9 : index
    %128 = vector.load %arg12[%c0_113, %c9_114] : memref<16x146xbf16, #tpu.memory_space<vmem>>, vector<4x128xbf16>
    tpu.vector_store %arg12[%c0_113, %c9_114], %127 {strides = array<i32>} : memref<16x146xbf16, #tpu.memory_space<vmem>>, vector<4x128xbf16>,
    %cst_115 = arith.constant 0.000000e+00 : f32
    %129 = vector.broadcast %cst_115 : f32 to vector<8x128xf32>
    %c0_116 = arith.constant 0 : index
    %c0_117 = arith.constant 0 : index
    %130 = vector.load %arg12[%c0_116, %c0_117] : memref<16x146xbf16, #tpu.memory_space<vmem>>, vector<4x128xbf16>
    %c0_118 = arith.constant 0 : index
    %c0_119 = arith.constant 0 : index
    %131 = vector.load %arg2[%c0_118, %c0_119] : memref<9x128xbf16, #tpu.memory_space<vmem>>, vector<1x128xbf16>
    %132 = vector.broadcast %131 : vector<1x128xbf16> to vector<4x128xbf16>
    %133 = arith.mulf %130, %132 : vector<4x128xbf16>
    %c0_120 = arith.constant 0 : index
    %c0_121 = arith.constant 0 : index
    %134 = vector.load %arg7[%c0_120, %c0_121] : memref<8x36xbf16, #tpu.memory_space<vmem>>, vector<8x4xbf16>
    %cst_122 = arith.constant dense<0.000000e+00> : vector<8x128xf32>
    %135 = tpu.matmul %134, %133, %cst_122 {dimension_numbers = #tpu.dot_dimension_numbers<[1], [0], [0], [1], [0, 0, 1, 1], [], []>} : vector<8x4xbf16>, vector<4x128xbf16>, vector<8x128xf32> -> vector<8x128xf32>
    %136 = arith.addf %129, %135 : vector<8x128xf32>
    %c0_123 = arith.constant 0 : index
    %c1_124 = arith.constant 1 : index
    %137 = vector.load %arg12[%c0_123, %c1_124] : memref<16x146xbf16, #tpu.memory_space<vmem>>, vector<4x128xbf16>
    %c1_125 = arith.constant 1 : index
    %c0_126 = arith.constant 0 : index
    %138 = vector.load %arg2[%c1_125, %c0_126] : memref<9x128xbf16, #tpu.memory_space<vmem>>, vector<1x128xbf16>
    %139 = vector.broadcast %138 : vector<1x128xbf16> to vector<4x128xbf16>
    %140 = arith.mulf %137, %139 : vector<4x128xbf16>
    %c0_127 = arith.constant 0 : index
    %c4_128 = arith.constant 4 : index
    %141 = vector.load %arg7[%c0_127, %c4_128] : memref<8x36xbf16, #tpu.memory_space<vmem>>, vector<8x4xbf16>
    %cst_129 = arith.constant dense<0.000000e+00> : vector<8x128xf32>
    %142 = tpu.matmul %141, %140, %cst_129 {dimension_numbers = #tpu.dot_dimension_numbers<[1], [0], [0], [1], [0, 0, 1, 1], [], []>} : vector<8x4xbf16>, vector<4x128xbf16>, vector<8x128xf32> -> vector<8x128xf32>
    %143 = arith.addf %136, %142 : vector<8x128xf32>
    %c0_130 = arith.constant 0 : index
    %c2_131 = arith.constant 2 : index
    %144 = vector.load %arg12[%c0_130, %c2_131] : memref<16x146xbf16, #tpu.memory_space<vmem>>, vector<4x128xbf16>
    %c2_132 = arith.constant 2 : index
    %c0_133 = arith.constant 0 : index
    %145 = vector.load %arg2[%c2_132, %c0_133] : memref<9x128xbf16, #tpu.memory_space<vmem>>, vector<1x128xbf16>
    %146 = vector.broadcast %145 : vector<1x128xbf16> to vector<4x128xbf16>
    %147 = arith.mulf %144, %146 : vector<4x128xbf16>
    %c0_134 = arith.constant 0 : index
    %c8_135 = arith.constant 8 : index
    %148 = vector.load %arg7[%c0_134, %c8_135] : memref<8x36xbf16, #tpu.memory_space<vmem>>, vector<8x4xbf16>
    %cst_136 = arith.constant dense<0.000000e+00> : vector<8x128xf32>
    %149 = tpu.matmul %148, %147, %cst_136 {dimension_numbers = #tpu.dot_dimension_numbers<[1], [0], [0], [1], [0, 0, 1, 1], [], []>} : vector<8x4xbf16>, vector<4x128xbf16>, vector<8x128xf32> -> vector<8x128xf32>
    %150 = arith.addf %143, %149 : vector<8x128xf32>
    %c0_137 = arith.constant 0 : index
    %c8_138 = arith.constant 8 : index
    %151 = vector.load %arg12[%c0_137, %c8_138] : memref<16x146xbf16, #tpu.memory_space<vmem>>, vector<4x128xbf16>
    %c3_139 = arith.constant 3 : index
    %c0_140 = arith.constant 0 : index
    %152 = vector.load %arg2[%c3_139, %c0_140] : memref<9x128xbf16, #tpu.memory_space<vmem>>, vector<1x128xbf16>
    %153 = vector.broadcast %152 : vector<1x128xbf16> to vector<4x128xbf16>
    %154 = arith.mulf %151, %153 : vector<4x128xbf16>
    %c0_141 = arith.constant 0 : index
    %c12_142 = arith.constant 12 : index
    %155 = vector.load %arg7[%c0_141, %c12_142] : memref<8x36xbf16, #tpu.memory_space<vmem>>, vector<8x4xbf16>
    %cst_143 = arith.constant dense<0.000000e+00> : vector<8x128xf32>
    %156 = tpu.matmul %155, %154, %cst_143 {dimension_numbers = #tpu.dot_dimension_numbers<[1], [0], [0], [1], [0, 0, 1, 1], [], []>} : vector<8x4xbf16>, vector<4x128xbf16>, vector<8x128xf32> -> vector<8x128xf32>
    %157 = arith.addf %150, %156 : vector<8x128xf32>
    %c0_144 = arith.constant 0 : index
    %c9_145 = arith.constant 9 : index
    %158 = vector.load %arg12[%c0_144, %c9_145] : memref<16x146xbf16, #tpu.memory_space<vmem>>, vector<4x128xbf16>
    %c0_146 = arith.constant 0 : index
    %c16_147 = arith.constant 16 : index
    %159 = vector.load %arg7[%c0_146, %c16_147] : memref<8x36xbf16, #tpu.memory_space<vmem>>, vector<8x4xbf16>
    %cst_148 = arith.constant dense<0.000000e+00> : vector<8x128xf32>
    %160 = tpu.matmul %159, %158, %cst_148 {dimension_numbers = #tpu.dot_dimension_numbers<[1], [0], [0], [1], [0, 0, 1, 1], [], []>} : vector<8x4xbf16>, vector<4x128xbf16>, vector<8x128xf32> -> vector<8x128xf32>
    %161 = arith.addf %157, %160 : vector<8x128xf32>
    %c0_149 = arith.constant 0 : index
    %c10_150 = arith.constant 10 : index
    %162 = vector.load %arg12[%c0_149, %c10_150] : memref<16x146xbf16, #tpu.memory_space<vmem>>, vector<4x128xbf16>
    %c5_151 = arith.constant 5 : index
    %c0_152 = arith.constant 0 : index
    %163 = vector.load %arg2[%c5_151, %c0_152] : memref<9x128xbf16, #tpu.memory_space<vmem>>, vector<1x128xbf16>
    %164 = vector.broadcast %163 : vector<1x128xbf16> to vector<4x128xbf16>
    %165 = arith.mulf %162, %164 : vector<4x128xbf16>
    %c0_153 = arith.constant 0 : index
    %c20_154 = arith.constant 20 : index
    %166 = vector.load %arg7[%c0_153, %c20_154] : memref<8x36xbf16, #tpu.memory_space<vmem>>, vector<8x4xbf16>
    %cst_155 = arith.constant dense<0.000000e+00> : vector<8x128xf32>
    %167 = tpu.matmul %166, %165, %cst_155 {dimension_numbers = #tpu.dot_dimension_numbers<[1], [0], [0], [1], [0, 0, 1, 1], [], []>} : vector<8x4xbf16>, vector<4x128xbf16>, vector<8x128xf32> -> vector<8x128xf32>
    %168 = arith.addf %161, %167 : vector<8x128xf32>
    %c0_156 = arith.constant 0 : index
    %c16_157 = arith.constant 16 : index
    %169 = vector.load %arg12[%c0_156, %c16_157] : memref<16x146xbf16, #tpu.memory_space<vmem>>, vector<4x128xbf16>
    %c6_158 = arith.constant 6 : index
    %c0_159 = arith.constant 0 : index
    %170 = vector.load %arg2[%c6_158, %c0_159] : memref<9x128xbf16, #tpu.memory_space<vmem>>, vector<1x128xbf16>
    %171 = vector.broadcast %170 : vector<1x128xbf16> to vector<4x128xbf16>
    %172 = arith.mulf %169, %171 : vector<4x128xbf16>
    %c0_160 = arith.constant 0 : index
    %c24_161 = arith.constant 24 : index
    %173 = vector.load %arg7[%c0_160, %c24_161] : memref<8x36xbf16, #tpu.memory_space<vmem>>, vector<8x4xbf16>
    %cst_162 = arith.constant dense<0.000000e+00> : vector<8x128xf32>
    %174 = tpu.matmul %173, %172, %cst_162 {dimension_numbers = #tpu.dot_dimension_numbers<[1], [0], [0], [1], [0, 0, 1, 1], [], []>} : vector<8x4xbf16>, vector<4x128xbf16>, vector<8x128xf32> -> vector<8x128xf32>
    %175 = arith.addf %168, %174 : vector<8x128xf32>
    %c0_163 = arith.constant 0 : index
    %c17_164 = arith.constant 17 : index
    %176 = vector.load %arg12[%c0_163, %c17_164] : memref<16x146xbf16, #tpu.memory_space<vmem>>, vector<4x128xbf16>
    %c7_165 = arith.constant 7 : index
    %c0_166 = arith.constant 0 : index
    %177 = vector.load %arg2[%c7_165, %c0_166] : memref<9x128xbf16, #tpu.memory_space<vmem>>, vector<1x128xbf16>
    %178 = vector.broadcast %177 : vector<1x128xbf16> to vector<4x128xbf16>
    %179 = arith.mulf %176, %178 : vector<4x128xbf16>
    %c0_167 = arith.constant 0 : index
    %c28_168 = arith.constant 28 : index
    %180 = vector.load %arg7[%c0_167, %c28_168] : memref<8x36xbf16, #tpu.memory_space<vmem>>, vector<8x4xbf16>
    %cst_169 = arith.constant dense<0.000000e+00> : vector<8x128xf32>
    %181 = tpu.matmul %180, %179, %cst_169 {dimension_numbers = #tpu.dot_dimension_numbers<[1], [0], [0], [1], [0, 0, 1, 1], [], []>} : vector<8x4xbf16>, vector<4x128xbf16>, vector<8x128xf32> -> vector<8x128xf32>
    %182 = arith.addf %175, %181 : vector<8x128xf32>
    %c0_170 = arith.constant 0 : index
    %c18_171 = arith.constant 18 : index
    %183 = vector.load %arg12[%c0_170, %c18_171] : memref<16x146xbf16, #tpu.memory_space<vmem>>, vector<4x128xbf16>
    %c8_172 = arith.constant 8 : index
    %c0_173 = arith.constant 0 : index
    %184 = vector.load %arg2[%c8_172, %c0_173] : memref<9x128xbf16, #tpu.memory_space<vmem>>, vector<1x128xbf16>
    %185 = vector.broadcast %184 : vector<1x128xbf16> to vector<4x128xbf16>
    %186 = arith.mulf %183, %185 : vector<4x128xbf16>
    %c0_174 = arith.constant 0 : index
    %c32_175 = arith.constant 32 : index
    %187 = vector.load %arg7[%c0_174, %c32_175] : memref<8x36xbf16, #tpu.memory_space<vmem>>, vector<8x4xbf16>
    %cst_176 = arith.constant dense<0.000000e+00> : vector<8x128xf32>
    %188 = tpu.matmul %187, %186, %cst_176 {dimension_numbers = #tpu.dot_dimension_numbers<[1], [0], [0], [1], [0, 0, 1, 1], [], []>} : vector<8x4xbf16>, vector<4x128xbf16>, vector<8x128xf32> -> vector<8x128xf32>
    %189 = arith.addf %182, %188 : vector<8x128xf32>
    %c0_177 = arith.constant 0 : index
    %c0_178 = arith.constant 0 : index
    %190 = vector.load %arg8[%c0_177, %c0_178] : memref<8x1xf32, #tpu.memory_space<vmem>>, vector<8x1xf32>
    %191 = vector.broadcast %190 : vector<8x1xf32> to vector<8x128xf32>
    %192 = arith.addf %189, %191 : vector<8x128xf32>
    %193 = vector.extract_strided_slice %192 {offsets = [0, 0], sizes = [4, 128], strides = [1, 1]} : vector<8x128xf32> to vector<4x128xf32>
    %cst_179 = arith.constant 0.000000e+00 : f32
    %194 = vector.broadcast %cst_179 : f32 to vector<4x128xf32>
    %195 = arith.maximumf %193, %194 : vector<4x128xf32>
    %196 = vector.extract_strided_slice %192 {offsets = [4, 0], sizes = [4, 128], strides = [1, 1]} : vector<8x128xf32> to vector<4x128xf32>
    %197 = arith.truncf %195 : vector<4x128xf32> to vector<4x128xbf16>
    %c0_180 = arith.constant 0 : index
    %c9_181 = arith.constant 9 : index
    %198 = vector.load %arg12[%c0_180, %c9_181] : memref<16x146xbf16, #tpu.memory_space<vmem>>, vector<4x128xbf16>
    tpu.vector_store %arg12[%c0_180, %c9_181], %197 {strides = array<i32>} : memref<16x146xbf16, #tpu.memory_space<vmem>>, vector<4x128xbf16>,
    %cst_182 = arith.constant 0.000000e+00 : f32
    %199 = vector.broadcast %cst_182 : f32 to vector<4x128xf32>
    %c0_183 = arith.constant 0 : index
    %c0_184 = arith.constant 0 : index
    %200 = vector.load %arg12[%c0_183, %c0_184] : memref<16x146xbf16, #tpu.memory_space<vmem>>, vector<4x128xbf16>
    %c0_185 = arith.constant 0 : index
    %c0_186 = arith.constant 0 : index
    %201 = vector.load %arg2[%c0_185, %c0_186] : memref<9x128xbf16, #tpu.memory_space<vmem>>, vector<1x128xbf16>
    %202 = vector.broadcast %201 : vector<1x128xbf16> to vector<4x128xbf16>
    %203 = arith.mulf %200, %202 : vector<4x128xbf16>
    %c0_187 = arith.constant 0 : index
    %c0_188 = arith.constant 0 : index
    %204 = vector.load %arg9[%c0_187, %c0_188] : memref<4x36xbf16, #tpu.memory_space<vmem>>, vector<4x4xbf16>
    %cst_189 = arith.constant dense<0.000000e+00> : vector<4x128xf32>
    %205 = tpu.matmul %204, %203, %cst_189 {dimension_numbers = #tpu.dot_dimension_numbers<[1], [0], [0], [1], [0, 0, 1, 1], [], []>} : vector<4x4xbf16>, vector<4x128xbf16>, vector<4x128xf32> -> vector<4x128xf32>
    %206 = arith.addf %199, %205 : vector<4x128xf32>
    %c0_190 = arith.constant 0 : index
    %c1_191 = arith.constant 1 : index
    %207 = vector.load %arg12[%c0_190, %c1_191] : memref<16x146xbf16, #tpu.memory_space<vmem>>, vector<4x128xbf16>
    %c1_192 = arith.constant 1 : index
    %c0_193 = arith.constant 0 : index
    %208 = vector.load %arg2[%c1_192, %c0_193] : memref<9x128xbf16, #tpu.memory_space<vmem>>, vector<1x128xbf16>
    %209 = vector.broadcast %208 : vector<1x128xbf16> to vector<4x128xbf16>
    %210 = arith.mulf %207, %209 : vector<4x128xbf16>
    %c0_194 = arith.constant 0 : index
    %c4_195 = arith.constant 4 : index
    %211 = vector.load %arg9[%c0_194, %c4_195] : memref<4x36xbf16, #tpu.memory_space<vmem>>, vector<4x4xbf16>
    %cst_196 = arith.constant dense<0.000000e+00> : vector<4x128xf32>
    %212 = tpu.matmul %211, %210, %cst_196 {dimension_numbers = #tpu.dot_dimension_numbers<[1], [0], [0], [1], [0, 0, 1, 1], [], []>} : vector<4x4xbf16>, vector<4x128xbf16>, vector<4x128xf32> -> vector<4x128xf32>
    %213 = arith.addf %206, %212 : vector<4x128xf32>
    %c0_197 = arith.constant 0 : index
    %c2_198 = arith.constant 2 : index
    %214 = vector.load %arg12[%c0_197, %c2_198] : memref<16x146xbf16, #tpu.memory_space<vmem>>, vector<4x128xbf16>
    %c2_199 = arith.constant 2 : index
    %c0_200 = arith.constant 0 : index
    %215 = vector.load %arg2[%c2_199, %c0_200] : memref<9x128xbf16, #tpu.memory_space<vmem>>, vector<1x128xbf16>
    %216 = vector.broadcast %215 : vector<1x128xbf16> to vector<4x128xbf16>
    %217 = arith.mulf %214, %216 : vector<4x128xbf16>
    %c0_201 = arith.constant 0 : index
    %c8_202 = arith.constant 8 : index
    %218 = vector.load %arg9[%c0_201, %c8_202] : memref<4x36xbf16, #tpu.memory_space<vmem>>, vector<4x4xbf16>
    %cst_203 = arith.constant dense<0.000000e+00> : vector<4x128xf32>
    %219 = tpu.matmul %218, %217, %cst_203 {dimension_numbers = #tpu.dot_dimension_numbers<[1], [0], [0], [1], [0, 0, 1, 1], [], []>} : vector<4x4xbf16>, vector<4x128xbf16>, vector<4x128xf32> -> vector<4x128xf32>
    %220 = arith.addf %213, %219 : vector<4x128xf32>
    %c0_204 = arith.constant 0 : index
    %c8_205 = arith.constant 8 : index
    %221 = vector.load %arg12[%c0_204, %c8_205] : memref<16x146xbf16, #tpu.memory_space<vmem>>, vector<4x128xbf16>
    %c3_206 = arith.constant 3 : index
    %c0_207 = arith.constant 0 : index
    %222 = vector.load %arg2[%c3_206, %c0_207] : memref<9x128xbf16, #tpu.memory_space<vmem>>, vector<1x128xbf16>
    %223 = vector.broadcast %222 : vector<1x128xbf16> to vector<4x128xbf16>
    %224 = arith.mulf %221, %223 : vector<4x128xbf16>
    %c0_208 = arith.constant 0 : index
    %c12_209 = arith.constant 12 : index
    %225 = vector.load %arg9[%c0_208, %c12_209] : memref<4x36xbf16, #tpu.memory_space<vmem>>, vector<4x4xbf16>
    %cst_210 = arith.constant dense<0.000000e+00> : vector<4x128xf32>
    %226 = tpu.matmul %225, %224, %cst_210 {dimension_numbers = #tpu.dot_dimension_numbers<[1], [0], [0], [1], [0, 0, 1, 1], [], []>} : vector<4x4xbf16>, vector<4x128xbf16>, vector<4x128xf32> -> vector<4x128xf32>
    %227 = arith.addf %220, %226 : vector<4x128xf32>
    %c0_211 = arith.constant 0 : index
    %c9_212 = arith.constant 9 : index
    %228 = vector.load %arg12[%c0_211, %c9_212] : memref<16x146xbf16, #tpu.memory_space<vmem>>, vector<4x128xbf16>
    %c0_213 = arith.constant 0 : index
    %c16_214 = arith.constant 16 : index
    %229 = vector.load %arg9[%c0_213, %c16_214] : memref<4x36xbf16, #tpu.memory_space<vmem>>, vector<4x4xbf16>
    %cst_215 = arith.constant dense<0.000000e+00> : vector<4x128xf32>
    %230 = tpu.matmul %229, %228, %cst_215 {dimension_numbers = #tpu.dot_dimension_numbers<[1], [0], [0], [1], [0, 0, 1, 1], [], []>} : vector<4x4xbf16>, vector<4x128xbf16>, vector<4x128xf32> -> vector<4x128xf32>
    %231 = arith.addf %227, %230 : vector<4x128xf32>
    %c0_216 = arith.constant 0 : index
    %c10_217 = arith.constant 10 : index
    %232 = vector.load %arg12[%c0_216, %c10_217] : memref<16x146xbf16, #tpu.memory_space<vmem>>, vector<4x128xbf16>
    %c5_218 = arith.constant 5 : index
    %c0_219 = arith.constant 0 : index
    %233 = vector.load %arg2[%c5_218, %c0_219] : memref<9x128xbf16, #tpu.memory_space<vmem>>, vector<1x128xbf16>
    %234 = vector.broadcast %233 : vector<1x128xbf16> to vector<4x128xbf16>
    %235 = arith.mulf %232, %234 : vector<4x128xbf16>
    %c0_220 = arith.constant 0 : index
    %c20_221 = arith.constant 20 : index
    %236 = vector.load %arg9[%c0_220, %c20_221] : memref<4x36xbf16, #tpu.memory_space<vmem>>, vector<4x4xbf16>
    %cst_222 = arith.constant dense<0.000000e+00> : vector<4x128xf32>
    %237 = tpu.matmul %236, %235, %cst_222 {dimension_numbers = #tpu.dot_dimension_numbers<[1], [0], [0], [1], [0, 0, 1, 1], [], []>} : vector<4x4xbf16>, vector<4x128xbf16>, vector<4x128xf32> -> vector<4x128xf32>
    %238 = arith.addf %231, %237 : vector<4x128xf32>
    %c0_223 = arith.constant 0 : index
    %c16_224 = arith.constant 16 : index
    %239 = vector.load %arg12[%c0_223, %c16_224] : memref<16x146xbf16, #tpu.memory_space<vmem>>, vector<4x128xbf16>
    %c6_225 = arith.constant 6 : index
    %c0_226 = arith.constant 0 : index
    %240 = vector.load %arg2[%c6_225, %c0_226] : memref<9x128xbf16, #tpu.memory_space<vmem>>, vector<1x128xbf16>
    %241 = vector.broadcast %240 : vector<1x128xbf16> to vector<4x128xbf16>
    %242 = arith.mulf %239, %241 : vector<4x128xbf16>
    %c0_227 = arith.constant 0 : index
    %c24_228 = arith.constant 24 : index
    %243 = vector.load %arg9[%c0_227, %c24_228] : memref<4x36xbf16, #tpu.memory_space<vmem>>, vector<4x4xbf16>
    %cst_229 = arith.constant dense<0.000000e+00> : vector<4x128xf32>
    %244 = tpu.matmul %243, %242, %cst_229 {dimension_numbers = #tpu.dot_dimension_numbers<[1], [0], [0], [1], [0, 0, 1, 1], [], []>} : vector<4x4xbf16>, vector<4x128xbf16>, vector<4x128xf32> -> vector<4x128xf32>
    %245 = arith.addf %238, %244 : vector<4x128xf32>
    %c0_230 = arith.constant 0 : index
    %c17_231 = arith.constant 17 : index
    %246 = vector.load %arg12[%c0_230, %c17_231] : memref<16x146xbf16, #tpu.memory_space<vmem>>, vector<4x128xbf16>
    %c7_232 = arith.constant 7 : index
    %c0_233 = arith.constant 0 : index
    %247 = vector.load %arg2[%c7_232, %c0_233] : memref<9x128xbf16, #tpu.memory_space<vmem>>, vector<1x128xbf16>
    %248 = vector.broadcast %247 : vector<1x128xbf16> to vector<4x128xbf16>
    %249 = arith.mulf %246, %248 : vector<4x128xbf16>
    %c0_234 = arith.constant 0 : index
    %c28_235 = arith.constant 28 : index
    %250 = vector.load %arg9[%c0_234, %c28_235] : memref<4x36xbf16, #tpu.memory_space<vmem>>, vector<4x4xbf16>
    %cst_236 = arith.constant dense<0.000000e+00> : vector<4x128xf32>
    %251 = tpu.matmul %250, %249, %cst_236 {dimension_numbers = #tpu.dot_dimension_numbers<[1], [0], [0], [1], [0, 0, 1, 1], [], []>} : vector<4x4xbf16>, vector<4x128xbf16>, vector<4x128xf32> -> vector<4x128xf32>
    %252 = arith.addf %245, %251 : vector<4x128xf32>
    %c0_237 = arith.constant 0 : index
    %c18_238 = arith.constant 18 : index
    %253 = vector.load %arg12[%c0_237, %c18_238] : memref<16x146xbf16, #tpu.memory_space<vmem>>, vector<4x128xbf16>
    %c8_239 = arith.constant 8 : index
    %c0_240 = arith.constant 0 : index
    %254 = vector.load %arg2[%c8_239, %c0_240] : memref<9x128xbf16, #tpu.memory_space<vmem>>, vector<1x128xbf16>
    %255 = vector.broadcast %254 : vector<1x128xbf16> to vector<4x128xbf16>
    %256 = arith.mulf %253, %255 : vector<4x128xbf16>
    %c0_241 = arith.constant 0 : index
    %c32_242 = arith.constant 32 : index
    %257 = vector.load %arg9[%c0_241, %c32_242] : memref<4x36xbf16, #tpu.memory_space<vmem>>, vector<4x4xbf16>
    %cst_243 = arith.constant dense<0.000000e+00> : vector<4x128xf32>
    %258 = tpu.matmul %257, %256, %cst_243 {dimension_numbers = #tpu.dot_dimension_numbers<[1], [0], [0], [1], [0, 0, 1, 1], [], []>} : vector<4x4xbf16>, vector<4x128xbf16>, vector<4x128xf32> -> vector<4x128xf32>
    %259 = arith.addf %252, %258 : vector<4x128xf32>
    %c0_244 = arith.constant 0 : index
    %c0_245 = arith.constant 0 : index
    %260 = vector.load %arg10[%c0_244, %c0_245] : memref<4x1xf32, #tpu.memory_space<vmem>>, vector<4x1xf32>
    %261 = vector.broadcast %260 : vector<4x1xf32> to vector<4x128xf32>
    %262 = arith.addf %259, %261 : vector<4x128xf32>
    %263 = arith.addf %262, %196 : vector<4x128xf32>
    %c0_246 = arith.constant 0 : index
    %c0_247 = arith.constant 0 : index
    %c0_248 = arith.constant 0 : index
    %264 = vector.load %arg11[%c0_246, %c0_247, %c0_248] : memref<1x4x128xf32, #tpu.memory_space<vmem>>, vector<1x4x128xf32>
    %265 = vector.shape_cast %264 : vector<1x4x128xf32> to vector<4x128xf32>
    %266 = vector.shape_cast %263 : vector<4x128xf32> to vector<1x4x128xf32>
    tpu.vector_store %arg11[%c0_246, %c0_247, %c0_248], %266 {strides = array<i32>} : memref<1x4x128xf32, #tpu.memory_space<vmem>>, vector<1x4x128xf32>,
    return
  }
  func.func @transform_0(%arg0: i32) -> (i32, i32, i32) {
    %c0_i32 = arith.constant 0 : i32
    %c0_i32_0 = arith.constant 0 : i32
    %c0_i32_1 = arith.constant 0 : i32
    return %arg0, %c0_i32, %c0_i32_0 : i32, i32, i32
  }
  func.func @transform_1(%arg0: i32) -> (i32, i32) {
    %c0_i32 = arith.constant 0 : i32
    %c0_i32_0 = arith.constant 0 : i32
    %c0_i32_1 = arith.constant 0 : i32
    return %c0_i32, %c0_i32_0 : i32, i32
  }
  func.func @transform_2(%arg0: i32) -> (i32, i32) {
    %c0_i32 = arith.constant 0 : i32
    %c0_i32_0 = arith.constant 0 : i32
    %c0_i32_1 = arith.constant 0 : i32
    return %c0_i32, %c0_i32_0 : i32, i32
  }
  func.func @transform_3(%arg0: i32) -> (i32, i32) {
    %c0_i32 = arith.constant 0 : i32
    %c0_i32_0 = arith.constant 0 : i32
    %c0_i32_1 = arith.constant 0 : i32
    return %c0_i32, %c0_i32_0 : i32, i32
  }
  func.func @transform_4(%arg0: i32) -> (i32, i32) {
    %c0_i32 = arith.constant 0 : i32
    %c0_i32_0 = arith.constant 0 : i32
    %c0_i32_1 = arith.constant 0 : i32
    return %c0_i32, %c0_i32_0 : i32, i32
  }
  func.func @transform_5(%arg0: i32) -> (i32, i32) {
    %c0_i32 = arith.constant 0 : i32
    %c0_i32_0 = arith.constant 0 : i32
    %c0_i32_1 = arith.constant 0 : i32
    return %c0_i32, %c0_i32_0 : i32, i32
  }
  func.func @transform_6(%arg0: i32) -> (i32, i32) {
    %c0_i32 = arith.constant 0 : i32
    %c0_i32_0 = arith.constant 0 : i32
    %c0_i32_1 = arith.constant 0 : i32
    return %c0_i32, %c0_i32_0 : i32, i32
  }
  func.func @transform_7(%arg0: i32) -> (i32, i32) {
    %c0_i32 = arith.constant 0 : i32
    %c0_i32_0 = arith.constant 0 : i32
    %c0_i32_1 = arith.constant 0 : i32
    return %c0_i32, %c0_i32_0 : i32, i32
  }
  func.func @transform_8(%arg0: i32) -> (i32, i32) {
    %c0_i32 = arith.constant 0 : i32
    %c0_i32_0 = arith.constant 0 : i32
    %c0_i32_1 = arith.constant 0 : i32
    return %c0_i32, %c0_i32_0 : i32, i32
  }
  func.func @transform_9(%arg0: i32) -> (i32, i32) {
    %c0_i32 = arith.constant 0 : i32
    %c0_i32_0 = arith.constant 0 : i32
    %c0_i32_1 = arith.constant 0 : i32
    return %c0_i32, %c0_i32_0 : i32, i32
  }
  func.func @transform_10(%arg0: i32) -> (i32, i32, i32) {
    %c0_i32 = arith.constant 0 : i32
    %c0_i32_0 = arith.constant 0 : i32
    %c0_i32_1 = arith.constant 0 : i32
    return %arg0, %c0_i32, %c0_i32_0 : i32, i32, i32
  }
}

</mosaic_0001>

<llo_original>
// kernel: tile.9
$region0: #{tile.9}
  %s0 = inlined_call_operand.vmem [shape: bf16[9,2,64], index: 0, kind: input, shape index: {}]
  %s1 = inlined_call_operand.vmem [shape: bf16[9,128], index: 1, kind: output, shape index: {}]
  $region1: #{tile.9} parent=0
    #allocation0 [shape = 'u8[8192]{0}', space=vmem, size = 0x2000, scoped, tag = 'scoped mem for output reshape']
    #allocation1 [shape = 'u8[36864]{0}', space=vmem, size = 0x9000, scoped, tag = 'scoped mem for input reshape']
    %s3 = smul.u32 1, 2
    %s4 = sshllo.u32 0, %s3
    %s5 = smul.addr 1, 8
    %s6 = scalar_lea.vmem %s0, %s5
    %s7 = sshrl.u32 %s4, 1
    %s8 = sor.u32 %s4, %s7
    %s9 = sand.u32 %s8, 85
    %s10 = sshrl.u32 %s9, 1
    %s11 = sor.u32 %s9, %s10
    %s12 = sand.u32 51, %s11
    %s13 = sshrl.u32 %s12, 2
    %s14 = sor.u32 %s12, %s13
    %s15 = sand.u32 15, %s14
    %v16 = vld [vmem:[%s6] sm:%s15]
    %v17 = vunpack.c.l.bf16 %v16
    %v18 = vunpack.c.h.bf16 %v16
    %s19 = scalar_lea.vmem [#allocation1], 64
    %20 = vst [vmem:[%s19] sm:%s4] %v17
    %s21 = smul.addr 1, 7
    %s22 = scalar_lea.vmem %s0, %s21
    %s23 = sshrl.u32 %s4, 1
    %s24 = sor.u32 %s4, %s23
    %s25 = sand.u32 %s24, 85
    %s26 = sshrl.u32 %s25, 1
    %s27 = sor.u32 %s25, %s26
    %s28 = sand.u32 51, %s27
    %s29 = sshrl.u32 %s28, 2
    %s30 = sor.u32 %s28, %s29
    %s31 = sand.u32 15, %s30
    %v32 = vld [vmem:[%s22] sm:%s31]
    %v33 = vunpack.c.l.bf16 %v32
    %v34 = vunpack.c.h.bf16 %v32
    %s35 = scalar_lea.vmem [#allocation1], 56
    %36 = vst [vmem:[%s35] sm:%s4] %v33
    %s37 = smul.addr 1, 6
    %s38 = scalar_lea.vmem %s0, %s37
    %s39 = sshrl.u32 %s4, 1
    %s40 = sor.u32 %s4, %s39
    %s41 = sand.u32 %s40, 85
    %s42 = sshrl.u32 %s41, 1
    %s43 = sor.u32 %s41, %s42
    %s44 = sand.u32 51, %s43
    %s45 = sshrl.u32 %s44, 2
    %s46 = sor.u32 %s44, %s45
    %s47 = sand.u32 15, %s46
    %v48 = vld [vmem:[%s38] sm:%s47]
    %v49 = vunpack.c.l.bf16 %v48
    %v50 = vunpack.c.h.bf16 %v48
    %s51 = scalar_lea.vmem [#allocation1], 48
    %52 = vst [vmem:[%s51] sm:%s4] %v49
    %s53 = smul.addr 1, 5
    %s54 = scalar_lea.vmem %s0, %s53
    %s55 = sshrl.u32 %s4, 1
    %s56 = sor.u32 %s4, %s55
    %s57 = sand.u32 %s56, 85
    %s58 = sshrl.u32 %s57, 1
    %s59 = sor.u32 %s57, %s58
    %s60 = sand.u32 51, %s59
    %s61 = sshrl.u32 %s60, 2
    %s62 = sor.u32 %s60, %s61
    %s63 = sand.u32 15, %s62
    %v64 = vld [vmem:[%s54] sm:%s63]
    %v65 = vunpack.c.l.bf16 %v64
    %v66 = vunpack.c.h.bf16 %v64
    %s67 = scalar_lea.vmem [#allocation1], 40
    %68 = vst [vmem:[%s67] sm:%s4] %v65
    %s69 = smul.addr 1, 4
    %s70 = scalar_lea.vmem %s0, %s69
    %s71 = sshrl.u32 %s4, 1
    %s72 = sor.u32 %s4, %s71
    %s73 = sand.u32 %s72, 85
    %s74 = sshrl.u32 %s73, 1
    %s75 = sor.u32 %s73, %s74
    %s76 = sand.u32 51, %s75
    %s77 = sshrl.u32 %s76, 2
    %s78 = sor.u32 %s76, %s77
    %s79 = sand.u32 15, %s78
    %v80 = vld [vmem:[%s70] sm:%s79]
    %v81 = vunpack.c.l.bf16 %v80
    %v82 = vunpack.c.h.bf16 %v80
    %s83 = scalar_lea.vmem [#allocation1], 32
    %84 = vst [vmem:[%s83] sm:%s4] %v81
    %s85 = smul.addr 1, 3
    %s86 = scalar_lea.vmem %s0, %s85
    %s87 = sshrl.u32 %s4, 1
    %s88 = sor.u32 %s4, %s87
    %s89 = sand.u32 %s88, 85
    %s90 = sshrl.u32 %s89, 1
    %s91 = sor.u32 %s89, %s90
    %s92 = sand.u32 51, %s91
    %s93 = sshrl.u32 %s92, 2
    %s94 = sor.u32 %s92, %s93
    %s95 = sand.u32 15, %s94
    %v96 = vld [vmem:[%s86] sm:%s95]
    %v97 = vunpack.c.l.bf16 %v96
    %v98 = vunpack.c.h.bf16 %v96
    %s99 = scalar_lea.vmem [#allocation1], 24
    %100 = vst [vmem:[%s99] sm:%s4] %v97
    %s101 = smul.addr 1, 2
    %s102 = scalar_lea.vmem %s0, %s101
    %s103 = sshrl.u32 %s4, 1
    %s104 = sor.u32 %s4, %s103
    %s105 = sand.u32 %s104, 85
    %s106 = sshrl.u32 %s105, 1
    %s107 = sor.u32 %s105, %s106
    %s108 = sand.u32 51, %s107
    %s109 = sshrl.u32 %s108, 2
    %s110 = sor.u32 %s108, %s109
    %s111 = sand.u32 15, %s110
    %v112 = vld [vmem:[%s102] sm:%s111]
    %v113 = vunpack.c.l.bf16 %v112
    %v114 = vunpack.c.h.bf16 %v112
    %s115 = scalar_lea.vmem [#allocation1], 16
    %116 = vst [vmem:[%s115] sm:%s4] %v113
    %s117 = scalar_lea.vmem %s0, 1
    %s118 = sshrl.u32 %s4, 1
    %s119 = sor.u32 %s4, %s118
    %s120 = sand.u32 %s119, 85
    %s121 = sshrl.u32 %s120, 1
    %s122 = sor.u32 %s120, %s121
    %s123 = sand.u32 51, %s122
    %s124 = sshrl.u32 %s123, 2
    %s125 = sor.u32 %s123, %s124
    %s126 = sand.u32 15, %s125
    %v127 = vld [vmem:[%s117] sm:%s126]
    %v128 = vunpack.c.l.bf16 %v127
    %v129 = vunpack.c.h.bf16 %v127
    %s130 = scalar_lea.vmem [#allocation1], 8
    %131 = vst [vmem:[%s130] sm:%s4] %v128
    %s132 = sshrl.u32 %s4, 1
    %s133 = sor.u32 %s4, %s132
    %s134 = sand.u32 %s133, 85
    %s135 = sshrl.u32 %s134, 1
    %s136 = sor.u32 %s134, %s135
    %s137 = sand.u32 51, %s136
    %s138 = sshrl.u32 %s137, 2
    %s139 = sor.u32 %s137, %s138
    %s140 = sand.u32 15, %s139
    %v141 = vld [vmem:[%s0] sm:%s140]
    %v142 = vunpack.c.l.bf16 %v141
    %v143 = vunpack.c.h.bf16 %v141
    %144 = vst [vmem:[#allocation1] sm:%s4] %v142
    %v145 = vld [vmem:[#allocation1] ss:$8 sm:$0xf]
    %v146 = vld [vmem:[#allocation1] ss:$8 sm:$0xf0]
    %vm147 = vcmask 1047556
    %v148 = vsel %vm147, %v146, %v145
    %vm149 = vcmask 523264
    %150 = vst.msk [vmem:[#allocation0] sm:$0xff] %vm149, %v148
    %s151 = scalar_lea.vmem [#allocation1], 64
    %v152 = vld [vmem:[%s151] sm:$0x1]
    %vm153 = vcmask 523264
    %s154 = scalar_lea.vmem [#allocation0], 8
    %155 = vst.msk [vmem:[%s154] sm:$0x1] %vm153, %v152
    %s156 = scalar_lea.vmem [#allocation1], 1
    %v157 = vld [vmem:[%s156] ss:$8 sm:$0xf]
    %s158 = scalar_lea.vmem [#allocation1], 1
    %v159 = vld [vmem:[%s158] ss:$8 sm:$0xf0]
    %vm160 = vcmask 1047556
    %v161 = vsel %vm160, %v159, %v157
    %162 = vrot.lane.b32.xlu0 %v161, 64
    %v163 = vpop.permute.xlu0 %162
    %vm164 = vcmask 1048064
    %165 = vst.msk [vmem:[#allocation0] sm:$0xff] %vm164, %v163
    %s166 = scalar_lea.vmem [#allocation1], 65
    %v167 = vld [vmem:[%s166] sm:$0x1]
    %168 = vrot.lane.b32.xlu0 %v167, 64
    %v169 = vpop.permute.xlu0 %168
    %vm170 = vcmask 1048064
    %s171 = scalar_lea.vmem [#allocation0], 8
    %172 = vst.msk [vmem:[%s171] sm:$0x1] %vm170, %v169
    %s174 = smul.u32 4, 2
    %s175 = sshllo.u32 0, %s174
    %s176 = sshrl.u32 %s174, 1
    %v177 = vld [vmem:[#allocation0] sm:%s175]
    %v178 = vpack.c.bf16 0.0, %v177
    %s179 = sshllo.u32 0, %s176
    %180 = vst [vmem:[%s1] sm:%s179] %v178
    %s181 = scalar_lea.vmem [#allocation0], 8
    %v182 = vld [vmem:[%s181] sm:%s175]
    %v183 = vpack.c.bf16 0.0, %v182
    %s184 = sshllo.u32 0, %s176
    %s185 = scalar_lea.vmem %s1, 4
    %186 = vst [vmem:[%s185] sm:%s184] %v183

// kernel: resnet_block_forward.1
$region0: #{resnet_block_forward.1}
  #allocation0 [shape = 'u32[]', space=smem, size = 0x4, offset = 0x4, fixed_abs, tag = 'smem constant byte address 0x4 - core index']
  #allocation1 [shape = 'u32[144,128]{1,0:T(1,128)}', space=vmem, size = 0x12000, scoped, tag = 'internal scratch']
  #allocation2 [shape = 'bf16[16,146]{1,0:T(16,128)(2,1)}', space=vmem, size = 0x2000, scoped, tag = 'scratch operand']
  %s0 = inlined_call_operand.vmem [shape: bf16[1,16,128], index: 0, kind: input, shape index: {}]
  %s1 = inlined_call_operand.vmem [shape: bf16[9,128], index: 1, kind: input, shape index: {}]
  %s2 = inlined_call_operand.vmem [shape: bf16[4,36], index: 2, kind: input, shape index: {}]
  %s3 = inlined_call_operand.vmem [shape: f32[4,1], index: 3, kind: input, shape index: {}]
  %s4 = inlined_call_operand.vmem [shape: bf16[4,36], index: 4, kind: input, shape index: {}]
  %s5 = inlined_call_operand.vmem [shape: f32[4,1], index: 5, kind: input, shape index: {}]
  %s6 = inlined_call_operand.vmem [shape: bf16[8,36], index: 6, kind: input, shape index: {}]
  %s7 = inlined_call_operand.vmem [shape: f32[8,1], index: 7, kind: input, shape index: {}]
  %s8 = inlined_call_operand.vmem [shape: bf16[4,36], index: 8, kind: input, shape index: {}]
  %s9 = inlined_call_operand.vmem [shape: f32[4,1], index: 9, kind: input, shape index: {}]
  %s10 = inlined_call_operand.vmem [shape: f32[1,4,128], index: 10, kind: output, shape index: {}]
  %s11 = sld [smem:[#allocation0]]
  $region50: #{resnet_block_forward.1} parent=0
    _
  %s13 = ssub.s32 1, %s11
  %s14 = scalar_select 0, %s13, %s11
  // Predicated region
  $region2: #{resnet_block_forward.1} parent=0 // pred_check
    _
  $region3: #{resnet_block_forward.1} parent=0 // pred_check_branch
    %16 = sbr.rel (0) target = $region5
  $region4: #{resnet_block_forward.1} parent=0 // pred_region
    _
  $region5: #{resnet_block_forward.1} parent=0 // pred_fallthru
    _
  // Predicated region
  $region6: #{resnet_block_forward.1} parent=0 // pred_check
    _
  $region7: #{resnet_block_forward.1} parent=0 // pred_check_branch
    %18 = sbr.rel (0) target = $region9
  $region8: #{resnet_block_forward.1} parent=0 // pred_region
    _
  $region9: #{resnet_block_forward.1} parent=0 // pred_fallthru
    _
  // Predicated region
  $region10: #{resnet_block_forward.1} parent=0 // pred_check
    _
  $region11: #{resnet_block_forward.1} parent=0 // pred_check_branch
    %20 = sbr.rel (0) target = $region13
  $region12: #{resnet_block_forward.1} parent=0 // pred_region
    _
  $region13: #{resnet_block_forward.1} parent=0 // pred_fallthru
    _
  // Predicated region
  $region14: #{resnet_block_forward.1} parent=0 // pred_check
    _
  $region15: #{resnet_block_forward.1} parent=0 // pred_check_branch
    %22 = sbr.rel (0) target = $region17
  $region16: #{resnet_block_forward.1} parent=0 // pred_region
    _
  $region17: #{resnet_block_forward.1} parent=0 // pred_fallthru
    _
  // Predicated region
  $region18: #{resnet_block_forward.1} parent=0 // pred_check
    _
  $region19: #{resnet_block_forward.1} parent=0 // pred_check_branch
    %24 = sbr.rel (0) target = $region21
  $region20: #{resnet_block_forward.1} parent=0 // pred_region
    _
  $region21: #{resnet_block_forward.1} parent=0 // pred_fallthru
    _
  // Predicated region
  $region22: #{resnet_block_forward.1} parent=0 // pred_check
    _
  $region23: #{resnet_block_forward.1} parent=0 // pred_check_branch
    %26 = sbr.rel (0) target = $region25
  $region24: #{resnet_block_forward.1} parent=0 // pred_region
    _
  $region25: #{resnet_block_forward.1} parent=0 // pred_fallthru
    _
  // Predicated region
  $region26: #{resnet_block_forward.1} parent=0 // pred_check
    _
  $region27: #{resnet_block_forward.1} parent=0 // pred_check_branch
    %28 = sbr.rel (0) target = $region29
  $region28: #{resnet_block_forward.1} parent=0 // pred_region
    _
  $region29: #{resnet_block_forward.1} parent=0 // pred_fallthru
    _
  // Predicated region
  $region30: #{resnet_block_forward.1} parent=0 // pred_check
    _
  $region31: #{resnet_block_forward.1} parent=0 // pred_check_branch
    %30 = sbr.rel (0) target = $region33
  $region32: #{resnet_block_forward.1} parent=0 // pred_region
    _
  $region33: #{resnet_block_forward.1} parent=0 // pred_fallthru
    _
  // Predicated region
  $region34: #{resnet_block_forward.1} parent=0 // pred_check
    _
  $region35: #{resnet_block_forward.1} parent=0 // pred_check_branch
    %32 = sbr.rel (0) target = $region37
  $region36: #{resnet_block_forward.1} parent=0 // pred_region
    _
  $region37: #{resnet_block_forward.1} parent=0 // pred_fallthru
    _
  // Predicated region
  $region38: #{resnet_block_forward.1} parent=0 // pred_check
    _
  $region39: #{resnet_block_forward.1} parent=0 // pred_check_branch
    %34 = sbr.rel (0) target = $region41
  $region40: #{resnet_block_forward.1} parent=0 // pred_region
    _
  $region41: #{resnet_block_forward.1} parent=0 // pred_fallthru
    _
  %vm36 = vcmask 72704
  %37 = vst.msk [vmem:[#allocation2] sm:$0xff] %vm36, 0
  %vm38 = vcmask 146504
  %39 = vst.msk [vmem:[#allocation2 + $0x8] sm:$0xff] %vm38, 0
  %v40 = vld [vmem:[%s0] sm:$0xf]
  %v41 = vld [vmem:[%s0 + $0x4] sm:$0xf]
  %v44 = vunpack.c.l.b16 %v40
  %v45 = vunpack.c.l.b16 %v41
  %v46 = vpack.c.b16 %v45, %v44
  %47 = vrot.lane.b32.xlu0 %v46, 9
  %v48 = vpop.permute.xlu0 %47
  %vm50 = vcmask 1047624
  %51 = vst.msk [vmem:[#allocation2] sm:$0xff] %vm50, %v48
  %52 = vst.msk [vmem:[#allocation2 + $0x8] sm:$0xff] %vm36, %v48
  %v53 = vld [vmem:[#allocation2] sm:$0xc0]
  %v54 = vld [vmem:[%s1] sm:$0x1]
  %v56 = vpack.i.b16 %v54, %v54
  %v58 = vlaneseq
  %v59 = vshrl.u32 %v58, 7
  %v60 = vsub.s32 0, %v59
  %v61 = vrot.slane %v56, %v60
  %v62 = vmul.bf16 %v53, %v61
  %v63 = vld [vmem:[%s2] sm:$0x3]
  %v64 = vld [vmem:[#allocation2] sm:$0x30]
  %v65 = vld [vmem:[#allocation2 + $0x8] sm:$0x30]
  %v66 = vshrl.u32 %v54, 16
  %v67 = vpack.i.b16 %v66, %v66
  %v69 = vlaneseq
  %v70 = vshrl.u32 %v69, 7
  %v71 = vsub.s32 0, %v70
  %v72 = vrot.slane %v67, %v71
  %74 = vrot.lane.b32.xlu0 %v72, 1
  %v75 = vpop.permute.xlu0 %74
  %v77 = vmul.bf16 %v64, %v75
  %v78 = vmul.bf16 %v65, %v75
  %v81 = vunpack.c.l.s4 1983009808
  %v82 = vunpack.c.0.s8 %v81
  %v83 = vlaneseq
  %v84 = vshrl.u32 %v83, 7
  %v85 = vsub.s32 %v82, %v84
  %v86 = vrot.slane %v63, %v85
  %87 = vrot.lane.b32.xlu0 %v86, 124
  %v88 = vpop.permute.xlu0 %87
  %v91 = vrot.slane %v77, 4
  %v92 = vrot.slane %v78, 4
  %93 = vrot.lane.b32.xlu0 %v91, 127
  %v94 = vpop.permute.xlu0 %93
  %95 = vrot.lane.b32.xlu0 %v92, 127
  %v96 = vpop.permute.xlu0 %95
  %vm97 = vcmask 1039360
  %v98 = vsel %vm97, %v94, %v96
  %vm99 = vcmask 31744
  %v101 = vsel %vm99, %v88, 0
  %vm103 = vcmask 1041408
  %v105 = vsel %vm103, %v98, 0
  %107 = vmatprep.subr.bf16.mxu0 0
  %108 = vmatpush1.bf16.msra.mxu0 %v105
  %109 = vmatprep.subr.bf16.mxu0 0
  %110 = vmatpush1.bf16.msra.mxu0 0
  %111 = vmatprep.subr.bf16.mxu0 0
  %112 = vmatpush1.bf16.msra.mxu0 0
  %113 = vmatprep.subr.bf16.mxu0 0
  %114 = vmatpush1.bf16.msra.mxu0 0
  %115 = vmatprep.subr.bf16.mxu0 0
  %116 = vmatpush1.bf16.msra.mxu0 0
  %117 = vmatprep.subr.bf16.mxu0 0
  %118 = vmatpush1.bf16.msra.mxu0 0
  %119 = vmatprep.subr.bf16.mxu0 0
  %120 = vmatpush1.bf16.msra.mxu0 0
  %121 = vmatprep.subr.bf16.mxu0 0
  %122 = vmatpush1.bf16.msra.mxu0 0
  %123 = vmatprep.subr.bf16.mxu0 0
  %124 = vmatpush1.bf16.msra.mxu0 0
  %125 = vmatprep.subr.bf16.mxu0 0
  %126 = vmatpush1.bf16.msra.mxu0 0
  %127 = vmatprep.subr.bf16.mxu0 0
  %128 = vmatpush1.bf16.msra.mxu0 0
  %129 = vmatprep.subr.bf16.mxu0 0
  %130 = vmatpush1.bf16.msra.mxu0 0
  %131 = vmatprep.subr.bf16.mxu0 0
  %132 = vmatpush1.bf16.msra.mxu0 0
  %133 = vmatprep.subr.bf16.mxu0 0
  %134 = vmatpush1.bf16.msra.mxu0 0
  %135 = vmatprep.subr.bf16.mxu0 0
  %136 = vmatpush1.bf16.msra.mxu0 0
  %137 = vmatprep.subr.bf16.mxu0 0
  %138 = vmatpush1.bf16.msra.mxu0 0
  %139 = vmatprep.mubr.bf16.mxu0 0
  %140 = vmatmul.mubr.bf16.gmra.mrb[0].mxu0 %v101
  %v141 = vpop.f32.mrb[0].mxu0
  %v142 = vadd.f32 0.0, %v141
  %v143 = vpop.f32.mrb[0].mxu0
  %v144 = vpop.f32.mrb[0].mxu0
  %v145 = vpop.f32.mrb[0].mxu0
  %146 = vdwg.mxu0
  %v148 = vrot.slane %v62, 6
  %v150 = vsel %vm99, %v63, 0
  %v153 = vsel %vm103, %v148, 0
  %155 = vmatprep.subr.bf16.mxu0 0
  %156 = vmatpush1.bf16.msra.mxu0 %v153
  %157 = vmatprep.subr.bf16.mxu0 0
  %158 = vmatpush1.bf16.msra.mxu0 0
  %159 = vmatprep.subr.bf16.mxu0 0
  %160 = vmatpush1.bf16.msra.mxu0 0
  %161 = vmatprep.subr.bf16.mxu0 0
  %162 = vmatpush1.bf16.msra.mxu0 0
  %163 = vmatprep.subr.bf16.mxu0 0
  %164 = vmatpush1.bf16.msra.mxu0 0
  %165 = vmatprep.subr.bf16.mxu0 0
  %166 = vmatpush1.bf16.msra.mxu0 0
  %167 = vmatprep.subr.bf16.mxu0 0
  %168 = vmatpush1.bf16.msra.mxu0 0
  %169 = vmatprep.subr.bf16.mxu0 0
  %170 = vmatpush1.bf16.msra.mxu0 0
  %171 = vmatprep.subr.bf16.mxu0 0
  %172 = vmatpush1.bf16.msra.mxu0 0
  %173 = vmatprep.subr.bf16.mxu0 0
  %174 = vmatpush1.bf16.msra.mxu0 0
  %175 = vmatprep.subr.bf16.mxu0 0
  %176 = vmatpush1.bf16.msra.mxu0 0
  %177 = vmatprep.subr.bf16.mxu0 0
  %178 = vmatpush1.bf16.msra.mxu0 0
  %179 = vmatprep.subr.bf16.mxu0 0
  %180 = vmatpush1.bf16.msra.mxu0 0
  %181 = vmatprep.subr.bf16.mxu0 0
  %182 = vmatpush1.bf16.msra.mxu0 0
  %183 = vmatprep.subr.bf16.mxu0 0
  %184 = vmatpush1.bf16.msra.mxu0 0
  %185 = vmatprep.subr.bf16.mxu0 0
  %186 = vmatpush1.bf16.msra.mxu0 0
  %187 = vmatprep.mubr.bf16.mxu0 0
  %188 = vmatmul.mubr.bf16.gmra.mrb[0].mxu0 %v150
  %v189 = vpop.f32.mrb[0].mxu0
  %v190 = vadd.f32 %v142, %v189
  %v191 = vpop.f32.mrb[0].mxu0
  %v192 = vpop.f32.mrb[0].mxu0
  %v193 = vpop.f32.mrb[0].mxu0
  %194 = vdwg.mxu0
  %v195 = vld [vmem:[#allocation2] sm:$0xc0]
  %v196 = vld [vmem:[#allocation2 + $0x8] sm:$0xc0]
  %v197 = vmul.bf16 %v195, %v75
  %v198 = vmul.bf16 %v196, %v75
  %v199 = vld [vmem:[%s2] sm:$0x3]
  %v202 = vunpack.c.l.s4 1983009808
  %v203 = vunpack.c.0.s8 %v202
  %v204 = vlaneseq
  %v205 = vshrl.u32 %v204, 7
  %v206 = vsub.s32 %v203, %v205
  %v207 = vrot.slane %v199, %v206
  %208 = vrot.lane.b32.xlu0 %v207, 120
  %v209 = vpop.permute.xlu0 %208
  %v212 = vrot.slane %v197, 6
  %v213 = vrot.slane %v198, 6
  %214 = vrot.lane.b32.xlu0 %v212, 127
  %v215 = vpop.permute.xlu0 %214
  %216 = vrot.lane.b32.xlu0 %v213, 127
  %v217 = vpop.permute.xlu0 %216
  %v218 = vsel %vm97, %v215, %v217
  %v220 = vsel %vm99, %v209, 0
  %v223 = vsel %vm103, %v218, 0
  %225 = vmatprep.subr.bf16.mxu0 0
  %226 = vmatpush1.bf16.msra.mxu0 %v223
  %227 = vmatprep.subr.bf16.mxu0 0
  %228 = vmatpush1.bf16.msra.mxu0 0
  %229 = vmatprep.subr.bf16.mxu0 0
  %230 = vmatpush1.bf16.msra.mxu0 0
  %231 = vmatprep.subr.bf16.mxu0 0
  %232 = vmatpush1.bf16.msra.mxu0 0
  %233 = vmatprep.subr.bf16.mxu0 0
  %234 = vmatpush1.bf16.msra.mxu0 0
  %235 = vmatprep.subr.bf16.mxu0 0
  %236 = vmatpush1.bf16.msra.mxu0 0
  %237 = vmatprep.subr.bf16.mxu0 0
  %238 = vmatpush1.bf16.msra.mxu0 0
  %239 = vmatprep.subr.bf16.mxu0 0
  %240 = vmatpush1.bf16.msra.mxu0 0
  %241 = vmatprep.subr.bf16.mxu0 0
  %242 = vmatpush1.bf16.msra.mxu0 0
  %243 = vmatprep.subr.bf16.mxu0 0
  %244 = vmatpush1.bf16.msra.mxu0 0
  %245 = vmatprep.subr.bf16.mxu0 0
  %246 = vmatpush1.bf16.msra.mxu0 0
  %247 = vmatprep.subr.bf16.mxu0 0
  %248 = vmatpush1.bf16.msra.mxu0 0
  %249 = vmatprep.subr.bf16.mxu0 0
  %250 = vmatpush1.bf16.msra.mxu0 0
  %251 = vmatprep.subr.bf16.mxu0 0
  %252 = vmatpush1.bf16.msra.mxu0 0
  %253 = vmatprep.subr.bf16.mxu0 0
  %254 = vmatpush1.bf16.msra.mxu0 0
  %255 = vmatprep.subr.bf16.mxu0 0
  %256 = vmatpush1.bf16.msra.mxu0 0
  %257 = vmatprep.mubr.bf16.mxu0 0
  %258 = vmatmul.mubr.bf16.gmra.mrb[0].mxu0 %v220
  %v259 = vpop.f32.mrb[0].mxu0
  %v260 = vadd.f32 0.0, %v259
  %v261 = vpop.f32.mrb[0].mxu0
  %v262 = vpop.f32.mrb[0].mxu0
  %v263 = vpop.f32.mrb[0].mxu0
  %264 = vdwg.mxu0
  %v265 = vadd.f32 %v190, %v260
  %v266 = vld [vmem:[#allocation2] sm:$0xc]
  %v267 = vld [vmem:[#allocation2 + $0x8] sm:$0xc]
  %v268 = vld [vmem:[%s1] sm:$0x2]
  %v270 = vshrl.u32 %v268, 16
  %v271 = vpack.i.b16 %v270, %v270
  %v273 = vlaneseq
  %v274 = vshrl.u32 %v273, 7
  %v275 = vsub.s32 1, %v274
  %v276 = vrot.slane %v271, %v275
  %278 = vrot.lane.b32.xlu0 %v276, 8
  %v279 = vpop.permute.xlu0 %278
  %v281 = vmul.bf16 %v266, %v279
  %v282 = vmul.bf16 %v267, %v279
  %v283 = vld [vmem:[%s2] sm:$0x3]
  %v286 = vunpack.c.l.s4 1983009808
  %v287 = vunpack.c.0.s8 %v286
  %v288 = vlaneseq
  %v289 = vshrl.u32 %v288, 7
  %v290 = vsub.s32 %v287, %v289
  %v291 = vrot.slane %v283, %v290
  %292 = vrot.lane.b32.xlu0 %v291, 116
  %v293 = vpop.permute.xlu0 %292
  %v296 = vrot.slane %v281, 2
  %v297 = vrot.slane %v282, 2
  %298 = vrot.lane.b32.xlu0 %v296, 120
  %v299 = vpop.permute.xlu0 %298
  %300 = vrot.lane.b32.xlu0 %v297, 120
  %v301 = vpop.permute.xlu0 %300
  %vm302 = vcmask 982016
  %v303 = vsel %vm302, %v299, %v301
  %v305 = vsel %vm99, %v293, 0
  %v308 = vsel %vm103, %v303, 0
  %310 = vmatprep.subr.bf16.mxu0 0
  %311 = vmatpush1.bf16.msra.mxu0 %v308
  %312 = vmatprep.subr.bf16.mxu0 0
  %313 = vmatpush1.bf16.msra.mxu0 0
  %314 = vmatprep.subr.bf16.mxu0 0
  %315 = vmatpush1.bf16.msra.mxu0 0
  %316 = vmatprep.subr.bf16.mxu0 0
  %317 = vmatpush1.bf16.msra.mxu0 0
  %318 = vmatprep.subr.bf16.mxu0 0
  %319 = vmatpush1.bf16.msra.mxu0 0
  %320 = vmatprep.subr.bf16.mxu0 0
  %321 = vmatpush1.bf16.msra.mxu0 0
  %322 = vmatprep.subr.bf16.mxu0 0
  %323 = vmatpush1.bf16.msra.mxu0 0
  %324 = vmatprep.subr.bf16.mxu0 0
  %325 = vmatpush1.bf16.msra.mxu0 0
  %326 = vmatprep.subr.bf16.mxu0 0
  %327 = vmatpush1.bf16.msra.mxu0 0
  %328 = vmatprep.subr.bf16.mxu0 0
  %329 = vmatpush1.bf16.msra.mxu0 0
  %330 = vmatprep.subr.bf16.mxu0 0
  %331 = vmatpush1.bf16.msra.mxu0 0
  %332 = vmatprep.subr.bf16.mxu0 0
  %333 = vmatpush1.bf16.msra.mxu0 0
  %334 = vmatprep.subr.bf16.mxu0 0
  %335 = vmatpush1.bf16.msra.mxu0 0
  %336 = vmatprep.subr.bf16.mxu0 0
  %337 = vmatpush1.bf16.msra.mxu0 0
  %338 = vmatprep.subr.bf16.mxu0 0
  %339 = vmatpush1.bf16.msra.mxu0 0
  %340 = vmatprep.subr.bf16.mxu0 0
  %341 = vmatpush1.bf16.msra.mxu0 0
  %342 = vmatprep.mubr.bf16.mxu0 0
  %343 = vmatmul.mubr.bf16.gmra.mrb[0].mxu0 %v305
  %v344 = vpop.f32.mrb[0].mxu0
  %v345 = vadd.f32 0.0, %v344
  %v346 = vpop.f32.mrb[0].mxu0
  %v347 = vpop.f32.mrb[0].mxu0
  %v348 = vpop.f32.mrb[0].mxu0
  %349 = vdwg.mxu0
  %v350 = vadd.f32 %v265, %v345
  %v351 = vld [vmem:[#allocation2] sm:$0x3]
  %v352 = vld [vmem:[#allocation2 + $0x8] sm:$0x3]
  %v353 = vld [vmem:[%s2] sm:$0x3]
  %v356 = vunpack.c.l.s4 1983009808
  %v357 = vunpack.c.0.s8 %v356
  %v358 = vlaneseq
  %v359 = vshrl.u32 %v358, 7
  %v360 = vsub.s32 %v357, %v359
  %v361 = vrot.slane %v353, %v360
  %362 = vrot.lane.b32.xlu0 %v361, 112
  %v363 = vpop.permute.xlu0 %362
  %366 = vrot.lane.b32.xlu0 %v351, 119
  %v367 = vpop.permute.xlu0 %366
  %368 = vrot.lane.b32.xlu0 %v352, 119
  %v369 = vpop.permute.xlu0 %368
  %vm370 = vcmask 973824
  %v371 = vsel %vm370, %v367, %v369
  %v373 = vsel %vm99, %v363, 0
  %v376 = vsel %vm103, %v371, 0
  %378 = vmatprep.subr.bf16.mxu0 0
  %379 = vmatpush1.bf16.msra.mxu0 %v376
  %380 = vmatprep.subr.bf16.mxu0 0
  %381 = vmatpush1.bf16.msra.mxu0 0
  %382 = vmatprep.subr.bf16.mxu0 0
  %383 = vmatpush1.bf16.msra.mxu0 0
  %384 = vmatprep.subr.bf16.mxu0 0
  %385 = vmatpush1.bf16.msra.mxu0 0
  %386 = vmatprep.subr.bf16.mxu0 0
  %387 = vmatpush1.bf16.msra.mxu0 0
  %388 = vmatprep.subr.bf16.mxu0 0
  %389 = vmatpush1.bf16.msra.mxu0 0
  %390 = vmatprep.subr.bf16.mxu0 0
  %391 = vmatpush1.bf16.msra.mxu0 0
  %392 = vmatprep.subr.bf16.mxu0 0
  %393 = vmatpush1.bf16.msra.mxu0 0
  %394 = vmatprep.subr.bf16.mxu0 0
  %395 = vmatpush1.bf16.msra.mxu0 0
  %396 = vmatprep.subr.bf16.mxu0 0
  %397 = vmatpush1.bf16.msra.mxu0 0
  %398 = vmatprep.subr.bf16.mxu0 0
  %399 = vmatpush1.bf16.msra.mxu0 0
  %400 = vmatprep.subr.bf16.mxu0 0
  %401 = vmatpush1.bf16.msra.mxu0 0
  %402 = vmatprep.subr.bf16.mxu0 0
  %403 = vmatpush1.bf16.msra.mxu0 0
  %404 = vmatprep.subr.bf16.mxu0 0
  %405 = vmatpush1.bf16.msra.mxu0 0
  %406 = vmatprep.subr.bf16.mxu0 0
  %407 = vmatpush1.bf16.msra.mxu0 0
  %408 = vmatprep.subr.bf16.mxu0 0
  %409 = vmatpush1.bf16.msra.mxu0 0
  %410 = vmatprep.mubr.bf16.mxu0 0
  %411 = vmatmul.mubr.bf16.gmra.mrb[0].mxu0 %v373
  %v412 = vpop.f32.mrb[0].mxu0
  %v413 = vadd.f32 0.0, %v412
  %v414 = vpop.f32.mrb[0].mxu0
  %v415 = vpop.f32.mrb[0].mxu0
  %v416 = vpop.f32.mrb[0].mxu0
  %417 = vdwg.mxu0
  %v418 = vadd.f32 %v350, %v413
  %v419 = vld [vmem:[#allocation2] sm:$0xc]
  %v420 = vld [vmem:[#allocation2 + $0x8] sm:$0xc]
  %v421 = vld [vmem:[%s2] sm:$0x3]
  %v424 = vunpack.c.l.s4 1983009808
  %v425 = vunpack.c.0.s8 %v424
  %v426 = vlaneseq
  %v427 = vshrl.u32 %v426, 7
  %v428 = vsub.s32 %v425, %v427
  %v429 = vrot.slane %v421, %v428
  %430 = vrot.lane.b32.xlu0 %v429, 108
  %v431 = vpop.permute.xlu0 %430
  %v434 = vrot.slane %v419, 2
  %v435 = vrot.slane %v420, 2
  %436 = vrot.lane.b32.xlu0 %v434, 119
  %v437 = vpop.permute.xlu0 %436
  %438 = vrot.lane.b32.xlu0 %v435, 119
  %v439 = vpop.permute.xlu0 %438
  %v440 = vsel %vm370, %v437, %v439
  %v442 = vsel %vm99, %v431, 0
  %v445 = vsel %vm103, %v440, 0
  %447 = vmatprep.subr.bf16.mxu0 0
  %448 = vmatpush1.bf16.msra.mxu0 %v445
  %449 = vmatprep.subr.bf16.mxu0 0
  %450 = vmatpush1.bf16.msra.mxu0 0
  %451 = vmatprep.subr.bf16.mxu0 0
  %452 = vmatpush1.bf16.msra.mxu0 0
  %453 = vmatprep.subr.bf16.mxu0 0
  %454 = vmatpush1.bf16.msra.mxu0 0
  %455 = vmatprep.subr.bf16.mxu0 0
  %456 = vmatpush1.bf16.msra.mxu0 0
  %457 = vmatprep.subr.bf16.mxu0 0
  %458 = vmatpush1.bf16.msra.mxu0 0
  %459 = vmatprep.subr.bf16.mxu0 0
  %460 = vmatpush1.bf16.msra.mxu0 0
  %461 = vmatprep.subr.bf16.mxu0 0
  %462 = vmatpush1.bf16.msra.mxu0 0
  %463 = vmatprep.subr.bf16.mxu0 0
  %464 = vmatpush1.bf16.msra.mxu0 0
  %465 = vmatprep.subr.bf16.mxu0 0
  %466 = vmatpush1.bf16.msra.mxu0 0
  %467 = vmatprep.subr.bf16.mxu0 0
  %468 = vmatpush1.bf16.msra.mxu0 0
  %469 = vmatprep.subr.bf16.mxu0 0
  %470 = vmatpush1.bf16.msra.mxu0 0
  %471 = vmatprep.subr.bf16.mxu0 0
  %472 = vmatpush1.bf16.msra.mxu0 0
  %473 = vmatprep.subr.bf16.mxu0 0
  %474 = vmatpush1.bf16.msra.mxu0 0
  %475 = vmatprep.subr.bf16.mxu0 0
  %476 = vmatpush1.bf16.msra.mxu0 0
  %477 = vmatprep.subr.bf16.mxu0 0
  %478 = vmatpush1.bf16.msra.mxu0 0
  %479 = vmatprep.mubr.bf16.mxu0 0
  %480 = vmatmul.mubr.bf16.gmra.mrb[0].mxu0 %v442
  %v481 = vpop.f32.mrb[0].mxu0
  %v482 = vadd.f32 0.0, %v481
  %v483 = vpop.f32.mrb[0].mxu0
  %v484 = vpop.f32.mrb[0].mxu0
  %v485 = vpop.f32.mrb[0].mxu0
  %486 = vdwg.mxu0
  %v487 = vadd.f32 %v418, %v482
  %v488 = vld [vmem:[#allocation2] sm:$0xc0]
  %v489 = vld [vmem:[#allocation2 + $0x8] sm:$0xc0]
  %v490 = vmul.bf16 %v488, %v279
  %v491 = vmul.bf16 %v489, %v279
  %v492 = vld [vmem:[%s2] sm:$0x3]
  %v495 = vunpack.c.l.s4 1983009808
  %v496 = vunpack.c.0.s8 %v495
  %v497 = vlaneseq
  %v498 = vshrl.u32 %v497, 7
  %v499 = vsub.s32 %v496, %v498
  %v500 = vrot.slane %v492, %v499
  %501 = vrot.lane.b32.xlu0 %v500, 104
  %v502 = vpop.permute.xlu0 %501
  %v505 = vrot.slane %v490, 6
  %v506 = vrot.slane %v491, 6
  %507 = vrot.lane.b32.xlu0 %v505, 120
  %v508 = vpop.permute.xlu0 %507
  %509 = vrot.lane.b32.xlu0 %v506, 120
  %v510 = vpop.permute.xlu0 %509
  %v511 = vsel %vm302, %v508, %v510
  %v513 = vsel %vm99, %v502, 0
  %v516 = vsel %vm103, %v511, 0
  %518 = vmatprep.subr.bf16.mxu0 0
  %519 = vmatpush1.bf16.msra.mxu0 %v516
  %520 = vmatprep.subr.bf16.mxu0 0
  %521 = vmatpush1.bf16.msra.mxu0 0
  %522 = vmatprep.subr.bf16.mxu0 0
  %523 = vmatpush1.bf16.msra.mxu0 0
  %524 = vmatprep.subr.bf16.mxu0 0
  %525 = vmatpush1.bf16.msra.mxu0 0
  %526 = vmatprep.subr.bf16.mxu0 0
  %527 = vmatpush1.bf16.msra.mxu0 0
  %528 = vmatprep.subr.bf16.mxu0 0
  %529 = vmatpush1.bf16.msra.mxu0 0
  %530 = vmatprep.subr.bf16.mxu0 0
  %531 = vmatpush1.bf16.msra.mxu0 0
  %532 = vmatprep.subr.bf16.mxu0 0
  %533 = vmatpush1.bf16.msra.mxu0 0
  %534 = vmatprep.subr.bf16.mxu0 0
  %535 = vmatpush1.bf16.msra.mxu0 0
  %536 = vmatprep.subr.bf16.mxu0 0
  %537 = vmatpush1.bf16.msra.mxu0 0
  %538 = vmatprep.subr.bf16.mxu0 0
  %539 = vmatpush1.bf16.msra.mxu0 0
  %540 = vmatprep.subr.bf16.mxu0 0
  %541 = vmatpush1.bf16.msra.mxu0 0
  %542 = vmatprep.subr.bf16.mxu0 0
  %543 = vmatpush1.bf16.msra.mxu0 0
  %544 = vmatprep.subr.bf16.mxu0 0
  %545 = vmatpush1.bf16.msra.mxu0 0
  %546 = vmatprep.subr.bf16.mxu0 0
  %547 = vmatpush1.bf16.msra.mxu0 0
  %548 = vmatprep.subr.bf16.mxu0 0
  %549 = vmatpush1.bf16.msra.mxu0 0
  %550 = vmatprep.mubr.bf16.mxu0 0
  %551 = vmatmul.mubr.bf16.gmra.mrb[0].mxu0 %v513
  %v552 = vpop.f32.mrb[0].mxu0
  %v553 = vadd.f32 0.0, %v552
  %v554 = vpop.f32.mrb[0].mxu0
  %v555 = vpop.f32.mrb[0].mxu0
  %v556 = vpop.f32.mrb[0].mxu0
  %557 = vdwg.mxu0
  %v558 = vadd.f32 %v487, %v553
  %v559 = vld [vmem:[#allocation2] sm:$0x30]
  %v560 = vld [vmem:[#allocation2 + $0x8] sm:$0x30]
  %v561 = vld [vmem:[%s2] sm:$0x3]
  %v564 = vunpack.c.l.s4 1983009808
  %v565 = vunpack.c.0.s8 %v564
  %v566 = vlaneseq
  %v567 = vshrl.u32 %v566, 7
  %v568 = vsub.s32 %v565, %v567
  %v569 = vrot.slane %v561, %v568
  %570 = vrot.lane.b32.xlu0 %v569, 100
  %v571 = vpop.permute.xlu0 %570
  %v574 = vrot.slane %v559, 4
  %v575 = vrot.slane %v560, 4
  %576 = vrot.lane.b32.xlu0 %v574, 119
  %v577 = vpop.permute.xlu0 %576
  %578 = vrot.lane.b32.xlu0 %v575, 119
  %v579 = vpop.permute.xlu0 %578
  %v580 = vsel %vm370, %v577, %v579
  %v582 = vsel %vm99, %v571, 0
  %v585 = vsel %vm103, %v580, 0
  %587 = vmatprep.subr.bf16.mxu0 0
  %588 = vmatpush1.bf16.msra.mxu0 %v585
  %589 = vmatprep.subr.bf16.mxu0 0
  %590 = vmatpush1.bf16.msra.mxu0 0
  %591 = vmatprep.subr.bf16.mxu0 0
  %592 = vmatpush1.bf16.msra.mxu0 0
  %593 = vmatprep.subr.bf16.mxu0 0
  %594 = vmatpush1.bf16.msra.mxu0 0
  %595 = vmatprep.subr.bf16.mxu0 0
  %596 = vmatpush1.bf16.msra.mxu0 0
  %597 = vmatprep.subr.bf16.mxu0 0
  %598 = vmatpush1.bf16.msra.mxu0 0
  %599 = vmatprep.subr.bf16.mxu0 0
  %600 = vmatpush1.bf16.msra.mxu0 0
  %601 = vmatprep.subr.bf16.mxu0 0
  %602 = vmatpush1.bf16.msra.mxu0 0
  %603 = vmatprep.subr.bf16.mxu0 0
  %604 = vmatpush1.bf16.msra.mxu0 0
  %605 = vmatprep.subr.bf16.mxu0 0
  %606 = vmatpush1.bf16.msra.mxu0 0
  %607 = vmatprep.subr.bf16.mxu0 0
  %608 = vmatpush1.bf16.msra.mxu0 0
  %609 = vmatprep.subr.bf16.mxu0 0
  %610 = vmatpush1.bf16.msra.mxu0 0
  %611 = vmatprep.subr.bf16.mxu0 0
  %612 = vmatpush1.bf16.msra.mxu0 0
  %613 = vmatprep.subr.bf16.mxu0 0
  %614 = vmatpush1.bf16.msra.mxu0 0
  %615 = vmatprep.subr.bf16.mxu0 0
  %616 = vmatpush1.bf16.msra.mxu0 0
  %617 = vmatprep.subr.bf16.mxu0 0
  %618 = vmatpush1.bf16.msra.mxu0 0
  %619 = vmatprep.mubr.bf16.mxu0 0
  %620 = vmatmul.mubr.bf16.gmra.mrb[0].mxu0 %v582
  %v621 = vpop.f32.mrb[0].mxu0
  %v622 = vadd.f32 0.0, %v621
  %v623 = vpop.f32.mrb[0].mxu0
  %v624 = vpop.f32.mrb[0].mxu0
  %v625 = vpop.f32.mrb[0].mxu0
  %626 = vdwg.mxu0
  %v627 = vadd.f32 %v558, %v622
  %v628 = vld [vmem:[#allocation2] sm:$0xc0]
  %v629 = vld [vmem:[#allocation2 + $0x8] sm:$0xc0]
  %v630 = vld [vmem:[%s2] sm:$0x3]
  %v633 = vunpack.c.l.s4 1983009808
  %v634 = vunpack.c.0.s8 %v633
  %v635 = vlaneseq
  %v636 = vshrl.u32 %v635, 7
  %v637 = vsub.s32 %v634, %v636
  %v638 = vrot.slane %v630, %v637
  %639 = vrot.lane.b32.xlu0 %v638, 96
  %v640 = vpop.permute.xlu0 %639
  %v643 = vrot.slane %v628, 6
  %v644 = vrot.slane %v629, 6
  %645 = vrot.lane.b32.xlu0 %v643, 119
  %v646 = vpop.permute.xlu0 %645
  %647 = vrot.lane.b32.xlu0 %v644, 119
  %v648 = vpop.permute.xlu0 %647
  %v649 = vsel %vm370, %v646, %v648
  %v651 = vsel %vm99, %v640, 0
  %v654 = vsel %vm103, %v649, 0
  %656 = vmatprep.subr.bf16.mxu0 0
  %657 = vmatpush1.bf16.msra.mxu0 %v654
  %658 = vmatprep.subr.bf16.mxu0 0
  %659 = vmatpush1.bf16.msra.mxu0 0
  %660 = vmatprep.subr.bf16.mxu0 0
  %661 = vmatpush1.bf16.msra.mxu0 0
  %662 = vmatprep.subr.bf16.mxu0 0
  %663 = vmatpush1.bf16.msra.mxu0 0
  %664 = vmatprep.subr.bf16.mxu0 0
  %665 = vmatpush1.bf16.msra.mxu0 0
  %666 = vmatprep.subr.bf16.mxu0 0
  %667 = vmatpush1.bf16.msra.mxu0 0
  %668 = vmatprep.subr.bf16.mxu0 0
  %669 = vmatpush1.bf16.msra.mxu0 0
  %670 = vmatprep.subr.bf16.mxu0 0
  %671 = vmatpush1.bf16.msra.mxu0 0
  %672 = vmatprep.subr.bf16.mxu0 0
  %673 = vmatpush1.bf16.msra.mxu0 0
  %674 = vmatprep.subr.bf16.mxu0 0
  %675 = vmatpush1.bf16.msra.mxu0 0
  %676 = vmatprep.subr.bf16.mxu0 0
  %677 = vmatpush1.bf16.msra.mxu0 0
  %678 = vmatprep.subr.bf16.mxu0 0
  %679 = vmatpush1.bf16.msra.mxu0 0
  %680 = vmatprep.subr.bf16.mxu0 0
  %681 = vmatpush1.bf16.msra.mxu0 0
  %682 = vmatprep.subr.bf16.mxu0 0
  %683 = vmatpush1.bf16.msra.mxu0 0
  %684 = vmatprep.subr.bf16.mxu0 0
  %685 = vmatpush1.bf16.msra.mxu0 0
  %686 = vmatprep.subr.bf16.mxu0 0
  %687 = vmatpush1.bf16.msra.mxu0 0
  %688 = vmatprep.mubr.bf16.mxu0 0
  %689 = vmatmul.mubr.bf16.gmra.mrb[0].mxu0 %v651
  %v690 = vpop.f32.mrb[0].mxu0
  %v691 = vadd.f32 0.0, %v690
  %v692 = vpop.f32.mrb[0].mxu0
  %v693 = vpop.f32.mrb[0].mxu0
  %v694 = vpop.f32.mrb[0].mxu0
  %695 = vdwg.mxu0
  %v696 = vadd.f32 %v627, %v691
  %v697 = vld [vmem:[%s3] sm:$0xf]
  %699 = vset.pattern.permute.xlu0 0
  %700 = vperm.xlu0 %699, %v697
  %v701 = vpop.permute.xlu0 %700
  %v703 = vadd.f32 %v696, %v701
  %v704 = vpack.c.bf16 %v703, %v703
  %706 = vrot.lane.b32.xlu0 %v704, 9
  %v707 = vpop.permute.xlu0 %706
  %vm709 = vcmask 1041480
  %710 = vst.msk [vmem:[#allocation2] sm:$0x3] %vm709, %v707
  %vm711 = vcmask 66560
  %712 = vst.msk [vmem:[#allocation2 + $0x8] sm:$0x3] %vm711, %v707
  %v713 = vld [vmem:[#allocation2] sm:$0x3]
  %v714 = vld [vmem:[%s1] sm:$0x1]
  %v716 = vpack.i.b16 %v714, %v714
  %v718 = vlaneseq
  %v719 = vshrl.u32 %v718, 7
  %v720 = vsub.s32 0, %v719
  %v721 = vrot.slane %v716, %v720
  %v722 = vmul.bf16 %v713, %v721
  %v723 = vld [vmem:[%s4] sm:$0x3]
  %v724 = vld [vmem:[#allocation2 + $0x8] sm:$0x3]
  %v725 = vshrl.u32 %v714, 16
  %v726 = vpack.i.b16 %v725, %v725
  %v728 = vlaneseq
  %v729 = vshrl.u32 %v728, 7
  %v730 = vsub.s32 0, %v729
  %v731 = vrot.slane %v726, %v730
  %733 = vrot.lane.b32.xlu0 %v731, 1
  %v734 = vpop.permute.xlu0 %733
  %v736 = vmul.bf16 %v713, %v734
  %v737 = vmul.bf16 %v724, %v734
  %v740 = vunpack.c.l.s4 1983009808
  %v741 = vunpack.c.0.s8 %v740
  %v742 = vlaneseq
  %v743 = vshrl.u32 %v742, 7
  %v744 = vsub.s32 %v741, %v743
  %v745 = vrot.slane %v723, %v744
  %746 = vrot.lane.b32.xlu0 %v745, 124
  %v747 = vpop.permute.xlu0 %746
  %750 = vrot.lane.b32.xlu0 %v736, 127
  %v751 = vpop.permute.xlu0 %750
  %752 = vrot.lane.b32.xlu0 %v737, 127
  %v753 = vpop.permute.xlu0 %752
  %v754 = vsel %vm97, %v751, %v753
  %v756 = vsel %vm99, %v747, 0
  %v759 = vsel %vm103, %v754, 0
  %761 = vmatprep.subr.bf16.mxu0 0
  %762 = vmatpush1.bf16.msra.mxu0 %v759
  %763 = vmatprep.subr.bf16.mxu0 0
  %764 = vmatpush1.bf16.msra.mxu0 0
  %765 = vmatprep.subr.bf16.mxu0 0
  %766 = vmatpush1.bf16.msra.mxu0 0
  %767 = vmatprep.subr.bf16.mxu0 0
  %768 = vmatpush1.bf16.msra.mxu0 0
  %769 = vmatprep.subr.bf16.mxu0 0
  %770 = vmatpush1.bf16.msra.mxu0 0
  %771 = vmatprep.subr.bf16.mxu0 0
  %772 = vmatpush1.bf16.msra.mxu0 0
  %773 = vmatprep.subr.bf16.mxu0 0
  %774 = vmatpush1.bf16.msra.mxu0 0
  %775 = vmatprep.subr.bf16.mxu0 0
  %776 = vmatpush1.bf16.msra.mxu0 0
  %777 = vmatprep.subr.bf16.mxu0 0
  %778 = vmatpush1.bf16.msra.mxu0 0
  %779 = vmatprep.subr.bf16.mxu0 0
  %780 = vmatpush1.bf16.msra.mxu0 0
  %781 = vmatprep.subr.bf16.mxu0 0
  %782 = vmatpush1.bf16.msra.mxu0 0
  %783 = vmatprep.subr.bf16.mxu0 0
  %784 = vmatpush1.bf16.msra.mxu0 0
  %785 = vmatprep.subr.bf16.mxu0 0
  %786 = vmatpush1.bf16.msra.mxu0 0
  %787 = vmatprep.subr.bf16.mxu0 0
  %788 = vmatpush1.bf16.msra.mxu0 0
  %789 = vmatprep.subr.bf16.mxu0 0
  %790 = vmatpush1.bf16.msra.mxu0 0
  %791 = vmatprep.subr.bf16.mxu0 0
  %792 = vmatpush1.bf16.msra.mxu0 0
  %793 = vmatprep.mubr.bf16.mxu0 0
  %794 = vmatmul.mubr.bf16.gmra.mrb[0].mxu0 %v756
  %v795 = vpop.f32.mrb[0].mxu0
  %v796 = vadd.f32 0.0, %v795
  %v797 = vpop.f32.mrb[0].mxu0
  %v798 = vpop.f32.mrb[0].mxu0
  %v799 = vpop.f32.mrb[0].mxu0
  %800 = vdwg.mxu0
  %v802 = vsel %vm99, %v723, 0
  %v805 = vsel %vm103, %v722, 0
  %807 = vmatprep.subr.bf16.mxu0 0
  %808 = vmatpush1.bf16.msra.mxu0 %v805
  %809 = vmatprep.subr.bf16.mxu0 0
  %810 = vmatpush1.bf16.msra.mxu0 0
  %811 = vmatprep.subr.bf16.mxu0 0
  %812 = vmatpush1.bf16.msra.mxu0 0
  %813 = vmatprep.subr.bf16.mxu0 0
  %814 = vmatpush1.bf16.msra.mxu0 0
  %815 = vmatprep.subr.bf16.mxu0 0
  %816 = vmatpush1.bf16.msra.mxu0 0
  %817 = vmatprep.subr.bf16.mxu0 0
  %818 = vmatpush1.bf16.msra.mxu0 0
  %819 = vmatprep.subr.bf16.mxu0 0
  %820 = vmatpush1.bf16.msra.mxu0 0
  %821 = vmatprep.subr.bf16.mxu0 0
  %822 = vmatpush1.bf16.msra.mxu0 0
  %823 = vmatprep.subr.bf16.mxu0 0
  %824 = vmatpush1.bf16.msra.mxu0 0
  %825 = vmatprep.subr.bf16.mxu0 0
  %826 = vmatpush1.bf16.msra.mxu0 0
  %827 = vmatprep.subr.bf16.mxu0 0
  %828 = vmatpush1.bf16.msra.mxu0 0
  %829 = vmatprep.subr.bf16.mxu0 0
  %830 = vmatpush1.bf16.msra.mxu0 0
  %831 = vmatprep.subr.bf16.mxu0 0
  %832 = vmatpush1.bf16.msra.mxu0 0
  %833 = vmatprep.subr.bf16.mxu0 0
  %834 = vmatpush1.bf16.msra.mxu0 0
  %835 = vmatprep.subr.bf16.mxu0 0
  %836 = vmatpush1.bf16.msra.mxu0 0
  %837 = vmatprep.subr.bf16.mxu0 0
  %838 = vmatpush1.bf16.msra.mxu0 0
  %839 = vmatprep.mubr.bf16.mxu0 0
  %840 = vmatmul.mubr.bf16.gmra.mrb[0].mxu0 %v802
  %v841 = vpop.f32.mrb[0].mxu0
  %v842 = vadd.f32 %v796, %v841
  %v843 = vpop.f32.mrb[0].mxu0
  %v844 = vpop.f32.mrb[0].mxu0
  %v845 = vpop.f32.mrb[0].mxu0
  %846 = vdwg.mxu0
  %v847 = vld [vmem:[#allocation2] sm:$0x3]
  %v848 = vld [vmem:[#allocation2 + $0x8] sm:$0x3]
  %v849 = vld [vmem:[%s1] sm:$0x2]
  %v851 = vpack.i.b16 %v849, %v849
  %v853 = vlaneseq
  %v854 = vshrl.u32 %v853, 7
  %v855 = vsub.s32 1, %v854
  %v856 = vrot.slane %v851, %v855
  %858 = vrot.lane.b32.xlu0 %v856, 2
  %v859 = vpop.permute.xlu0 %858
  %v861 = vmul.bf16 %v847, %v859
  %v862 = vmul.bf16 %v848, %v859
  %v863 = vld [vmem:[%s4] sm:$0x3]
  %v866 = vunpack.c.l.s4 1983009808
  %v867 = vunpack.c.0.s8 %v866
  %v868 = vlaneseq
  %v869 = vshrl.u32 %v868, 7
  %v870 = vsub.s32 %v867, %v869
  %v871 = vrot.slane %v863, %v870
  %872 = vrot.lane.b32.xlu0 %v871, 120
  %v873 = vpop.permute.xlu0 %872
  %876 = vrot.lane.b32.xlu0 %v861, 126
  %v877 = vpop.permute.xlu0 %876
  %878 = vrot.lane.b32.xlu0 %v862, 126
  %v879 = vpop.permute.xlu0 %878
  %vm880 = vcmask 1031168
  %v881 = vsel %vm880, %v877, %v879
  %v883 = vsel %vm99, %v873, 0
  %v886 = vsel %vm103, %v881, 0
  %888 = vmatprep.subr.bf16.mxu0 0
  %889 = vmatpush1.bf16.msra.mxu0 %v886
  %890 = vmatprep.subr.bf16.mxu0 0
  %891 = vmatpush1.bf16.msra.mxu0 0
  %892 = vmatprep.subr.bf16.mxu0 0
  %893 = vmatpush1.bf16.msra.mxu0 0
  %894 = vmatprep.subr.bf16.mxu0 0
  %895 = vmatpush1.bf16.msra.mxu0 0
  %896 = vmatprep.subr.bf16.mxu0 0
  %897 = vmatpush1.bf16.msra.mxu0 0
  %898 = vmatprep.subr.bf16.mxu0 0
  %899 = vmatpush1.bf16.msra.mxu0 0
  %900 = vmatprep.subr.bf16.mxu0 0
  %901 = vmatpush1.bf16.msra.mxu0 0
  %902 = vmatprep.subr.bf16.mxu0 0
  %903 = vmatpush1.bf16.msra.mxu0 0
  %904 = vmatprep.subr.bf16.mxu0 0
  %905 = vmatpush1.bf16.msra.mxu0 0
  %906 = vmatprep.subr.bf16.mxu0 0
  %907 = vmatpush1.bf16.msra.mxu0 0
  %908 = vmatprep.subr.bf16.mxu0 0
  %909 = vmatpush1.bf16.msra.mxu0 0
  %910 = vmatprep.subr.bf16.mxu0 0
  %911 = vmatpush1.bf16.msra.mxu0 0
  %912 = vmatprep.subr.bf16.mxu0 0
  %913 = vmatpush1.bf16.msra.mxu0 0
  %914 = vmatprep.subr.bf16.mxu0 0
  %915 = vmatpush1.bf16.msra.mxu0 0
  %916 = vmatprep.subr.bf16.mxu0 0
  %917 = vmatpush1.bf16.msra.mxu0 0
  %918 = vmatprep.subr.bf16.mxu0 0
  %919 = vmatpush1.bf16.msra.mxu0 0
  %920 = vmatprep.mubr.bf16.mxu0 0
  %921 = vmatmul.mubr.bf16.gmra.mrb[0].mxu0 %v883
  %v922 = vpop.f32.mrb[0].mxu0
  %v923 = vadd.f32 0.0, %v922
  %v924 = vpop.f32.mrb[0].mxu0
  %v925 = vpop.f32.mrb[0].mxu0
  %v926 = vpop.f32.mrb[0].mxu0
  %927 = vdwg.mxu0
  %v928 = vadd.f32 %v842, %v923
  %v929 = vld [vmem:[#allocation2] sm:$0x3]
  %v930 = vld [vmem:[#allocation2 + $0x8] sm:$0x3]
  %v931 = vld [vmem:[%s1] sm:$0x2]
  %v933 = vshrl.u32 %v931, 16
  %v934 = vpack.i.b16 %v933, %v933
  %v936 = vlaneseq
  %v937 = vshrl.u32 %v936, 7
  %v938 = vsub.s32 1, %v937
  %v939 = vrot.slane %v934, %v938
  %941 = vrot.lane.b32.xlu0 %v939, 8
  %v942 = vpop.permute.xlu0 %941
  %v944 = vmul.bf16 %v929, %v942
  %v945 = vmul.bf16 %v930, %v942
  %v946 = vld [vmem:[%s4] sm:$0x3]
  %v949 = vunpack.c.l.s4 1983009808
  %v950 = vunpack.c.0.s8 %v949
  %v951 = vlaneseq
  %v952 = vshrl.u32 %v951, 7
  %v953 = vsub.s32 %v950, %v952
  %v954 = vrot.slane %v946, %v953
  %955 = vrot.lane.b32.xlu0 %v954, 116
  %v956 = vpop.permute.xlu0 %955
  %959 = vrot.lane.b32.xlu0 %v944, 120
  %v960 = vpop.permute.xlu0 %959
  %961 = vrot.lane.b32.xlu0 %v945, 120
  %v962 = vpop.permute.xlu0 %961
  %v963 = vsel %vm302, %v960, %v962
  %v965 = vsel %vm99, %v956, 0
  %v968 = vsel %vm103, %v963, 0
  %970 = vmatprep.subr.bf16.mxu0 0
  %971 = vmatpush1.bf16.msra.mxu0 %v968
  %972 = vmatprep.subr.bf16.mxu0 0
  %973 = vmatpush1.bf16.msra.mxu0 0
  %974 = vmatprep.subr.bf16.mxu0 0
  %975 = vmatpush1.bf16.msra.mxu0 0
  %976 = vmatprep.subr.bf16.mxu0 0
  %977 = vmatpush1.bf16.msra.mxu0 0
  %978 = vmatprep.subr.bf16.mxu0 0
  %979 = vmatpush1.bf16.msra.mxu0 0
  %980 = vmatprep.subr.bf16.mxu0 0
  %981 = vmatpush1.bf16.msra.mxu0 0
  %982 = vmatprep.subr.bf16.mxu0 0
  %983 = vmatpush1.bf16.msra.mxu0 0
  %984 = vmatprep.subr.bf16.mxu0 0
  %985 = vmatpush1.bf16.msra.mxu0 0
  %986 = vmatprep.subr.bf16.mxu0 0
  %987 = vmatpush1.bf16.msra.mxu0 0
  %988 = vmatprep.subr.bf16.mxu0 0
  %989 = vmatpush1.bf16.msra.mxu0 0
  %990 = vmatprep.subr.bf16.mxu0 0
  %991 = vmatpush1.bf16.msra.mxu0 0
  %992 = vmatprep.subr.bf16.mxu0 0
  %993 = vmatpush1.bf16.msra.mxu0 0
  %994 = vmatprep.subr.bf16.mxu0 0
  %995 = vmatpush1.bf16.msra.mxu0 0
  %996 = vmatprep.subr.bf16.mxu0 0
  %997 = vmatpush1.bf16.msra.mxu0 0
  %998 = vmatprep.subr.bf16.mxu0 0
  %999 = vmatpush1.bf16.msra.mxu0 0
  %1000 = vmatprep.subr.bf16.mxu0 0
  %1001 = vmatpush1.bf16.msra.mxu0 0
  %1002 = vmatprep.mubr.bf16.mxu0 0
  %1003 = vmatmul.mubr.bf16.gmra.mrb[0].mxu0 %v965
  %v1004 = vpop.f32.mrb[0].mxu0
  %v1005 = vadd.f32 0.0, %v1004
  %v1006 = vpop.f32.mrb[0].mxu0
  %v1007 = vpop.f32.mrb[0].mxu0
  %v1008 = vpop.f32.mrb[0].mxu0
  %1009 = vdwg.mxu0
  %v1010 = vadd.f32 %v928, %v1005
  %v1011 = vld [vmem:[#allocation2] sm:$0x3]
  %v1012 = vld [vmem:[#allocation2 + $0x8] sm:$0x3]
  %v1013 = vld [vmem:[%s4] sm:$0x3]
  %v1016 = vunpack.c.l.s4 1983009808
  %v1017 = vunpack.c.0.s8 %v1016
  %v1018 = vlaneseq
  %v1019 = vshrl.u32 %v1018, 7
  %v1020 = vsub.s32 %v1017, %v1019
  %v1021 = vrot.slane %v1013, %v1020
  %1022 = vrot.lane.b32.xlu0 %v1021, 112
  %v1023 = vpop.permute.xlu0 %1022
  %1026 = vrot.lane.b32.xlu0 %v1011, 119
  %v1027 = vpop.permute.xlu0 %1026
  %1028 = vrot.lane.b32.xlu0 %v1012, 119
  %v1029 = vpop.permute.xlu0 %1028
  %v1030 = vsel %vm370, %v1027, %v1029
  %v1032 = vsel %vm99, %v1023, 0
  %v1035 = vsel %vm103, %v1030, 0
  %1037 = vmatprep.subr.bf16.mxu0 0
  %1038 = vmatpush1.bf16.msra.mxu0 %v1035
  %1039 = vmatprep.subr.bf16.mxu0 0
  %1040 = vmatpush1.bf16.msra.mxu0 0
  %1041 = vmatprep.subr.bf16.mxu0 0
  %1042 = vmatpush1.bf16.msra.mxu0 0
  %1043 = vmatprep.subr.bf16.mxu0 0
  %1044 = vmatpush1.bf16.msra.mxu0 0
  %1045 = vmatprep.subr.bf16.mxu0 0
  %1046 = vmatpush1.bf16.msra.mxu0 0
  %1047 = vmatprep.subr.bf16.mxu0 0
  %1048 = vmatpush1.bf16.msra.mxu0 0
  %1049 = vmatprep.subr.bf16.mxu0 0
  %1050 = vmatpush1.bf16.msra.mxu0 0
  %1051 = vmatprep.subr.bf16.mxu0 0
  %1052 = vmatpush1.bf16.msra.mxu0 0
  %1053 = vmatprep.subr.bf16.mxu0 0
  %1054 = vmatpush1.bf16.msra.mxu0 0
  %1055 = vmatprep.subr.bf16.mxu0 0
  %1056 = vmatpush1.bf16.msra.mxu0 0
  %1057 = vmatprep.subr.bf16.mxu0 0
  %1058 = vmatpush1.bf16.msra.mxu0 0
  %1059 = vmatprep.subr.bf16.mxu0 0
  %1060 = vmatpush1.bf16.msra.mxu0 0
  %1061 = vmatprep.subr.bf16.mxu0 0
  %1062 = vmatpush1.bf16.msra.mxu0 0
  %1063 = vmatprep.subr.bf16.mxu0 0
  %1064 = vmatpush1.bf16.msra.mxu0 0
  %1065 = vmatprep.subr.bf16.mxu0 0
  %1066 = vmatpush1.bf16.msra.mxu0 0
  %1067 = vmatprep.subr.bf16.mxu0 0
  %1068 = vmatpush1.bf16.msra.mxu0 0
  %1069 = vmatprep.mubr.bf16.mxu0 0
  %1070 = vmatmul.mubr.bf16.gmra.mrb[0].mxu0 %v1032
  %v1071 = vpop.f32.mrb[0].mxu0
  %v1072 = vadd.f32 0.0, %v1071
  %v1073 = vpop.f32.mrb[0].mxu0
  %v1074 = vpop.f32.mrb[0].mxu0
  %v1075 = vpop.f32.mrb[0].mxu0
  %1076 = vdwg.mxu0
  %v1077 = vadd.f32 %v1010, %v1072
  %v1078 = vld [vmem:[#allocation2] sm:$0x3]
  %v1079 = vld [vmem:[#allocation2 + $0x8] sm:$0x3]
  %v1080 = vld [vmem:[%s1] sm:$0x4]
  %v1082 = vshrl.u32 %v1080, 16
  %v1083 = vpack.i.b16 %v1082, %v1082
  %v1085 = vlaneseq
  %v1086 = vshrl.u32 %v1085, 7
  %v1087 = vsub.s32 2, %v1086
  %v1088 = vrot.slane %v1083, %v1087
  %1090 = vrot.lane.b32.xlu0 %v1088, 10
  %v1091 = vpop.permute.xlu0 %1090
  %v1093 = vmul.bf16 %v1078, %v1091
  %v1094 = vmul.bf16 %v1079, %v1091
  %v1095 = vld [vmem:[%s4] sm:$0x3]
  %v1098 = vunpack.c.l.s4 1983009808
  %v1099 = vunpack.c.0.s8 %v1098
  %v1100 = vlaneseq
  %v1101 = vshrl.u32 %v1100, 7
  %v1102 = vsub.s32 %v1099, %v1101
  %v1103 = vrot.slane %v1095, %v1102
  %1104 = vrot.lane.b32.xlu0 %v1103, 108
  %v1105 = vpop.permute.xlu0 %1104
  %1108 = vrot.lane.b32.xlu0 %v1093, 118
  %v1109 = vpop.permute.xlu0 %1108
  %1110 = vrot.lane.b32.xlu0 %v1094, 118
  %v1111 = vpop.permute.xlu0 %1110
  %vm1112 = vcmask 965632
  %v1113 = vsel %vm1112, %v1109, %v1111
  %v1115 = vsel %vm99, %v1105, 0
  %v1118 = vsel %vm103, %v1113, 0
  %1120 = vmatprep.subr.bf16.mxu0 0
  %1121 = vmatpush1.bf16.msra.mxu0 %v1118
  %1122 = vmatprep.subr.bf16.mxu0 0
  %1123 = vmatpush1.bf16.msra.mxu0 0
  %1124 = vmatprep.subr.bf16.mxu0 0
  %1125 = vmatpush1.bf16.msra.mxu0 0
  %1126 = vmatprep.subr.bf16.mxu0 0
  %1127 = vmatpush1.bf16.msra.mxu0 0
  %1128 = vmatprep.subr.bf16.mxu0 0
  %1129 = vmatpush1.bf16.msra.mxu0 0
  %1130 = vmatprep.subr.bf16.mxu0 0
  %1131 = vmatpush1.bf16.msra.mxu0 0
  %1132 = vmatprep.subr.bf16.mxu0 0
  %1133 = vmatpush1.bf16.msra.mxu0 0
  %1134 = vmatprep.subr.bf16.mxu0 0
  %1135 = vmatpush1.bf16.msra.mxu0 0
  %1136 = vmatprep.subr.bf16.mxu0 0
  %1137 = vmatpush1.bf16.msra.mxu0 0
  %1138 = vmatprep.subr.bf16.mxu0 0
  %1139 = vmatpush1.bf16.msra.mxu0 0
  %1140 = vmatprep.subr.bf16.mxu0 0
  %1141 = vmatpush1.bf16.msra.mxu0 0
  %1142 = vmatprep.subr.bf16.mxu0 0
  %1143 = vmatpush1.bf16.msra.mxu0 0
  %1144 = vmatprep.subr.bf16.mxu0 0
  %1145 = vmatpush1.bf16.msra.mxu0 0
  %1146 = vmatprep.subr.bf16.mxu0 0
  %1147 = vmatpush1.bf16.msra.mxu0 0
  %1148 = vmatprep.subr.bf16.mxu0 0
  %1149 = vmatpush1.bf16.msra.mxu0 0
  %1150 = vmatprep.subr.bf16.mxu0 0
  %1151 = vmatpush1.bf16.msra.mxu0 0
  %1152 = vmatprep.mubr.bf16.mxu0 0
  %1153 = vmatmul.mubr.bf16.gmra.mrb[0].mxu0 %v1115
  %v1154 = vpop.f32.mrb[0].mxu0
  %v1155 = vadd.f32 0.0, %v1154
  %v1156 = vpop.f32.mrb[0].mxu0
  %v1157 = vpop.f32.mrb[0].mxu0
  %v1158 = vpop.f32.mrb[0].mxu0
  %1159 = vdwg.mxu0
  %v1160 = vadd.f32 %v1077, %v1155
  %v1161 = vld [vmem:[#allocation2] sm:$0x3]
  %v1162 = vld [vmem:[#allocation2 + $0x8] sm:$0x3]
  %v1163 = vld [vmem:[%s1] sm:$0x8]
  %v1165 = vpack.i.b16 %v1163, %v1163
  %v1167 = vlaneseq
  %v1168 = vshrl.u32 %v1167, 7
  %v1169 = vsub.s32 3, %v1168
  %v1170 = vrot.slane %v1165, %v1169
  %1172 = vrot.lane.b32.xlu0 %v1170, 16
  %v1173 = vpop.permute.xlu0 %1172
  %v1175 = vmul.bf16 %v1161, %v1173
  %v1176 = vmul.bf16 %v1162, %v1173
  %v1177 = vld [vmem:[%s4] sm:$0x3]
  %v1180 = vunpack.c.l.s4 1983009808
  %v1181 = vunpack.c.0.s8 %v1180
  %v1182 = vlaneseq
  %v1183 = vshrl.u32 %v1182, 7
  %v1184 = vsub.s32 %v1181, %v1183
  %v1185 = vrot.slane %v1177, %v1184
  %1186 = vrot.lane.b32.xlu0 %v1185, 104
  %v1187 = vpop.permute.xlu0 %1186
  %1190 = vrot.lane.b32.xlu0 %v1175, 112
  %v1191 = vpop.permute.xlu0 %1190
  %1192 = vrot.lane.b32.xlu0 %v1176, 112
  %v1193 = vpop.permute.xlu0 %1192
  %vm1194 = vcmask 916480
  %v1195 = vsel %vm1194, %v1191, %v1193
  %v1197 = vsel %vm99, %v1187, 0
  %v1200 = vsel %vm103, %v1195, 0
  %1202 = vmatprep.subr.bf16.mxu0 0
  %1203 = vmatpush1.bf16.msra.mxu0 %v1200
  %1204 = vmatprep.subr.bf16.mxu0 0
  %1205 = vmatpush1.bf16.msra.mxu0 0
  %1206 = vmatprep.subr.bf16.mxu0 0
  %1207 = vmatpush1.bf16.msra.mxu0 0
  %1208 = vmatprep.subr.bf16.mxu0 0
  %1209 = vmatpush1.bf16.msra.mxu0 0
  %1210 = vmatprep.subr.bf16.mxu0 0
  %1211 = vmatpush1.bf16.msra.mxu0 0
  %1212 = vmatprep.subr.bf16.mxu0 0
  %1213 = vmatpush1.bf16.msra.mxu0 0
  %1214 = vmatprep.subr.bf16.mxu0 0
  %1215 = vmatpush1.bf16.msra.mxu0 0
  %1216 = vmatprep.subr.bf16.mxu0 0
  %1217 = vmatpush1.bf16.msra.mxu0 0
  %1218 = vmatprep.subr.bf16.mxu0 0
  %1219 = vmatpush1.bf16.msra.mxu0 0
  %1220 = vmatprep.subr.bf16.mxu0 0
  %1221 = vmatpush1.bf16.msra.mxu0 0
  %1222 = vmatprep.subr.bf16.mxu0 0
  %1223 = vmatpush1.bf16.msra.mxu0 0
  %1224 = vmatprep.subr.bf16.mxu0 0
  %1225 = vmatpush1.bf16.msra.mxu0 0
  %1226 = vmatprep.subr.bf16.mxu0 0
  %1227 = vmatpush1.bf16.msra.mxu0 0
  %1228 = vmatprep.subr.bf16.mxu0 0
  %1229 = vmatpush1.bf16.msra.mxu0 0
  %1230 = vmatprep.subr.bf16.mxu0 0
  %1231 = vmatpush1.bf16.msra.mxu0 0
  %1232 = vmatprep.subr.bf16.mxu0 0
  %1233 = vmatpush1.bf16.msra.mxu0 0
  %1234 = vmatprep.mubr.bf16.mxu0 0
  %1235 = vmatmul.mubr.bf16.gmra.mrb[0].mxu0 %v1197
  %v1236 = vpop.f32.mrb[0].mxu0
  %v1237 = vadd.f32 0.0, %v1236
  %v1238 = vpop.f32.mrb[0].mxu0
  %v1239 = vpop.f32.mrb[0].mxu0
  %v1240 = vpop.f32.mrb[0].mxu0
  %1241 = vdwg.mxu0
  %v1242 = vadd.f32 %v1160, %v1237
  %v1243 = vld [vmem:[#allocation2] sm:$0x3]
  %v1244 = vld [vmem:[#allocation2 + $0x8] sm:$0x3]
  %v1245 = vld [vmem:[%s1] sm:$0x8]
  %v1247 = vshrl.u32 %v1245, 16
  %v1248 = vpack.i.b16 %v1247, %v1247
  %v1250 = vlaneseq
  %v1251 = vshrl.u32 %v1250, 7
  %v1252 = vsub.s32 3, %v1251
  %v1253 = vrot.slane %v1248, %v1252
  %1255 = vrot.lane.b32.xlu0 %v1253, 17
  %v1256 = vpop.permute.xlu0 %1255
  %v1258 = vmul.bf16 %v1243, %v1256
  %v1259 = vmul.bf16 %v1244, %v1256
  %v1260 = vld [vmem:[%s4] sm:$0x3]
  %v1263 = vunpack.c.l.s4 1983009808
  %v1264 = vunpack.c.0.s8 %v1263
  %v1265 = vlaneseq
  %v1266 = vshrl.u32 %v1265, 7
  %v1267 = vsub.s32 %v1264, %v1266
  %v1268 = vrot.slane %v1260, %v1267
  %1269 = vrot.lane.b32.xlu0 %v1268, 100
  %v1270 = vpop.permute.xlu0 %1269
  %1273 = vrot.lane.b32.xlu0 %v1258, 111
  %v1274 = vpop.permute.xlu0 %1273
  %1275 = vrot.lane.b32.xlu0 %v1259, 111
  %v1276 = vpop.permute.xlu0 %1275
  %vm1277 = vcmask 908288
  %v1278 = vsel %vm1277, %v1274, %v1276
  %v1280 = vsel %vm99, %v1270, 0
  %v1283 = vsel %vm103, %v1278, 0
  %1285 = vmatprep.subr.bf16.mxu0 0
  %1286 = vmatpush1.bf16.msra.mxu0 %v1283
  %1287 = vmatprep.subr.bf16.mxu0 0
  %1288 = vmatpush1.bf16.msra.mxu0 0
  %1289 = vmatprep.subr.bf16.mxu0 0
  %1290 = vmatpush1.bf16.msra.mxu0 0
  %1291 = vmatprep.subr.bf16.mxu0 0
  %1292 = vmatpush1.bf16.msra.mxu0 0
  %1293 = vmatprep.subr.bf16.mxu0 0
  %1294 = vmatpush1.bf16.msra.mxu0 0
  %1295 = vmatprep.subr.bf16.mxu0 0
  %1296 = vmatpush1.bf16.msra.mxu0 0
  %1297 = vmatprep.subr.bf16.mxu0 0
  %1298 = vmatpush1.bf16.msra.mxu0 0
  %1299 = vmatprep.subr.bf16.mxu0 0
  %1300 = vmatpush1.bf16.msra.mxu0 0
  %1301 = vmatprep.subr.bf16.mxu0 0
  %1302 = vmatpush1.bf16.msra.mxu0 0
  %1303 = vmatprep.subr.bf16.mxu0 0
  %1304 = vmatpush1.bf16.msra.mxu0 0
  %1305 = vmatprep.subr.bf16.mxu0 0
  %1306 = vmatpush1.bf16.msra.mxu0 0
  %1307 = vmatprep.subr.bf16.mxu0 0
  %1308 = vmatpush1.bf16.msra.mxu0 0
  %1309 = vmatprep.subr.bf16.mxu0 0
  %1310 = vmatpush1.bf16.msra.mxu0 0
  %1311 = vmatprep.subr.bf16.mxu0 0
  %1312 = vmatpush1.bf16.msra.mxu0 0
  %1313 = vmatprep.subr.bf16.mxu0 0
  %1314 = vmatpush1.bf16.msra.mxu0 0
  %1315 = vmatprep.subr.bf16.mxu0 0
  %1316 = vmatpush1.bf16.msra.mxu0 0
  %1317 = vmatprep.mubr.bf16.mxu0 0
  %1318 = vmatmul.mubr.bf16.gmra.mrb[0].mxu0 %v1280
  %v1319 = vpop.f32.mrb[0].mxu0
  %v1320 = vadd.f32 0.0, %v1319
  %v1321 = vpop.f32.mrb[0].mxu0
  %v1322 = vpop.f32.mrb[0].mxu0
  %v1323 = vpop.f32.mrb[0].mxu0
  %1324 = vdwg.mxu0
  %v1325 = vadd.f32 %v1242, %v1320
  %v1326 = vld [vmem:[#allocation2] sm:$0x3]
  %v1327 = vld [vmem:[#allocation2 + $0x8] sm:$0x3]
  %v1328 = vld [vmem:[%s1 + $0x4] sm:$0x1]
  %v1330 = vpack.i.b16 %v1328, %v1328
  %v1332 = vlaneseq
  %v1333 = vshrl.u32 %v1332, 7
  %v1334 = vsub.s32 0, %v1333
  %v1335 = vrot.slane %v1330, %v1334
  %1337 = vrot.lane.b32.xlu0 %v1335, 18
  %v1338 = vpop.permute.xlu0 %1337
  %v1340 = vmul.bf16 %v1326, %v1338
  %v1341 = vmul.bf16 %v1327, %v1338
  %v1342 = vld [vmem:[%s4] sm:$0x3]
  %v1345 = vunpack.c.l.s4 1983009808
  %v1346 = vunpack.c.0.s8 %v1345
  %v1347 = vlaneseq
  %v1348 = vshrl.u32 %v1347, 7
  %v1349 = vsub.s32 %v1346, %v1348
  %v1350 = vrot.slane %v1342, %v1349
  %1351 = vrot.lane.b32.xlu0 %v1350, 96
  %v1352 = vpop.permute.xlu0 %1351
  %1355 = vrot.lane.b32.xlu0 %v1340, 110
  %v1356 = vpop.permute.xlu0 %1355
  %1357 = vrot.lane.b32.xlu0 %v1341, 110
  %v1358 = vpop.permute.xlu0 %1357
  %vm1359 = vcmask 900096
  %v1360 = vsel %vm1359, %v1356, %v1358
  %v1362 = vsel %vm99, %v1352, 0
  %v1365 = vsel %vm103, %v1360, 0
  %1367 = vmatprep.subr.bf16.mxu0 0
  %1368 = vmatpush1.bf16.msra.mxu0 %v1365
  %1369 = vmatprep.subr.bf16.mxu0 0
  %1370 = vmatpush1.bf16.msra.mxu0 0
  %1371 = vmatprep.subr.bf16.mxu0 0
  %1372 = vmatpush1.bf16.msra.mxu0 0
  %1373 = vmatprep.subr.bf16.mxu0 0
  %1374 = vmatpush1.bf16.msra.mxu0 0
  %1375 = vmatprep.subr.bf16.mxu0 0
  %1376 = vmatpush1.bf16.msra.mxu0 0
  %1377 = vmatprep.subr.bf16.mxu0 0
  %1378 = vmatpush1.bf16.msra.mxu0 0
  %1379 = vmatprep.subr.bf16.mxu0 0
  %1380 = vmatpush1.bf16.msra.mxu0 0
  %1381 = vmatprep.subr.bf16.mxu0 0
  %1382 = vmatpush1.bf16.msra.mxu0 0
  %1383 = vmatprep.subr.bf16.mxu0 0
  %1384 = vmatpush1.bf16.msra.mxu0 0
  %1385 = vmatprep.subr.bf16.mxu0 0
  %1386 = vmatpush1.bf16.msra.mxu0 0
  %1387 = vmatprep.subr.bf16.mxu0 0
  %1388 = vmatpush1.bf16.msra.mxu0 0
  %1389 = vmatprep.subr.bf16.mxu0 0
  %1390 = vmatpush1.bf16.msra.mxu0 0
  %1391 = vmatprep.subr.bf16.mxu0 0
  %1392 = vmatpush1.bf16.msra.mxu0 0
  %1393 = vmatprep.subr.bf16.mxu0 0
  %1394 = vmatpush1.bf16.msra.mxu0 0
  %1395 = vmatprep.subr.bf16.mxu0 0
  %1396 = vmatpush1.bf16.msra.mxu0 0
  %1397 = vmatprep.subr.bf16.mxu0 0
  %1398 = vmatpush1.bf16.msra.mxu0 0
  %1399 = vmatprep.mubr.bf16.mxu0 0
  %1400 = vmatmul.mubr.bf16.gmra.mrb[0].mxu0 %v1362
  %v1401 = vpop.f32.mrb[0].mxu0
  %v1402 = vadd.f32 0.0, %v1401
  %v1403 = vpop.f32.mrb[0].mxu0
  %v1404 = vpop.f32.mrb[0].mxu0
  %v1405 = vpop.f32.mrb[0].mxu0
  %1406 = vdwg.mxu0
  %v1407 = vadd.f32 %v1325, %v1402
  %v1408 = vld [vmem:[%s5] sm:$0xf]
  %1410 = vset.pattern.permute.xlu0 0
  %1411 = vperm.xlu0 %1410, %v1408
  %v1412 = vpop.permute.xlu0 %1411
  %v1414 = vadd.f32 %v1407, %v1412
  %v1415 = vpack.c.bf16 %v1414, %v1414
  %1417 = vrot.lane.b32.xlu0 %v1415, 9
  %v1418 = vpop.permute.xlu0 %1417
  %1420 = vst.msk [vmem:[#allocation2] sm:$0x3] %vm709, %v1418
  %1421 = vst.msk [vmem:[#allocation2 + $0x8] sm:$0x3] %vm711, %v1418
  %v1422 = vld [vmem:[#allocation2] sm:$0x3]
  %v1423 = vld [vmem:[%s1] sm:$0x1]
  %v1425 = vpack.i.b16 %v1423, %v1423
  %v1427 = vlaneseq
  %v1428 = vshrl.u32 %v1427, 7
  %v1429 = vsub.s32 0, %v1428
  %v1430 = vrot.slane %v1425, %v1429
  %v1431 = vmul.bf16 %v1422, %v1430
  %v1432 = vld [vmem:[%s6] sm:$0xf]
  %v1433 = vld [vmem:[#allocation2 + $0x8] sm:$0x3]
  %v1434 = vshrl.u32 %v1423, 16
  %v1435 = vpack.i.b16 %v1434, %v1434
  %v1437 = vlaneseq
  %v1438 = vshrl.u32 %v1437, 7
  %v1439 = vsub.s32 0, %v1438
  %v1440 = vrot.slane %v1435, %v1439
  %1442 = vrot.lane.b32.xlu0 %v1440, 1
  %v1443 = vpop.permute.xlu0 %1442
  %v1445 = vmul.bf16 %v1422, %v1443
  %v1446 = vmul.bf16 %v1433, %v1443
  %v1448 = vunpack.c.l.b16 %v1432
  %v1449 = vpack.c.b16 %v1448, %v1448
  %1450 = vrot.lane.b32.xlu0 %v1449, 124
  %v1451 = vpop.permute.xlu0 %1450
  %1454 = vrot.lane.b32.xlu0 %v1445, 127
  %v1455 = vpop.permute.xlu0 %1454
  %1456 = vrot.lane.b32.xlu0 %v1446, 127
  %v1457 = vpop.permute.xlu0 %1456
  %v1458 = vsel %vm97, %v1455, %v1457
  %v1460 = vsel %vm99, %v1451, 0
  %v1463 = vsel %vm103, %v1458, 0
  %1465 = vmatprep.subr.bf16.mxu0 0
  %1466 = vmatpush1.bf16.msra.mxu0 %v1463
  %1467 = vmatprep.subr.bf16.mxu0 0
  %1468 = vmatpush1.bf16.msra.mxu0 0
  %1469 = vmatprep.subr.bf16.mxu0 0
  %1470 = vmatpush1.bf16.msra.mxu0 0
  %1471 = vmatprep.subr.bf16.mxu0 0
  %1472 = vmatpush1.bf16.msra.mxu0 0
  %1473 = vmatprep.subr.bf16.mxu0 0
  %1474 = vmatpush1.bf16.msra.mxu0 0
  %1475 = vmatprep.subr.bf16.mxu0 0
  %1476 = vmatpush1.bf16.msra.mxu0 0
  %1477 = vmatprep.subr.bf16.mxu0 0
  %1478 = vmatpush1.bf16.msra.mxu0 0
  %1479 = vmatprep.subr.bf16.mxu0 0
  %1480 = vmatpush1.bf16.msra.mxu0 0
  %1481 = vmatprep.subr.bf16.mxu0 0
  %1482 = vmatpush1.bf16.msra.mxu0 0
  %1483 = vmatprep.subr.bf16.mxu0 0
  %1484 = vmatpush1.bf16.msra.mxu0 0
  %1485 = vmatprep.subr.bf16.mxu0 0
  %1486 = vmatpush1.bf16.msra.mxu0 0
  %1487 = vmatprep.subr.bf16.mxu0 0
  %1488 = vmatpush1.bf16.msra.mxu0 0
  %1489 = vmatprep.subr.bf16.mxu0 0
  %1490 = vmatpush1.bf16.msra.mxu0 0
  %1491 = vmatprep.subr.bf16.mxu0 0
  %1492 = vmatpush1.bf16.msra.mxu0 0
  %1493 = vmatprep.subr.bf16.mxu0 0
  %1494 = vmatpush1.bf16.msra.mxu0 0
  %1495 = vmatprep.subr.bf16.mxu0 0
  %1496 = vmatpush1.bf16.msra.mxu0 0
  %1497 = vmatprep.mubr.bf16.mxu0 0
  %1498 = vmatmul.mubr.bf16.gmra.mrb[0].mxu0 %v1460
  %v1499 = vpop.f32.mrb[0].mxu0
  %v1500 = vadd.f32 0.0, %v1499
  %v1501 = vpop.f32.mrb[0].mxu0
  %v1502 = vpop.f32.mrb[0].mxu0
  %v1503 = vpop.f32.mrb[0].mxu0
  %1504 = vdwg.mxu0
  %v1506 = vsel %vm99, %v1432, 0
  %v1509 = vsel %vm103, %v1431, 0
  %1511 = vmatprep.subr.bf16.mxu0 0
  %1512 = vmatpush1.bf16.msra.mxu0 %v1509
  %1513 = vmatprep.subr.bf16.mxu0 0
  %1514 = vmatpush1.bf16.msra.mxu0 0
  %1515 = vmatprep.subr.bf16.mxu0 0
  %1516 = vmatpush1.bf16.msra.mxu0 0
  %1517 = vmatprep.subr.bf16.mxu0 0
  %1518 = vmatpush1.bf16.msra.mxu0 0
  %1519 = vmatprep.subr.bf16.mxu0 0
  %1520 = vmatpush1.bf16.msra.mxu0 0
  %1521 = vmatprep.subr.bf16.mxu0 0
  %1522 = vmatpush1.bf16.msra.mxu0 0
  %1523 = vmatprep.subr.bf16.mxu0 0
  %1524 = vmatpush1.bf16.msra.mxu0 0
  %1525 = vmatprep.subr.bf16.mxu0 0
  %1526 = vmatpush1.bf16.msra.mxu0 0
  %1527 = vmatprep.subr.bf16.mxu0 0
  %1528 = vmatpush1.bf16.msra.mxu0 0
  %1529 = vmatprep.subr.bf16.mxu0 0
  %1530 = vmatpush1.bf16.msra.mxu0 0
  %1531 = vmatprep.subr.bf16.mxu0 0
  %1532 = vmatpush1.bf16.msra.mxu0 0
  %1533 = vmatprep.subr.bf16.mxu0 0
  %1534 = vmatpush1.bf16.msra.mxu0 0
  %1535 = vmatprep.subr.bf16.mxu0 0
  %1536 = vmatpush1.bf16.msra.mxu0 0
  %1537 = vmatprep.subr.bf16.mxu0 0
  %1538 = vmatpush1.bf16.msra.mxu0 0
  %1539 = vmatprep.subr.bf16.mxu0 0
  %1540 = vmatpush1.bf16.msra.mxu0 0
  %1541 = vmatprep.subr.bf16.mxu0 0
  %1542 = vmatpush1.bf16.msra.mxu0 0
  %1543 = vmatprep.mubr.bf16.mxu0 0
  %1544 = vmatmul.mubr.bf16.gmra.mrb[0].mxu0 %v1506
  %v1545 = vpop.f32.mrb[0].mxu0
  %v1546 = vadd.f32 %v1500, %v1545
  %v1547 = vpop.f32.mrb[0].mxu0
  %v1548 = vpop.f32.mrb[0].mxu0
  %v1549 = vpop.f32.mrb[0].mxu0
  %1550 = vdwg.mxu0
  %v1551 = vld [vmem:[%s1] sm:$0x2]
  %v1553 = vpack.i.b16 %v1551, %v1551
  %v1555 = vlaneseq
  %v1556 = vshrl.u32 %v1555, 7
  %v1557 = vsub.s32 1, %v1556
  %v1558 = vrot.slane %v1553, %v1557
  %1560 = vrot.lane.b32.xlu0 %v1558, 2
  %v1561 = vpop.permute.xlu0 %1560
  %v1563 = vmul.bf16 %v1422, %v1561
  %v1564 = vmul.bf16 %v1433, %v1561
  %1565 = vrot.lane.b32.xlu0 %v1449, 120
  %v1566 = vpop.permute.xlu0 %1565
  %1569 = vrot.lane.b32.xlu0 %v1563, 126
  %v1570 = vpop.permute.xlu0 %1569
  %1571 = vrot.lane.b32.xlu0 %v1564, 126
  %v1572 = vpop.permute.xlu0 %1571
  %v1573 = vsel %vm880, %v1570, %v1572
  %v1575 = vsel %vm99, %v1566, 0
  %v1578 = vsel %vm103, %v1573, 0
  %1580 = vmatprep.subr.bf16.mxu0 0
  %1581 = vmatpush1.bf16.msra.mxu0 %v1578
  %1582 = vmatprep.subr.bf16.mxu0 0
  %1583 = vmatpush1.bf16.msra.mxu0 0
  %1584 = vmatprep.subr.bf16.mxu0 0
  %1585 = vmatpush1.bf16.msra.mxu0 0
  %1586 = vmatprep.subr.bf16.mxu0 0
  %1587 = vmatpush1.bf16.msra.mxu0 0
  %1588 = vmatprep.subr.bf16.mxu0 0
  %1589 = vmatpush1.bf16.msra.mxu0 0
  %1590 = vmatprep.subr.bf16.mxu0 0
  %1591 = vmatpush1.bf16.msra.mxu0 0
  %1592 = vmatprep.subr.bf16.mxu0 0
  %1593 = vmatpush1.bf16.msra.mxu0 0
  %1594 = vmatprep.subr.bf16.mxu0 0
  %1595 = vmatpush1.bf16.msra.mxu0 0
  %1596 = vmatprep.subr.bf16.mxu0 0
  %1597 = vmatpush1.bf16.msra.mxu0 0
  %1598 = vmatprep.subr.bf16.mxu0 0
  %1599 = vmatpush1.bf16.msra.mxu0 0
  %1600 = vmatprep.subr.bf16.mxu0 0
  %1601 = vmatpush1.bf16.msra.mxu0 0
  %1602 = vmatprep.subr.bf16.mxu0 0
  %1603 = vmatpush1.bf16.msra.mxu0 0
  %1604 = vmatprep.subr.bf16.mxu0 0
  %1605 = vmatpush1.bf16.msra.mxu0 0
  %1606 = vmatprep.subr.bf16.mxu0 0
  %1607 = vmatpush1.bf16.msra.mxu0 0
  %1608 = vmatprep.subr.bf16.mxu0 0
  %1609 = vmatpush1.bf16.msra.mxu0 0
  %1610 = vmatprep.subr.bf16.mxu0 0
  %1611 = vmatpush1.bf16.msra.mxu0 0
  %1612 = vmatprep.mubr.bf16.mxu0 0
  %1613 = vmatmul.mubr.bf16.gmra.mrb[0].mxu0 %v1575
  %v1614 = vpop.f32.mrb[0].mxu0
  %v1615 = vadd.f32 0.0, %v1614
  %v1616 = vpop.f32.mrb[0].mxu0
  %v1617 = vpop.f32.mrb[0].mxu0
  %v1618 = vpop.f32.mrb[0].mxu0
  %1619 = vdwg.mxu0
  %v1620 = vadd.f32 %v1546, %v1615
  %v1621 = vshrl.u32 %v1551, 16
  %v1622 = vpack.i.b16 %v1621, %v1621
  %v1624 = vlaneseq
  %v1625 = vshrl.u32 %v1624, 7
  %v1626 = vsub.s32 1, %v1625
  %v1627 = vrot.slane %v1622, %v1626
  %1629 = vrot.lane.b32.xlu0 %v1627, 8
  %v1630 = vpop.permute.xlu0 %1629
  %v1632 = vmul.bf16 %v1422, %v1630
  %v1633 = vmul.bf16 %v1433, %v1630
  %1634 = vrot.lane.b32.xlu0 %v1449, 116
  %v1635 = vpop.permute.xlu0 %1634
  %1638 = vrot.lane.b32.xlu0 %v1632, 120
  %v1639 = vpop.permute.xlu0 %1638
  %1640 = vrot.lane.b32.xlu0 %v1633, 120
  %v1641 = vpop.permute.xlu0 %1640
  %v1642 = vsel %vm302, %v1639, %v1641
  %v1644 = vsel %vm99, %v1635, 0
  %v1647 = vsel %vm103, %v1642, 0
  %1649 = vmatprep.subr.bf16.mxu0 0
  %1650 = vmatpush1.bf16.msra.mxu0 %v1647
  %1651 = vmatprep.subr.bf16.mxu0 0
  %1652 = vmatpush1.bf16.msra.mxu0 0
  %1653 = vmatprep.subr.bf16.mxu0 0
  %1654 = vmatpush1.bf16.msra.mxu0 0
  %1655 = vmatprep.subr.bf16.mxu0 0
  %1656 = vmatpush1.bf16.msra.mxu0 0
  %1657 = vmatprep.subr.bf16.mxu0 0
  %1658 = vmatpush1.bf16.msra.mxu0 0
  %1659 = vmatprep.subr.bf16.mxu0 0
  %1660 = vmatpush1.bf16.msra.mxu0 0
  %1661 = vmatprep.subr.bf16.mxu0 0
  %1662 = vmatpush1.bf16.msra.mxu0 0
  %1663 = vmatprep.subr.bf16.mxu0 0
  %1664 = vmatpush1.bf16.msra.mxu0 0
  %1665 = vmatprep.subr.bf16.mxu0 0
  %1666 = vmatpush1.bf16.msra.mxu0 0
  %1667 = vmatprep.subr.bf16.mxu0 0
  %1668 = vmatpush1.bf16.msra.mxu0 0
  %1669 = vmatprep.subr.bf16.mxu0 0
  %1670 = vmatpush1.bf16.msra.mxu0 0
  %1671 = vmatprep.subr.bf16.mxu0 0
  %1672 = vmatpush1.bf16.msra.mxu0 0
  %1673 = vmatprep.subr.bf16.mxu0 0
  %1674 = vmatpush1.bf16.msra.mxu0 0
  %1675 = vmatprep.subr.bf16.mxu0 0
  %1676 = vmatpush1.bf16.msra.mxu0 0
  %1677 = vmatprep.subr.bf16.mxu0 0
  %1678 = vmatpush1.bf16.msra.mxu0 0
  %1679 = vmatprep.subr.bf16.mxu0 0
  %1680 = vmatpush1.bf16.msra.mxu0 0
  %1681 = vmatprep.mubr.bf16.mxu0 0
  %1682 = vmatmul.mubr.bf16.gmra.mrb[0].mxu0 %v1644
  %v1683 = vpop.f32.mrb[0].mxu0
  %v1684 = vadd.f32 0.0, %v1683
  %v1685 = vpop.f32.mrb[0].mxu0
  %v1686 = vpop.f32.mrb[0].mxu0
  %v1687 = vpop.f32.mrb[0].mxu0
  %1688 = vdwg.mxu0
  %v1689 = vadd.f32 %v1620, %v1684
  %1690 = vrot.lane.b32.xlu0 %v1449, 112
  %v1691 = vpop.permute.xlu0 %1690
  %1694 = vrot.lane.b32.xlu0 %v1422, 119
  %v1695 = vpop.permute.xlu0 %1694
  %1696 = vrot.lane.b32.xlu0 %v1433, 119
  %v1697 = vpop.permute.xlu0 %1696
  %v1698 = vsel %vm370, %v1695, %v1697
  %v1700 = vsel %vm99, %v1691, 0
  %v1703 = vsel %vm103, %v1698, 0
  %1705 = vmatprep.subr.bf16.mxu0 0
  %1706 = vmatpush1.bf16.msra.mxu0 %v1703
  %1707 = vmatprep.subr.bf16.mxu0 0
  %1708 = vmatpush1.bf16.msra.mxu0 0
  %1709 = vmatprep.subr.bf16.mxu0 0
  %1710 = vmatpush1.bf16.msra.mxu0 0
  %1711 = vmatprep.subr.bf16.mxu0 0
  %1712 = vmatpush1.bf16.msra.mxu0 0
  %1713 = vmatprep.subr.bf16.mxu0 0
  %1714 = vmatpush1.bf16.msra.mxu0 0
  %1715 = vmatprep.subr.bf16.mxu0 0
  %1716 = vmatpush1.bf16.msra.mxu0 0
  %1717 = vmatprep.subr.bf16.mxu0 0
  %1718 = vmatpush1.bf16.msra.mxu0 0
  %1719 = vmatprep.subr.bf16.mxu0 0
  %1720 = vmatpush1.bf16.msra.mxu0 0
  %1721 = vmatprep.subr.bf16.mxu0 0
  %1722 = vmatpush1.bf16.msra.mxu0 0
  %1723 = vmatprep.subr.bf16.mxu0 0
  %1724 = vmatpush1.bf16.msra.mxu0 0
  %1725 = vmatprep.subr.bf16.mxu0 0
  %1726 = vmatpush1.bf16.msra.mxu0 0
  %1727 = vmatprep.subr.bf16.mxu0 0
  %1728 = vmatpush1.bf16.msra.mxu0 0
  %1729 = vmatprep.subr.bf16.mxu0 0
  %1730 = vmatpush1.bf16.msra.mxu0 0
  %1731 = vmatprep.subr.bf16.mxu0 0
  %1732 = vmatpush1.bf16.msra.mxu0 0
  %1733 = vmatprep.subr.bf16.mxu0 0
  %1734 = vmatpush1.bf16.msra.mxu0 0
  %1735 = vmatprep.subr.bf16.mxu0 0
  %1736 = vmatpush1.bf16.msra.mxu0 0
  %1737 = vmatprep.mubr.bf16.mxu0 0
  %1738 = vmatmul.mubr.bf16.gmra.mrb[0].mxu0 %v1700
  %v1739 = vpop.f32.mrb[0].mxu0
  %v1740 = vadd.f32 0.0, %v1739
  %v1741 = vpop.f32.mrb[0].mxu0
  %v1742 = vpop.f32.mrb[0].mxu0
  %v1743 = vpop.f32.mrb[0].mxu0
  %1744 = vdwg.mxu0
  %v1745 = vadd.f32 %v1689, %v1740
  %v1746 = vld [vmem:[%s1] sm:$0x4]
  %v1748 = vshrl.u32 %v1746, 16
  %v1749 = vpack.i.b16 %v1748, %v1748
  %v1751 = vlaneseq
  %v1752 = vshrl.u32 %v1751, 7
  %v1753 = vsub.s32 2, %v1752
  %v1754 = vrot.slane %v1749, %v1753
  %1756 = vrot.lane.b32.xlu0 %v1754, 10
  %v1757 = vpop.permute.xlu0 %1756
  %v1759 = vmul.bf16 %v1422, %v1757
  %v1760 = vmul.bf16 %v1433, %v1757
  %1761 = vrot.lane.b32.xlu0 %v1449, 108
  %v1762 = vpop.permute.xlu0 %1761
  %1765 = vrot.lane.b32.xlu0 %v1759, 118
  %v1766 = vpop.permute.xlu0 %1765
  %1767 = vrot.lane.b32.xlu0 %v1760, 118
  %v1768 = vpop.permute.xlu0 %1767
  %v1769 = vsel %vm1112, %v1766, %v1768
  %v1771 = vsel %vm99, %v1762, 0
  %v1774 = vsel %vm103, %v1769, 0
  %1776 = vmatprep.subr.bf16.mxu0 0
  %1777 = vmatpush1.bf16.msra.mxu0 %v1774
  %1778 = vmatprep.subr.bf16.mxu0 0
  %1779 = vmatpush1.bf16.msra.mxu0 0
  %1780 = vmatprep.subr.bf16.mxu0 0
  %1781 = vmatpush1.bf16.msra.mxu0 0
  %1782 = vmatprep.subr.bf16.mxu0 0
  %1783 = vmatpush1.bf16.msra.mxu0 0
  %1784 = vmatprep.subr.bf16.mxu0 0
  %1785 = vmatpush1.bf16.msra.mxu0 0
  %1786 = vmatprep.subr.bf16.mxu0 0
  %1787 = vmatpush1.bf16.msra.mxu0 0
  %1788 = vmatprep.subr.bf16.mxu0 0
  %1789 = vmatpush1.bf16.msra.mxu0 0
  %1790 = vmatprep.subr.bf16.mxu0 0
  %1791 = vmatpush1.bf16.msra.mxu0 0
  %1792 = vmatprep.subr.bf16.mxu0 0
  %1793 = vmatpush1.bf16.msra.mxu0 0
  %1794 = vmatprep.subr.bf16.mxu0 0
  %1795 = vmatpush1.bf16.msra.mxu0 0
  %1796 = vmatprep.subr.bf16.mxu0 0
  %1797 = vmatpush1.bf16.msra.mxu0 0
  %1798 = vmatprep.subr.bf16.mxu0 0
  %1799 = vmatpush1.bf16.msra.mxu0 0
  %1800 = vmatprep.subr.bf16.mxu0 0
  %1801 = vmatpush1.bf16.msra.mxu0 0
  %1802 = vmatprep.subr.bf16.mxu0 0
  %1803 = vmatpush1.bf16.msra.mxu0 0
  %1804 = vmatprep.subr.bf16.mxu0 0
  %1805 = vmatpush1.bf16.msra.mxu0 0
  %1806 = vmatprep.subr.bf16.mxu0 0
  %1807 = vmatpush1.bf16.msra.mxu0 0
  %1808 = vmatprep.mubr.bf16.mxu0 0
  %1809 = vmatmul.mubr.bf16.gmra.mrb[0].mxu0 %v1771
  %v1810 = vpop.f32.mrb[0].mxu0
  %v1811 = vadd.f32 0.0, %v1810
  %v1812 = vpop.f32.mrb[0].mxu0
  %v1813 = vpop.f32.mrb[0].mxu0
  %v1814 = vpop.f32.mrb[0].mxu0
  %1815 = vdwg.mxu0
  %v1816 = vadd.f32 %v1745, %v1811
  %v1817 = vld [vmem:[%s1] sm:$0x8]
  %v1819 = vpack.i.b16 %v1817, %v1817
  %v1821 = vlaneseq
  %v1822 = vshrl.u32 %v1821, 7
  %v1823 = vsub.s32 3, %v1822
  %v1824 = vrot.slane %v1819, %v1823
  %1826 = vrot.lane.b32.xlu0 %v1824, 16
  %v1827 = vpop.permute.xlu0 %1826
  %v1829 = vmul.bf16 %v1422, %v1827
  %v1830 = vmul.bf16 %v1433, %v1827
  %1831 = vrot.lane.b32.xlu0 %v1449, 104
  %v1832 = vpop.permute.xlu0 %1831
  %1835 = vrot.lane.b32.xlu0 %v1829, 112
  %v1836 = vpop.permute.xlu0 %1835
  %1837 = vrot.lane.b32.xlu0 %v1830, 112
  %v1838 = vpop.permute.xlu0 %1837
  %v1839 = vsel %vm1194, %v1836, %v1838
  %v1841 = vsel %vm99, %v1832, 0
  %v1844 = vsel %vm103, %v1839, 0
  %1846 = vmatprep.subr.bf16.mxu0 0
  %1847 = vmatpush1.bf16.msra.mxu0 %v1844
  %1848 = vmatprep.subr.bf16.mxu0 0
  %1849 = vmatpush1.bf16.msra.mxu0 0
  %1850 = vmatprep.subr.bf16.mxu0 0
  %1851 = vmatpush1.bf16.msra.mxu0 0
  %1852 = vmatprep.subr.bf16.mxu0 0
  %1853 = vmatpush1.bf16.msra.mxu0 0
  %1854 = vmatprep.subr.bf16.mxu0 0
  %1855 = vmatpush1.bf16.msra.mxu0 0
  %1856 = vmatprep.subr.bf16.mxu0 0
  %1857 = vmatpush1.bf16.msra.mxu0 0
  %1858 = vmatprep.subr.bf16.mxu0 0
  %1859 = vmatpush1.bf16.msra.mxu0 0
  %1860 = vmatprep.subr.bf16.mxu0 0
  %1861 = vmatpush1.bf16.msra.mxu0 0
  %1862 = vmatprep.subr.bf16.mxu0 0
  %1863 = vmatpush1.bf16.msra.mxu0 0
  %1864 = vmatprep.subr.bf16.mxu0 0
  %1865 = vmatpush1.bf16.msra.mxu0 0
  %1866 = vmatprep.subr.bf16.mxu0 0
  %1867 = vmatpush1.bf16.msra.mxu0 0
  %1868 = vmatprep.subr.bf16.mxu0 0
  %1869 = vmatpush1.bf16.msra.mxu0 0
  %1870 = vmatprep.subr.bf16.mxu0 0
  %1871 = vmatpush1.bf16.msra.mxu0 0
  %1872 = vmatprep.subr.bf16.mxu0 0
  %1873 = vmatpush1.bf16.msra.mxu0 0
  %1874 = vmatprep.subr.bf16.mxu0 0
  %1875 = vmatpush1.bf16.msra.mxu0 0
  %1876 = vmatprep.subr.bf16.mxu0 0
  %1877 = vmatpush1.bf16.msra.mxu0 0
  %1878 = vmatprep.mubr.bf16.mxu0 0
  %1879 = vmatmul.mubr.bf16.gmra.mrb[0].mxu0 %v1841
  %v1880 = vpop.f32.mrb[0].mxu0
  %v1881 = vadd.f32 0.0, %v1880
  %v1882 = vpop.f32.mrb[0].mxu0
  %v1883 = vpop.f32.mrb[0].mxu0
  %v1884 = vpop.f32.mrb[0].mxu0
  %1885 = vdwg.mxu0
  %v1886 = vadd.f32 %v1816, %v1881
  %v1887 = vshrl.u32 %v1817, 16
  %v1888 = vpack.i.b16 %v1887, %v1887
  %v1890 = vlaneseq
  %v1891 = vshrl.u32 %v1890, 7
  %v1892 = vsub.s32 3, %v1891
  %v1893 = vrot.slane %v1888, %v1892
  %1895 = vrot.lane.b32.xlu0 %v1893, 17
  %v1896 = vpop.permute.xlu0 %1895
  %v1898 = vmul.bf16 %v1422, %v1896
  %v1899 = vmul.bf16 %v1433, %v1896
  %1900 = vrot.lane.b32.xlu0 %v1449, 100
  %v1901 = vpop.permute.xlu0 %1900
  %1904 = vrot.lane.b32.xlu0 %v1898, 111
  %v1905 = vpop.permute.xlu0 %1904
  %1906 = vrot.lane.b32.xlu0 %v1899, 111
  %v1907 = vpop.permute.xlu0 %1906
  %v1908 = vsel %vm1277, %v1905, %v1907
  %v1910 = vsel %vm99, %v1901, 0
  %v1913 = vsel %vm103, %v1908, 0
  %1915 = vmatprep.subr.bf16.mxu0 0
  %1916 = vmatpush1.bf16.msra.mxu0 %v1913
  %1917 = vmatprep.subr.bf16.mxu0 0
  %1918 = vmatpush1.bf16.msra.mxu0 0
  %1919 = vmatprep.subr.bf16.mxu0 0
  %1920 = vmatpush1.bf16.msra.mxu0 0
  %1921 = vmatprep.subr.bf16.mxu0 0
  %1922 = vmatpush1.bf16.msra.mxu0 0
  %1923 = vmatprep.subr.bf16.mxu0 0
  %1924 = vmatpush1.bf16.msra.mxu0 0
  %1925 = vmatprep.subr.bf16.mxu0 0
  %1926 = vmatpush1.bf16.msra.mxu0 0
  %1927 = vmatprep.subr.bf16.mxu0 0
  %1928 = vmatpush1.bf16.msra.mxu0 0
  %1929 = vmatprep.subr.bf16.mxu0 0
  %1930 = vmatpush1.bf16.msra.mxu0 0
  %1931 = vmatprep.subr.bf16.mxu0 0
  %1932 = vmatpush1.bf16.msra.mxu0 0
  %1933 = vmatprep.subr.bf16.mxu0 0
  %1934 = vmatpush1.bf16.msra.mxu0 0
  %1935 = vmatprep.subr.bf16.mxu0 0
  %1936 = vmatpush1.bf16.msra.mxu0 0
  %1937 = vmatprep.subr.bf16.mxu0 0
  %1938 = vmatpush1.bf16.msra.mxu0 0
  %1939 = vmatprep.subr.bf16.mxu0 0
  %1940 = vmatpush1.bf16.msra.mxu0 0
  %1941 = vmatprep.subr.bf16.mxu0 0
  %1942 = vmatpush1.bf16.msra.mxu0 0
  %1943 = vmatprep.subr.bf16.mxu0 0
  %1944 = vmatpush1.bf16.msra.mxu0 0
  %1945 = vmatprep.subr.bf16.mxu0 0
  %1946 = vmatpush1.bf16.msra.mxu0 0
  %1947 = vmatprep.mubr.bf16.mxu0 0
  %1948 = vmatmul.mubr.bf16.gmra.mrb[0].mxu0 %v1910
  %v1949 = vpop.f32.mrb[0].mxu0
  %v1950 = vadd.f32 0.0, %v1949
  %v1951 = vpop.f32.mrb[0].mxu0
  %v1952 = vpop.f32.mrb[0].mxu0
  %v1953 = vpop.f32.mrb[0].mxu0
  %1954 = vdwg.mxu0
  %v1955 = vadd.f32 %v1886, %v1950
  %v1956 = vld [vmem:[%s1 + $0x4] sm:$0x1]
  %v1958 = vpack.i.b16 %v1956, %v1956
  %v1960 = vlaneseq
  %v1961 = vshrl.u32 %v1960, 7
  %v1962 = vsub.s32 0, %v1961
  %v1963 = vrot.slane %v1958, %v1962
  %1965 = vrot.lane.b32.xlu0 %v1963, 18
  %v1966 = vpop.permute.xlu0 %1965
  %v1968 = vmul.bf16 %v1422, %v1966
  %v1969 = vmul.bf16 %v1433, %v1966
  %1970 = vrot.lane.b32.xlu0 %v1449, 96
  %v1971 = vpop.permute.xlu0 %1970
  %1974 = vrot.lane.b32.xlu0 %v1968, 110
  %v1975 = vpop.permute.xlu0 %1974
  %1976 = vrot.lane.b32.xlu0 %v1969, 110
  %v1977 = vpop.permute.xlu0 %1976
  %v1978 = vsel %vm1359, %v1975, %v1977
  %v1980 = vsel %vm99, %v1971, 0
  %v1983 = vsel %vm103, %v1978, 0
  %1985 = vmatprep.subr.bf16.mxu0 0
  %1986 = vmatpush1.bf16.msra.mxu0 %v1983
  %1987 = vmatprep.subr.bf16.mxu0 0
  %1988 = vmatpush1.bf16.msra.mxu0 0
  %1989 = vmatprep.subr.bf16.mxu0 0
  %1990 = vmatpush1.bf16.msra.mxu0 0
  %1991 = vmatprep.subr.bf16.mxu0 0
  %1992 = vmatpush1.bf16.msra.mxu0 0
  %1993 = vmatprep.subr.bf16.mxu0 0
  %1994 = vmatpush1.bf16.msra.mxu0 0
  %1995 = vmatprep.subr.bf16.mxu0 0
  %1996 = vmatpush1.bf16.msra.mxu0 0
  %1997 = vmatprep.subr.bf16.mxu0 0
  %1998 = vmatpush1.bf16.msra.mxu0 0
  %1999 = vmatprep.subr.bf16.mxu0 0
  %2000 = vmatpush1.bf16.msra.mxu0 0
  %2001 = vmatprep.subr.bf16.mxu0 0
  %2002 = vmatpush1.bf16.msra.mxu0 0
  %2003 = vmatprep.subr.bf16.mxu0 0
  %2004 = vmatpush1.bf16.msra.mxu0 0
  %2005 = vmatprep.subr.bf16.mxu0 0
  %2006 = vmatpush1.bf16.msra.mxu0 0
  %2007 = vmatprep.subr.bf16.mxu0 0
  %2008 = vmatpush1.bf16.msra.mxu0 0
  %2009 = vmatprep.subr.bf16.mxu0 0
  %2010 = vmatpush1.bf16.msra.mxu0 0
  %2011 = vmatprep.subr.bf16.mxu0 0
  %2012 = vmatpush1.bf16.msra.mxu0 0
  %2013 = vmatprep.subr.bf16.mxu0 0
  %2014 = vmatpush1.bf16.msra.mxu0 0
  %2015 = vmatprep.subr.bf16.mxu0 0
  %2016 = vmatpush1.bf16.msra.mxu0 0
  %2017 = vmatprep.mubr.bf16.mxu0 0
  %2018 = vmatmul.mubr.bf16.gmra.mrb[0].mxu0 %v1980
  %v2019 = vpop.f32.mrb[0].mxu0
  %v2020 = vadd.f32 0.0, %v2019
  %v2021 = vpop.f32.mrb[0].mxu0
  %v2022 = vpop.f32.mrb[0].mxu0
  %v2023 = vpop.f32.mrb[0].mxu0
  %2024 = vdwg.mxu0
  %v2025 = vadd.f32 %v1955, %v2020
  %v2026 = vld [vmem:[%s7] sm:$0xff]
  %2028 = vset.pattern.permute.xlu0 0
  %2029 = vperm.xlu0 %2028, %v2026
  %v2030 = vpop.permute.xlu0 %2029
  %v2032 = vadd.f32 %v2025, %v2030
  %v2033 = vmax.f32 %v2032, 0.0
  %v2034 = vpack.c.bf16 %v2033, %v2033
  %2036 = vrot.lane.b32.xlu0 %v2034, 9
  %v2037 = vpop.permute.xlu0 %2036
  %2039 = vst.msk [vmem:[#allocation2] sm:$0x3] %vm709, %v2037
  %2040 = vst.msk [vmem:[#allocation2 + $0x8] sm:$0x3] %vm711, %v2037
  %v2041 = vld [vmem:[#allocation2] sm:$0x3]
  %v2042 = vld [vmem:[%s1] sm:$0x1]
  %v2044 = vpack.i.b16 %v2042, %v2042
  %v2046 = vlaneseq
  %v2047 = vshrl.u32 %v2046, 7
  %v2048 = vsub.s32 0, %v2047
  %v2049 = vrot.slane %v2044, %v2048
  %v2050 = vmul.bf16 %v2041, %v2049
  %v2051 = vld [vmem:[%s8] sm:$0x3]
  %v2052 = vld [vmem:[#allocation2 + $0x8] sm:$0x3]
  %v2053 = vshrl.u32 %v2042, 16
  %v2054 = vpack.i.b16 %v2053, %v2053
  %v2056 = vlaneseq
  %v2057 = vshrl.u32 %v2056, 7
  %v2058 = vsub.s32 0, %v2057
  %v2059 = vrot.slane %v2054, %v2058
  %2061 = vrot.lane.b32.xlu0 %v2059, 1
  %v2062 = vpop.permute.xlu0 %2061
  %v2064 = vmul.bf16 %v2041, %v2062
  %v2065 = vmul.bf16 %v2052, %v2062
  %v2068 = vunpack.c.l.s4 1983009808
  %v2069 = vunpack.c.0.s8 %v2068
  %v2070 = vlaneseq
  %v2071 = vshrl.u32 %v2070, 7
  %v2072 = vsub.s32 %v2069, %v2071
  %v2073 = vrot.slane %v2051, %v2072
  %2074 = vrot.lane.b32.xlu0 %v2073, 124
  %v2075 = vpop.permute.xlu0 %2074
  %2078 = vrot.lane.b32.xlu0 %v2064, 127
  %v2079 = vpop.permute.xlu0 %2078
  %2080 = vrot.lane.b32.xlu0 %v2065, 127
  %v2081 = vpop.permute.xlu0 %2080
  %v2082 = vsel %vm97, %v2079, %v2081
  %v2084 = vsel %vm99, %v2075, 0
  %v2087 = vsel %vm103, %v2082, 0
  %2089 = vmatprep.subr.bf16.mxu0 0
  %2090 = vmatpush1.bf16.msra.mxu0 %v2087
  %2091 = vmatprep.subr.bf16.mxu0 0
  %2092 = vmatpush1.bf16.msra.mxu0 0
  %2093 = vmatprep.subr.bf16.mxu0 0
  %2094 = vmatpush1.bf16.msra.mxu0 0
  %2095 = vmatprep.subr.bf16.mxu0 0
  %2096 = vmatpush1.bf16.msra.mxu0 0
  %2097 = vmatprep.subr.bf16.mxu0 0
  %2098 = vmatpush1.bf16.msra.mxu0 0
  %2099 = vmatprep.subr.bf16.mxu0 0
  %2100 = vmatpush1.bf16.msra.mxu0 0
  %2101 = vmatprep.subr.bf16.mxu0 0
  %2102 = vmatpush1.bf16.msra.mxu0 0
  %2103 = vmatprep.subr.bf16.mxu0 0
  %2104 = vmatpush1.bf16.msra.mxu0 0
  %2105 = vmatprep.subr.bf16.mxu0 0
  %2106 = vmatpush1.bf16.msra.mxu0 0
  %2107 = vmatprep.subr.bf16.mxu0 0
  %2108 = vmatpush1.bf16.msra.mxu0 0
  %2109 = vmatprep.subr.bf16.mxu0 0
  %2110 = vmatpush1.bf16.msra.mxu0 0
  %2111 = vmatprep.subr.bf16.mxu0 0
  %2112 = vmatpush1.bf16.msra.mxu0 0
  %2113 = vmatprep.subr.bf16.mxu0 0
  %2114 = vmatpush1.bf16.msra.mxu0 0
  %2115 = vmatprep.subr.bf16.mxu0 0
  %2116 = vmatpush1.bf16.msra.mxu0 0
  %2117 = vmatprep.subr.bf16.mxu0 0
  %2118 = vmatpush1.bf16.msra.mxu0 0
  %2119 = vmatprep.subr.bf16.mxu0 0
  %2120 = vmatpush1.bf16.msra.mxu0 0
  %2121 = vmatprep.mubr.bf16.mxu0 0
  %2122 = vmatmul.mubr.bf16.gmra.mrb[0].mxu0 %v2084
  %v2123 = vpop.f32.mrb[0].mxu0
  %v2124 = vadd.f32 0.0, %v2123
  %v2125 = vpop.f32.mrb[0].mxu0
  %v2126 = vpop.f32.mrb[0].mxu0
  %v2127 = vpop.f32.mrb[0].mxu0
  %2128 = vdwg.mxu0
  %v2130 = vsel %vm99, %v2051, 0
  %v2133 = vsel %vm103, %v2050, 0
  %2135 = vmatprep.subr.bf16.mxu0 0
  %2136 = vmatpush1.bf16.msra.mxu0 %v2133
  %2137 = vmatprep.subr.bf16.mxu0 0
  %2138 = vmatpush1.bf16.msra.mxu0 0
  %2139 = vmatprep.subr.bf16.mxu0 0
  %2140 = vmatpush1.bf16.msra.mxu0 0
  %2141 = vmatprep.subr.bf16.mxu0 0
  %2142 = vmatpush1.bf16.msra.mxu0 0
  %2143 = vmatprep.subr.bf16.mxu0 0
  %2144 = vmatpush1.bf16.msra.mxu0 0
  %2145 = vmatprep.subr.bf16.mxu0 0
  %2146 = vmatpush1.bf16.msra.mxu0 0
  %2147 = vmatprep.subr.bf16.mxu0 0
  %2148 = vmatpush1.bf16.msra.mxu0 0
  %2149 = vmatprep.subr.bf16.mxu0 0
  %2150 = vmatpush1.bf16.msra.mxu0 0
  %2151 = vmatprep.subr.bf16.mxu0 0
  %2152 = vmatpush1.bf16.msra.mxu0 0
  %2153 = vmatprep.subr.bf16.mxu0 0
  %2154 = vmatpush1.bf16.msra.mxu0 0
  %2155 = vmatprep.subr.bf16.mxu0 0
  %2156 = vmatpush1.bf16.msra.mxu0 0
  %2157 = vmatprep.subr.bf16.mxu0 0
  %2158 = vmatpush1.bf16.msra.mxu0 0
  %2159 = vmatprep.subr.bf16.mxu0 0
  %2160 = vmatpush1.bf16.msra.mxu0 0
  %2161 = vmatprep.subr.bf16.mxu0 0
  %2162 = vmatpush1.bf16.msra.mxu0 0
  %2163 = vmatprep.subr.bf16.mxu0 0
  %2164 = vmatpush1.bf16.msra.mxu0 0
  %2165 = vmatprep.subr.bf16.mxu0 0
  %2166 = vmatpush1.bf16.msra.mxu0 0
  %2167 = vmatprep.mubr.bf16.mxu0 0
  %2168 = vmatmul.mubr.bf16.gmra.mrb[0].mxu0 %v2130
  %v2169 = vpop.f32.mrb[0].mxu0
  %v2170 = vadd.f32 %v2124, %v2169
  %v2171 = vpop.f32.mrb[0].mxu0
  %v2172 = vpop.f32.mrb[0].mxu0
  %v2173 = vpop.f32.mrb[0].mxu0
  %2174 = vdwg.mxu0
  %v2175 = vld [vmem:[#allocation2] sm:$0x3]
  %v2176 = vld [vmem:[#allocation2 + $0x8] sm:$0x3]
  %v2177 = vld [vmem:[%s1] sm:$0x2]
  %v2179 = vpack.i.b16 %v2177, %v2177
  %v2181 = vlaneseq
  %v2182 = vshrl.u32 %v2181, 7
  %v2183 = vsub.s32 1, %v2182
  %v2184 = vrot.slane %v2179, %v2183
  %2186 = vrot.lane.b32.xlu0 %v2184, 2
  %v2187 = vpop.permute.xlu0 %2186
  %v2189 = vmul.bf16 %v2175, %v2187
  %v2190 = vmul.bf16 %v2176, %v2187
  %v2191 = vld [vmem:[%s8] sm:$0x3]
  %v2194 = vunpack.c.l.s4 1983009808
  %v2195 = vunpack.c.0.s8 %v2194
  %v2196 = vlaneseq
  %v2197 = vshrl.u32 %v2196, 7
  %v2198 = vsub.s32 %v2195, %v2197
  %v2199 = vrot.slane %v2191, %v2198
  %2200 = vrot.lane.b32.xlu0 %v2199, 120
  %v2201 = vpop.permute.xlu0 %2200
  %2204 = vrot.lane.b32.xlu0 %v2189, 126
  %v2205 = vpop.permute.xlu0 %2204
  %2206 = vrot.lane.b32.xlu0 %v2190, 126
  %v2207 = vpop.permute.xlu0 %2206
  %v2208 = vsel %vm880, %v2205, %v2207
  %v2210 = vsel %vm99, %v2201, 0
  %v2213 = vsel %vm103, %v2208, 0
  %2215 = vmatprep.subr.bf16.mxu0 0
  %2216 = vmatpush1.bf16.msra.mxu0 %v2213
  %2217 = vmatprep.subr.bf16.mxu0 0
  %2218 = vmatpush1.bf16.msra.mxu0 0
  %2219 = vmatprep.subr.bf16.mxu0 0
  %2220 = vmatpush1.bf16.msra.mxu0 0
  %2221 = vmatprep.subr.bf16.mxu0 0
  %2222 = vmatpush1.bf16.msra.mxu0 0
  %2223 = vmatprep.subr.bf16.mxu0 0
  %2224 = vmatpush1.bf16.msra.mxu0 0
  %2225 = vmatprep.subr.bf16.mxu0 0
  %2226 = vmatpush1.bf16.msra.mxu0 0
  %2227 = vmatprep.subr.bf16.mxu0 0
  %2228 = vmatpush1.bf16.msra.mxu0 0
  %2229 = vmatprep.subr.bf16.mxu0 0
  %2230 = vmatpush1.bf16.msra.mxu0 0
  %2231 = vmatprep.subr.bf16.mxu0 0
  %2232 = vmatpush1.bf16.msra.mxu0 0
  %2233 = vmatprep.subr.bf16.mxu0 0
  %2234 = vmatpush1.bf16.msra.mxu0 0
  %2235 = vmatprep.subr.bf16.mxu0 0
  %2236 = vmatpush1.bf16.msra.mxu0 0
  %2237 = vmatprep.subr.bf16.mxu0 0
  %2238 = vmatpush1.bf16.msra.mxu0 0
  %2239 = vmatprep.subr.bf16.mxu0 0
  %2240 = vmatpush1.bf16.msra.mxu0 0
  %2241 = vmatprep.subr.bf16.mxu0 0
  %2242 = vmatpush1.bf16.msra.mxu0 0
  %2243 = vmatprep.subr.bf16.mxu0 0
  %2244 = vmatpush1.bf16.msra.mxu0 0
  %2245 = vmatprep.subr.bf16.mxu0 0
  %2246 = vmatpush1.bf16.msra.mxu0 0
  %2247 = vmatprep.mubr.bf16.mxu0 0
  %2248 = vmatmul.mubr.bf16.gmra.mrb[0].mxu0 %v2210
  %v2249 = vpop.f32.mrb[0].mxu0
  %v2250 = vadd.f32 0.0, %v2249
  %v2251 = vpop.f32.mrb[0].mxu0
  %v2252 = vpop.f32.mrb[0].mxu0
  %v2253 = vpop.f32.mrb[0].mxu0
  %2254 = vdwg.mxu0
  %v2255 = vadd.f32 %v2170, %v2250
  %v2256 = vld [vmem:[#allocation2] sm:$0x3]
  %v2257 = vld [vmem:[#allocation2 + $0x8] sm:$0x3]
  %v2258 = vld [vmem:[%s1] sm:$0x2]
  %v2260 = vshrl.u32 %v2258, 16
  %v2261 = vpack.i.b16 %v2260, %v2260
  %v2263 = vlaneseq
  %v2264 = vshrl.u32 %v2263, 7
  %v2265 = vsub.s32 1, %v2264
  %v2266 = vrot.slane %v2261, %v2265
  %2268 = vrot.lane.b32.xlu0 %v2266, 8
  %v2269 = vpop.permute.xlu0 %2268
  %v2271 = vmul.bf16 %v2256, %v2269
  %v2272 = vmul.bf16 %v2257, %v2269
  %v2273 = vld [vmem:[%s8] sm:$0x3]
  %v2276 = vunpack.c.l.s4 1983009808
  %v2277 = vunpack.c.0.s8 %v2276
  %v2278 = vlaneseq
  %v2279 = vshrl.u32 %v2278, 7
  %v2280 = vsub.s32 %v2277, %v2279
  %v2281 = vrot.slane %v2273, %v2280
  %2282 = vrot.lane.b32.xlu0 %v2281, 116
  %v2283 = vpop.permute.xlu0 %2282
  %2286 = vrot.lane.b32.xlu0 %v2271, 120
  %v2287 = vpop.permute.xlu0 %2286
  %2288 = vrot.lane.b32.xlu0 %v2272, 120
  %v2289 = vpop.permute.xlu0 %2288
  %v2290 = vsel %vm302, %v2287, %v2289
  %v2292 = vsel %vm99, %v2283, 0
  %v2295 = vsel %vm103, %v2290, 0
  %2297 = vmatprep.subr.bf16.mxu0 0
  %2298 = vmatpush1.bf16.msra.mxu0 %v2295
  %2299 = vmatprep.subr.bf16.mxu0 0
  %2300 = vmatpush1.bf16.msra.mxu0 0
  %2301 = vmatprep.subr.bf16.mxu0 0
  %2302 = vmatpush1.bf16.msra.mxu0 0
  %2303 = vmatprep.subr.bf16.mxu0 0
  %2304 = vmatpush1.bf16.msra.mxu0 0
  %2305 = vmatprep.subr.bf16.mxu0 0
  %2306 = vmatpush1.bf16.msra.mxu0 0
  %2307 = vmatprep.subr.bf16.mxu0 0
  %2308 = vmatpush1.bf16.msra.mxu0 0
  %2309 = vmatprep.subr.bf16.mxu0 0
  %2310 = vmatpush1.bf16.msra.mxu0 0
  %2311 = vmatprep.subr.bf16.mxu0 0
  %2312 = vmatpush1.bf16.msra.mxu0 0
  %2313 = vmatprep.subr.bf16.mxu0 0
  %2314 = vmatpush1.bf16.msra.mxu0 0
  %2315 = vmatprep.subr.bf16.mxu0 0
  %2316 = vmatpush1.bf16.msra.mxu0 0
  %2317 = vmatprep.subr.bf16.mxu0 0
  %2318 = vmatpush1.bf16.msra.mxu0 0
  %2319 = vmatprep.subr.bf16.mxu0 0
  %2320 = vmatpush1.bf16.msra.mxu0 0
  %2321 = vmatprep.subr.bf16.mxu0 0
  %2322 = vmatpush1.bf16.msra.mxu0 0
  %2323 = vmatprep.subr.bf16.mxu0 0
  %2324 = vmatpush1.bf16.msra.mxu0 0
  %2325 = vmatprep.subr.bf16.mxu0 0
  %2326 = vmatpush1.bf16.msra.mxu0 0
  %2327 = vmatprep.subr.bf16.mxu0 0
  %2328 = vmatpush1.bf16.msra.mxu0 0
  %2329 = vmatprep.mubr.bf16.mxu0 0
  %2330 = vmatmul.mubr.bf16.gmra.mrb[0].mxu0 %v2292
  %v2331 = vpop.f32.mrb[0].mxu0
  %v2332 = vadd.f32 0.0, %v2331
  %v2333 = vpop.f32.mrb[0].mxu0
  %v2334 = vpop.f32.mrb[0].mxu0
  %v2335 = vpop.f32.mrb[0].mxu0
  %2336 = vdwg.mxu0
  %v2337 = vadd.f32 %v2255, %v2332
  %v2338 = vld [vmem:[#allocation2] sm:$0x3]
  %v2339 = vld [vmem:[#allocation2 + $0x8] sm:$0x3]
  %v2340 = vld [vmem:[%s8] sm:$0x3]
  %v2343 = vunpack.c.l.s4 1983009808
  %v2344 = vunpack.c.0.s8 %v2343
  %v2345 = vlaneseq
  %v2346 = vshrl.u32 %v2345, 7
  %v2347 = vsub.s32 %v2344, %v2346
  %v2348 = vrot.slane %v2340, %v2347
  %2349 = vrot.lane.b32.xlu0 %v2348, 112
  %v2350 = vpop.permute.xlu0 %2349
  %2353 = vrot.lane.b32.xlu0 %v2338, 119
  %v2354 = vpop.permute.xlu0 %2353
  %2355 = vrot.lane.b32.xlu0 %v2339, 119
  %v2356 = vpop.permute.xlu0 %2355
  %v2357 = vsel %vm370, %v2354, %v2356
  %v2359 = vsel %vm99, %v2350, 0
  %v2362 = vsel %vm103, %v2357, 0
  %2364 = vmatprep.subr.bf16.mxu0 0
  %2365 = vmatpush1.bf16.msra.mxu0 %v2362
  %2366 = vmatprep.subr.bf16.mxu0 0
  %2367 = vmatpush1.bf16.msra.mxu0 0
  %2368 = vmatprep.subr.bf16.mxu0 0
  %2369 = vmatpush1.bf16.msra.mxu0 0
  %2370 = vmatprep.subr.bf16.mxu0 0
  %2371 = vmatpush1.bf16.msra.mxu0 0
  %2372 = vmatprep.subr.bf16.mxu0 0
  %2373 = vmatpush1.bf16.msra.mxu0 0
  %2374 = vmatprep.subr.bf16.mxu0 0
  %2375 = vmatpush1.bf16.msra.mxu0 0
  %2376 = vmatprep.subr.bf16.mxu0 0
  %2377 = vmatpush1.bf16.msra.mxu0 0
  %2378 = vmatprep.subr.bf16.mxu0 0
  %2379 = vmatpush1.bf16.msra.mxu0 0
  %2380 = vmatprep.subr.bf16.mxu0 0
  %2381 = vmatpush1.bf16.msra.mxu0 0
  %2382 = vmatprep.subr.bf16.mxu0 0
  %2383 = vmatpush1.bf16.msra.mxu0 0
  %2384 = vmatprep.subr.bf16.mxu0 0
  %2385 = vmatpush1.bf16.msra.mxu0 0
  %2386 = vmatprep.subr.bf16.mxu0 0
  %2387 = vmatpush1.bf16.msra.mxu0 0
  %2388 = vmatprep.subr.bf16.mxu0 0
  %2389 = vmatpush1.bf16.msra.mxu0 0
  %2390 = vmatprep.subr.bf16.mxu0 0
  %2391 = vmatpush1.bf16.msra.mxu0 0
  %2392 = vmatprep.subr.bf16.mxu0 0
  %2393 = vmatpush1.bf16.msra.mxu0 0
  %2394 = vmatprep.subr.bf16.mxu0 0
  %2395 = vmatpush1.bf16.msra.mxu0 0
  %2396 = vmatprep.mubr.bf16.mxu0 0
  %2397 = vmatmul.mubr.bf16.gmra.mrb[0].mxu0 %v2359
  %v2398 = vpop.f32.mrb[0].mxu0
  %v2399 = vadd.f32 0.0, %v2398
  %v2400 = vpop.f32.mrb[0].mxu0
  %v2401 = vpop.f32.mrb[0].mxu0
  %v2402 = vpop.f32.mrb[0].mxu0
  %2403 = vdwg.mxu0
  %v2404 = vadd.f32 %v2337, %v2399
  %v2405 = vld [vmem:[#allocation2] sm:$0x3]
  %v2406 = vld [vmem:[#allocation2 + $0x8] sm:$0x3]
  %v2407 = vld [vmem:[%s1] sm:$0x4]
  %v2409 = vshrl.u32 %v2407, 16
  %v2410 = vpack.i.b16 %v2409, %v2409
  %v2412 = vlaneseq
  %v2413 = vshrl.u32 %v2412, 7
  %v2414 = vsub.s32 2, %v2413
  %v2415 = vrot.slane %v2410, %v2414
  %2417 = vrot.lane.b32.xlu0 %v2415, 10
  %v2418 = vpop.permute.xlu0 %2417
  %v2420 = vmul.bf16 %v2405, %v2418
  %v2421 = vmul.bf16 %v2406, %v2418
  %v2422 = vld [vmem:[%s8] sm:$0x3]
  %v2425 = vunpack.c.l.s4 1983009808
  %v2426 = vunpack.c.0.s8 %v2425
  %v2427 = vlaneseq
  %v2428 = vshrl.u32 %v2427, 7
  %v2429 = vsub.s32 %v2426, %v2428
  %v2430 = vrot.slane %v2422, %v2429
  %2431 = vrot.lane.b32.xlu0 %v2430, 108
  %v2432 = vpop.permute.xlu0 %2431
  %2435 = vrot.lane.b32.xlu0 %v2420, 118
  %v2436 = vpop.permute.xlu0 %2435
  %2437 = vrot.lane.b32.xlu0 %v2421, 118
  %v2438 = vpop.permute.xlu0 %2437
  %v2439 = vsel %vm1112, %v2436, %v2438
  %v2441 = vsel %vm99, %v2432, 0
  %v2444 = vsel %vm103, %v2439, 0
  %2446 = vmatprep.subr.bf16.mxu0 0
  %2447 = vmatpush1.bf16.msra.mxu0 %v2444
  %2448 = vmatprep.subr.bf16.mxu0 0
  %2449 = vmatpush1.bf16.msra.mxu0 0
  %2450 = vmatprep.subr.bf16.mxu0 0
  %2451 = vmatpush1.bf16.msra.mxu0 0
  %2452 = vmatprep.subr.bf16.mxu0 0
  %2453 = vmatpush1.bf16.msra.mxu0 0
  %2454 = vmatprep.subr.bf16.mxu0 0
  %2455 = vmatpush1.bf16.msra.mxu0 0
  %2456 = vmatprep.subr.bf16.mxu0 0
  %2457 = vmatpush1.bf16.msra.mxu0 0
  %2458 = vmatprep.subr.bf16.mxu0 0
  %2459 = vmatpush1.bf16.msra.mxu0 0
  %2460 = vmatprep.subr.bf16.mxu0 0
  %2461 = vmatpush1.bf16.msra.mxu0 0
  %2462 = vmatprep.subr.bf16.mxu0 0
  %2463 = vmatpush1.bf16.msra.mxu0 0
  %2464 = vmatprep.subr.bf16.mxu0 0
  %2465 = vmatpush1.bf16.msra.mxu0 0
  %2466 = vmatprep.subr.bf16.mxu0 0
  %2467 = vmatpush1.bf16.msra.mxu0 0
  %2468 = vmatprep.subr.bf16.mxu0 0
  %2469 = vmatpush1.bf16.msra.mxu0 0
  %2470 = vmatprep.subr.bf16.mxu0 0
  %2471 = vmatpush1.bf16.msra.mxu0 0
  %2472 = vmatprep.subr.bf16.mxu0 0
  %2473 = vmatpush1.bf16.msra.mxu0 0
  %2474 = vmatprep.subr.bf16.mxu0 0
  %2475 = vmatpush1.bf16.msra.mxu0 0
  %2476 = vmatprep.subr.bf16.mxu0 0
  %2477 = vmatpush1.bf16.msra.mxu0 0
  %2478 = vmatprep.mubr.bf16.mxu0 0
  %2479 = vmatmul.mubr.bf16.gmra.mrb[0].mxu0 %v2441
  %v2480 = vpop.f32.mrb[0].mxu0
  %v2481 = vadd.f32 0.0, %v2480
  %v2482 = vpop.f32.mrb[0].mxu0
  %v2483 = vpop.f32.mrb[0].mxu0
  %v2484 = vpop.f32.mrb[0].mxu0
  %2485 = vdwg.mxu0
  %v2486 = vadd.f32 %v2404, %v2481
  %v2487 = vld [vmem:[#allocation2] sm:$0x3]
  %v2488 = vld [vmem:[#allocation2 + $0x8] sm:$0x3]
  %v2489 = vld [vmem:[%s1] sm:$0x8]
  %v2491 = vpack.i.b16 %v2489, %v2489
  %v2493 = vlaneseq
  %v2494 = vshrl.u32 %v2493, 7
  %v2495 = vsub.s32 3, %v2494
  %v2496 = vrot.slane %v2491, %v2495
  %2498 = vrot.lane.b32.xlu0 %v2496, 16
  %v2499 = vpop.permute.xlu0 %2498
  %v2501 = vmul.bf16 %v2487, %v2499
  %v2502 = vmul.bf16 %v2488, %v2499
  %v2503 = vld [vmem:[%s8] sm:$0x3]
  %v2506 = vunpack.c.l.s4 1983009808
  %v2507 = vunpack.c.0.s8 %v2506
  %v2508 = vlaneseq
  %v2509 = vshrl.u32 %v2508, 7
  %v2510 = vsub.s32 %v2507, %v2509
  %v2511 = vrot.slane %v2503, %v2510
  %2512 = vrot.lane.b32.xlu0 %v2511, 104
  %v2513 = vpop.permute.xlu0 %2512
  %2516 = vrot.lane.b32.xlu0 %v2501, 112
  %v2517 = vpop.permute.xlu0 %2516
  %2518 = vrot.lane.b32.xlu0 %v2502, 112
  %v2519 = vpop.permute.xlu0 %2518
  %v2520 = vsel %vm1194, %v2517, %v2519
  %v2522 = vsel %vm99, %v2513, 0
  %v2525 = vsel %vm103, %v2520, 0
  %2527 = vmatprep.subr.bf16.mxu0 0
  %2528 = vmatpush1.bf16.msra.mxu0 %v2525
  %2529 = vmatprep.subr.bf16.mxu0 0
  %2530 = vmatpush1.bf16.msra.mxu0 0
  %2531 = vmatprep.subr.bf16.mxu0 0
  %2532 = vmatpush1.bf16.msra.mxu0 0
  %2533 = vmatprep.subr.bf16.mxu0 0
  %2534 = vmatpush1.bf16.msra.mxu0 0
  %2535 = vmatprep.subr.bf16.mxu0 0
  %2536 = vmatpush1.bf16.msra.mxu0 0
  %2537 = vmatprep.subr.bf16.mxu0 0
  %2538 = vmatpush1.bf16.msra.mxu0 0
  %2539 = vmatprep.subr.bf16.mxu0 0
  %2540 = vmatpush1.bf16.msra.mxu0 0
  %2541 = vmatprep.subr.bf16.mxu0 0
  %2542 = vmatpush1.bf16.msra.mxu0 0
  %2543 = vmatprep.subr.bf16.mxu0 0
  %2544 = vmatpush1.bf16.msra.mxu0 0
  %2545 = vmatprep.subr.bf16.mxu0 0
  %2546 = vmatpush1.bf16.msra.mxu0 0
  %2547 = vmatprep.subr.bf16.mxu0 0
  %2548 = vmatpush1.bf16.msra.mxu0 0
  %2549 = vmatprep.subr.bf16.mxu0 0
  %2550 = vmatpush1.bf16.msra.mxu0 0
  %2551 = vmatprep.subr.bf16.mxu0 0
  %2552 = vmatpush1.bf16.msra.mxu0 0
  %2553 = vmatprep.subr.bf16.mxu0 0
  %2554 = vmatpush1.bf16.msra.mxu0 0
  %2555 = vmatprep.subr.bf16.mxu0 0
  %2556 = vmatpush1.bf16.msra.mxu0 0
  %2557 = vmatprep.subr.bf16.mxu0 0
  %2558 = vmatpush1.bf16.msra.mxu0 0
  %2559 = vmatprep.mubr.bf16.mxu0 0
  %2560 = vmatmul.mubr.bf16.gmra.mrb[0].mxu0 %v2522
  %v2561 = vpop.f32.mrb[0].mxu0
  %v2562 = vadd.f32 0.0, %v2561
  %v2563 = vpop.f32.mrb[0].mxu0
  %v2564 = vpop.f32.mrb[0].mxu0
  %v2565 = vpop.f32.mrb[0].mxu0
  %2566 = vdwg.mxu0
  %v2567 = vadd.f32 %v2486, %v2562
  %v2568 = vld [vmem:[#allocation2] sm:$0x3]
  %v2569 = vld [vmem:[#allocation2 + $0x8] sm:$0x3]
  %v2570 = vld [vmem:[%s1] sm:$0x8]
  %v2572 = vshrl.u32 %v2570, 16
  %v2573 = vpack.i.b16 %v2572, %v2572
  %v2575 = vlaneseq
  %v2576 = vshrl.u32 %v2575, 7
  %v2577 = vsub.s32 3, %v2576
  %v2578 = vrot.slane %v2573, %v2577
  %2580 = vrot.lane.b32.xlu0 %v2578, 17
  %v2581 = vpop.permute.xlu0 %2580
  %v2583 = vmul.bf16 %v2568, %v2581
  %v2584 = vmul.bf16 %v2569, %v2581
  %v2585 = vld [vmem:[%s8] sm:$0x3]
  %v2588 = vunpack.c.l.s4 1983009808
  %v2589 = vunpack.c.0.s8 %v2588
  %v2590 = vlaneseq
  %v2591 = vshrl.u32 %v2590, 7
  %v2592 = vsub.s32 %v2589, %v2591
  %v2593 = vrot.slane %v2585, %v2592
  %2594 = vrot.lane.b32.xlu0 %v2593, 100
  %v2595 = vpop.permute.xlu0 %2594
  %2598 = vrot.lane.b32.xlu0 %v2583, 111
  %v2599 = vpop.permute.xlu0 %2598
  %2600 = vrot.lane.b32.xlu0 %v2584, 111
  %v2601 = vpop.permute.xlu0 %2600
  %v2602 = vsel %vm1277, %v2599, %v2601
  %v2604 = vsel %vm99, %v2595, 0
  %v2607 = vsel %vm103, %v2602, 0
  %2609 = vmatprep.subr.bf16.mxu0 0
  %2610 = vmatpush1.bf16.msra.mxu0 %v2607
  %2611 = vmatprep.subr.bf16.mxu0 0
  %2612 = vmatpush1.bf16.msra.mxu0 0
  %2613 = vmatprep.subr.bf16.mxu0 0
  %2614 = vmatpush1.bf16.msra.mxu0 0
  %2615 = vmatprep.subr.bf16.mxu0 0
  %2616 = vmatpush1.bf16.msra.mxu0 0
  %2617 = vmatprep.subr.bf16.mxu0 0
  %2618 = vmatpush1.bf16.msra.mxu0 0
  %2619 = vmatprep.subr.bf16.mxu0 0
  %2620 = vmatpush1.bf16.msra.mxu0 0
  %2621 = vmatprep.subr.bf16.mxu0 0
  %2622 = vmatpush1.bf16.msra.mxu0 0
  %2623 = vmatprep.subr.bf16.mxu0 0
  %2624 = vmatpush1.bf16.msra.mxu0 0
  %2625 = vmatprep.subr.bf16.mxu0 0
  %2626 = vmatpush1.bf16.msra.mxu0 0
  %2627 = vmatprep.subr.bf16.mxu0 0
  %2628 = vmatpush1.bf16.msra.mxu0 0
  %2629 = vmatprep.subr.bf16.mxu0 0
  %2630 = vmatpush1.bf16.msra.mxu0 0
  %2631 = vmatprep.subr.bf16.mxu0 0
  %2632 = vmatpush1.bf16.msra.mxu0 0
  %2633 = vmatprep.subr.bf16.mxu0 0
  %2634 = vmatpush1.bf16.msra.mxu0 0
  %2635 = vmatprep.subr.bf16.mxu0 0
  %2636 = vmatpush1.bf16.msra.mxu0 0
  %2637 = vmatprep.subr.bf16.mxu0 0
  %2638 = vmatpush1.bf16.msra.mxu0 0
  %2639 = vmatprep.subr.bf16.mxu0 0
  %2640 = vmatpush1.bf16.msra.mxu0 0
  %2641 = vmatprep.mubr.bf16.mxu0 0
  %2642 = vmatmul.mubr.bf16.gmra.mrb[0].mxu0 %v2604
  %v2643 = vpop.f32.mrb[0].mxu0
  %v2644 = vadd.f32 0.0, %v2643
  %v2645 = vpop.f32.mrb[0].mxu0
  %v2646 = vpop.f32.mrb[0].mxu0
  %v2647 = vpop.f32.mrb[0].mxu0
  %2648 = vdwg.mxu0
  %v2649 = vadd.f32 %v2567, %v2644
  %v2650 = vld [vmem:[#allocation2] sm:$0x3]
  %v2651 = vld [vmem:[#allocation2 + $0x8] sm:$0x3]
  %v2652 = vld [vmem:[%s1 + $0x4] sm:$0x1]
  %v2654 = vpack.i.b16 %v2652, %v2652
  %v2656 = vlaneseq
  %v2657 = vshrl.u32 %v2656, 7
  %v2658 = vsub.s32 0, %v2657
  %v2659 = vrot.slane %v2654, %v2658
  %2661 = vrot.lane.b32.xlu0 %v2659, 18
  %v2662 = vpop.permute.xlu0 %2661
  %v2664 = vmul.bf16 %v2650, %v2662
  %v2665 = vmul.bf16 %v2651, %v2662
  %v2666 = vld [vmem:[%s8] sm:$0x3]
  %v2669 = vunpack.c.l.s4 1983009808
  %v2670 = vunpack.c.0.s8 %v2669
  %v2671 = vlaneseq
  %v2672 = vshrl.u32 %v2671, 7
  %v2673 = vsub.s32 %v2670, %v2672
  %v2674 = vrot.slane %v2666, %v2673
  %2675 = vrot.lane.b32.xlu0 %v2674, 96
  %v2676 = vpop.permute.xlu0 %2675
  %2679 = vrot.lane.b32.xlu0 %v2664, 110
  %v2680 = vpop.permute.xlu0 %2679
  %2681 = vrot.lane.b32.xlu0 %v2665, 110
  %v2682 = vpop.permute.xlu0 %2681
  %v2683 = vsel %vm1359, %v2680, %v2682
  %v2685 = vsel %vm99, %v2676, 0
  %v2688 = vsel %vm103, %v2683, 0
  %2690 = vmatprep.subr.bf16.mxu0 0
  %2691 = vmatpush1.bf16.msra.mxu0 %v2688
  %2692 = vmatprep.subr.bf16.mxu0 0
  %2693 = vmatpush1.bf16.msra.mxu0 0
  %2694 = vmatprep.subr.bf16.mxu0 0
  %2695 = vmatpush1.bf16.msra.mxu0 0
  %2696 = vmatprep.subr.bf16.mxu0 0
  %2697 = vmatpush1.bf16.msra.mxu0 0
  %2698 = vmatprep.subr.bf16.mxu0 0
  %2699 = vmatpush1.bf16.msra.mxu0 0
  %2700 = vmatprep.subr.bf16.mxu0 0
  %2701 = vmatpush1.bf16.msra.mxu0 0
  %2702 = vmatprep.subr.bf16.mxu0 0
  %2703 = vmatpush1.bf16.msra.mxu0 0
  %2704 = vmatprep.subr.bf16.mxu0 0
  %2705 = vmatpush1.bf16.msra.mxu0 0
  %2706 = vmatprep.subr.bf16.mxu0 0
  %2707 = vmatpush1.bf16.msra.mxu0 0
  %2708 = vmatprep.subr.bf16.mxu0 0
  %2709 = vmatpush1.bf16.msra.mxu0 0
  %2710 = vmatprep.subr.bf16.mxu0 0
  %2711 = vmatpush1.bf16.msra.mxu0 0
  %2712 = vmatprep.subr.bf16.mxu0 0
  %2713 = vmatpush1.bf16.msra.mxu0 0
  %2714 = vmatprep.subr.bf16.mxu0 0
  %2715 = vmatpush1.bf16.msra.mxu0 0
  %2716 = vmatprep.subr.bf16.mxu0 0
  %2717 = vmatpush1.bf16.msra.mxu0 0
  %2718 = vmatprep.subr.bf16.mxu0 0
  %2719 = vmatpush1.bf16.msra.mxu0 0
  %2720 = vmatprep.subr.bf16.mxu0 0
  %2721 = vmatpush1.bf16.msra.mxu0 0
  %2722 = vmatprep.mubr.bf16.mxu0 0
  %2723 = vmatmul.mubr.bf16.gmra.mrb[0].mxu0 %v2685
  %v2724 = vpop.f32.mrb[0].mxu0
  %v2725 = vadd.f32 0.0, %v2724
  %v2726 = vpop.f32.mrb[0].mxu0
  %v2727 = vpop.f32.mrb[0].mxu0
  %v2728 = vpop.f32.mrb[0].mxu0
  %2729 = vdwg.mxu0
  %v2730 = vadd.f32 %v2649, %v2725
  %v2731 = vld [vmem:[%s9] sm:$0xf]
  %2733 = vset.pattern.permute.xlu0 0
  %2734 = vperm.xlu0 %2733, %v2731
  %v2735 = vpop.permute.xlu0 %2734
  %v2737 = vadd.f32 %v2730, %v2735
  %v2739 = vrot.slane %v2032, 4
  %v2741 = vadd.f32 %v2737, %v2739
  %2742 = vst [vmem:[%s10] sm:$0xf] %v2741
  // Predicated region
  $region42: #{resnet_block_forward.1} parent=0 // pred_check
    _
  $region43: #{resnet_block_forward.1} parent=0 // pred_check_branch
    %2744 = sbr.rel (0) target = $region45
  $region44: #{resnet_block_forward.1} parent=0 // pred_region
    _
  $region45: #{resnet_block_forward.1} parent=0 // pred_fallthru
    _
  // Predicated region
  $region46: #{resnet_block_forward.1} parent=0 // pred_check
    _
  $region47: #{resnet_block_forward.1} parent=0 // pred_check_branch
    %2746 = sbr.rel (0) target = $region49
  $region48: #{resnet_block_forward.1} parent=0 // pred_region
    _
  $region49: #{resnet_block_forward.1} parent=0 // pred_fallthru
    _

</llo_original>
